<compile_context>
chip_gen: v6e
topology: v6e:2x2x1
jax: 0.10.0
libtpu: 0.0.40
codegen_flags: <defaults>
</compile_context>

<pallas_src>
import jax
import jax.numpy as jnp
from jax import lax
from jax.experimental import pallas as pl
from jax.experimental.pallas import tpu as pltpu

BN_EPS = 1e-5
NPAD = 128                       # FC output padded to a full lane group
MATMUL_DTYPE = jnp.bfloat16      # MXU operand dtype (f32 accumulation)


def _compiler_params():
    return pltpu.CompilerParams(
        dimension_semantics=("arbitrary",),
        vmem_limit_bytes=32 * 1024 * 1024,
    )


# --------------------------------------------------------------------------
# Kernels
# --------------------------------------------------------------------------
def conv_bn_relu_pool_kernel(pt_ref, wt_ref, gamma_ref, beta_ref, out_ref):
    # pt_ref:    (K, N) bf16 patches (transposed / lane-dense),
    #            N = 4 * B * (H/2) * (W/2), columns ordered (q, b, ph, pw),
    #            K ordered (kh, kw, c_in)
    # wt_ref:    (C_out, K) bf16 conv weight
    # gamma/beta:(C_out, 1) f32 BN affine params
    # out_ref:   (C_out, N // 4) f32 pooled output, columns ordered (b, ph, pw)
    n_cols = pt_ref.shape[1]
    r = jnp.dot(wt_ref[...], pt_ref[...],
                preferred_element_type=jnp.float32)          # (C_out, N)

    # Train-mode BN stats over every conv position (N == B*H*W exactly).
    # One-pass E[x^2]-E[x]^2; fine at this tolerance (activations ~zero-mean).
    inv_n = 1.0 / float(n_cols)
    mean = jnp.sum(r, axis=1, keepdims=True) * inv_n          # (C_out, 1)
    var = jnp.sum(r * r, axis=1, keepdims=True) * inv_n - mean * mean
    inv = lax.rsqrt(var + BN_EPS)
    scale = gamma_ref[...] * inv                              # hoisted once
    shift = beta_ref[...] - mean * scale

    y = jnp.maximum(r * scale + shift, 0.0)                   # BN + ReLU (lane-dense)

    # 2x2 max-pool == elementwise max over the 4 sub-grid chunks (aligned slices).
    nq = n_cols // 4
    out_ref[...] = jnp.maximum(
        jnp.maximum(y[:, 0:nq], y[:, nq:2 * nq]),
        jnp.maximum(y[:, 2 * nq:3 * nq], y[:, 3 * nq:4 * nq]),
    )


def conv_bn_relu_pool_fc_kernel(p_ref, w_ref, gamma_ref, beta_ref,
                                wfc_ref, bfc_ref, out_ref):
    # p_ref:   (N, K) bf16 patches, rows ordered (q, ph, pw, b), K = (kh, kw, c_in)
    # w_ref:   (K, C_out) bf16
    # gamma/beta: (1, C_out) f32
    # wfc_ref: (S, C_out, NPAD) f32 fc weight regrouped per pooled position s=(ph,pw)
    # bfc_ref: (1, NPAD) f32
    # out_ref: (B, NPAD) f32 logits (class axis lane-padded)
    n_rows = p_ref.shape[0]
    r = jnp.dot(p_ref[...], w_ref[...],
                preferred_element_type=jnp.float32)           # (N, C_out)

    inv_n = 1.0 / float(n_rows)
    mean = jnp.sum(r, axis=0, keepdims=True) * inv_n          # (1, C_out)
    var = jnp.sum(r * r, axis=0, keepdims=True) * inv_n - mean * mean
    inv = lax.rsqrt(var + BN_EPS)
    scale = gamma_ref[...] * inv
    shift = beta_ref[...] - mean * scale

    y = jnp.maximum(r * scale + shift, 0.0)                   # (N, C_out)

    nq = n_rows // 4
    pooled = jnp.maximum(
        jnp.maximum(y[0:nq], y[nq:2 * nq]),
        jnp.maximum(y[2 * nq:3 * nq], y[3 * nq:4 * nq]),
    )                                                         # (S*B, C_out), rows (ph, pw, b)

    n_pos = wfc_ref.shape[0]
    b_sz = out_ref.shape[0]
    logits = jnp.broadcast_to(bfc_ref[...], (b_sz, out_ref.shape[1]))
    for sp in range(n_pos):                                   # fused FC: sum of per-position matmuls
        chunk = pooled[sp * b_sz:(sp + 1) * b_sz, :]          # (B, C_out)
        logits = logits + jnp.dot(chunk, wfc_ref[sp],
                                  preferred_element_type=jnp.float32)
    out_ref[...] = logits


# --------------------------------------------------------------------------
# Plain-JAX glue: patch (im2col) construction, grouped by pooling sub-grid
# --------------------------------------------------------------------------
def _subgrid_patches(a_nhwc):
    # a_nhwc: (B, H, W, C) -> (4, B, H/2, W/2, 9, C); patch index k = kh*3 + kw
    b, h, w, c = a_nhwc.shape
    ap = jnp.pad(a_nhwc, ((0, 0), (1, 1), (1, 1), (0, 0)))
    pa = jnp.stack(
        [ap[:, kh:kh + h, kw:kw + w, :] for kh in range(3) for kw in range(3)],
        axis=3,
    )                                                         # (B, H, W, 9, C)
    subs = jnp.stack(
        [pa[:, p::2, r::2] for p in range(2) for r in range(2)], axis=0
    )                                                         # (4, B, H/2, W/2, 9, C)
    return subs


def _patches_t(a_nhwc):
    # -> (9*C, 4*B*(H/2)*(W/2)); rows (kh, kw, c), cols (q, b, ph, pw)
    subs = _subgrid_patches(a_nhwc)
    _, b, hh, wh, k9, c = subs.shape
    return subs.transpose(4, 5, 0, 1, 2, 3).reshape(k9 * c, 4 * b * hh * wh)


def _patches_n(a_nhwc):
    # -> (4*(H/2)*(W/2)*B, 9*C); rows (q, ph, pw, b), cols (kh, kw, c)
    subs = _subgrid_patches(a_nhwc)
    _, b, hh, wh, k9, c = subs.shape
    return subs.transpose(0, 2, 3, 1, 4, 5).reshape(4 * hh * wh * b, k9 * c)


def _conv_block_t(pt, wt, gamma, beta):
    k, n = pt.shape
    c_out = wt.shape[0]
    return pl.pallas_call(
        conv_bn_relu_pool_kernel,
        out_shape=jax.ShapeDtypeStruct((c_out, n // 4), jnp.float32),
        grid=(1,),
        in_specs=[
            pl.BlockSpec((k, n), lambda i: (0, 0)),
            pl.BlockSpec((c_out, k), lambda i: (0, 0)),
            pl.BlockSpec((c_out, 1), lambda i: (0, 0)),
            pl.BlockSpec((c_out, 1), lambda i: (0, 0)),
        ],
        out_specs=pl.BlockSpec((c_out, n // 4), lambda i: (0, 0)),
        compiler_params=_compiler_params(),
    )(pt, wt, gamma, beta)


# --------------------------------------------------------------------------
# Forward pass
# --------------------------------------------------------------------------
def probenet_s(x, params):
    # x: (B, 3, 32, 32) NCHW (PyTorch layout)
    b = x.shape[0]
    num_c = params["fc_w"].shape[0]
    assert num_c <= NPAD
    x_nhwc = jnp.transpose(x.astype(jnp.float32), (0, 2, 3, 1))       # (B,32,32,3)

    # ---- layer 0: conv(3->8) + BN + ReLU + pool ----
    pt0 = _patches_t(x_nhwc).astype(MATMUL_DTYPE)                     # (27, 4*B*256)
    w0t = params["conv0_w"].transpose(0, 2, 3, 1).reshape(8, 27).astype(MATMUL_DTYPE)
    pooled0 = _conv_block_t(pt0, w0t,
                            params["bn0_gamma"].reshape(8, 1),
                            params["bn0_beta"].reshape(8, 1))         # (8, B*256)
    a1 = pooled0.reshape(8, b, 16, 16).transpose(1, 2, 3, 0)          # (B,16,16,8)

    # ---- layer 1: conv(8->16) + BN + ReLU + pool ----
    pt1 = _patches_t(a1).astype(MATMUL_DTYPE)                         # (72, 4*B*64)
    w1t = params["conv1_w"].transpose(0, 2, 3, 1).reshape(16, 72).astype(MATMUL_DTYPE)
    pooled1 = _conv_block_t(pt1, w1t,
                            params["bn1_gamma"].reshape(16, 1),
                            params["bn1_beta"].reshape(16, 1))        # (16, B*64)
    a2 = pooled1.reshape(16, b, 8, 8).transpose(1, 2, 3, 0)           # (B,8,8,16)

    # ---- layer 2: conv(16->32) + BN + ReLU + pool, with FC fused ----
    p2 = _patches_n(a2).astype(MATMUL_DTYPE)                          # (4*16*B, 144)
    w2 = params["conv2_w"].transpose(2, 3, 1, 0).reshape(144, 32).astype(MATMUL_DTYPE)
    # fc weight regrouped per pooled position s=(ph,pw): wfc[s, c, n] = fc_w[n, c*16 + s]
    wfc = (params["fc_w"].reshape(num_c, 32, 4, 4)
           .transpose(2, 3, 1, 0).reshape(16, 32, num_c))
    wfc = jnp.pad(wfc, ((0, 0), (0, 0), (0, NPAD - num_c)))
    bfc = jnp.pad(params["fc_b"], (0, NPAD - num_c)).reshape(1, NPAD)

    n3, k3 = p2.shape
    logits_pad = pl.pallas_call(
        conv_bn_relu_pool_fc_kernel,
        out_shape=jax.ShapeDtypeStruct((b, NPAD), jnp.float32),
        grid=(1,),
        in_specs=[
            pl.BlockSpec((n3, k3), lambda i: (0, 0)),
            pl.BlockSpec((k3, 32), lambda i: (0, 0)),
            pl.BlockSpec((1, 32), lambda i: (0, 0)),
            pl.BlockSpec((1, 32), lambda i: (0, 0)),
            pl.BlockSpec((16, 32, NPAD), lambda i: (0, 0, 0)),
            pl.BlockSpec((1, NPAD), lambda i: (0, 0)),
        ],
        out_specs=pl.BlockSpec((b, NPAD), lambda i: (0, 0)),
        compiler_params=_compiler_params(),
    )(p2, w2,
      params["bn2_gamma"].reshape(1, 32),
      params["bn2_beta"].reshape(1, 32),
      wfc, bfc)
    return logits_pad[:, :num_c]


# --------------------------------------------------------------------------
# Pure-JAX reference mirroring the PyTorch forward (train-mode BN)
# --------------------------------------------------------------------------
def reference(x, params):
    def block(a, w, g, bta):
        c = lax.conv_general_dilated(
            a, w, (1, 1), ((1, 1), (1, 1)),
            dimension_numbers=("NCHW", "OIHW", "NCHW"))
        mean = c.mean(axis=(0, 2, 3), keepdims=True)
        var = c.var(axis=(0, 2, 3), keepdims=True)            # biased (train BN)
        y = (c - mean) * lax.rsqrt(var + BN_EPS)
        y = y * g.reshape(1, -1, 1, 1) + bta.reshape(1, -1, 1, 1)
        y = jnp.maximum(y, 0.0)
        bb, ch, h, w_ = y.shape
        return y.reshape(bb, ch, h // 2, 2, w_ // 2, 2).max(axis=(3, 5))

    y = block(x, params["conv0_w"], params["bn0_gamma"], params["bn0_beta"])
    y = block(y, params["conv1_w"], params["bn1_gamma"], params["bn1_beta"])
    y = block(y, params["conv2_w"], params["bn2_gamma"], params["bn2_beta"])
    feat = y.reshape(x.shape[0], 32 * 4 * 4)
    return feat @ params["fc_w"].T + params["fc_b"]


def init_params(key, num_c):
    ks = jax.random.split(key, 10)

    def rnd(k, shape, s):
        return s * jax.random.normal(k, shape, jnp.float32)

    return {
        "conv0_w": rnd(ks[0], (8, 3, 3, 3), 0.15),
        "bn0_gamma": 1.0 + 0.1 * jax.random.normal(ks[1], (8,), jnp.float32),
        "bn0_beta": rnd(ks[2], (8,), 0.1),
        "conv1_w": rnd(ks[3], (16, 8, 3, 3), 0.1),
        "bn1_gamma": 1.0 + 0.1 * jax.random.normal(ks[4], (16,), jnp.float32),
        "bn1_beta": rnd(ks[5], (16,), 0.1),
        "conv2_w": rnd(ks[6], (32, 16, 3, 3), 0.08),
        "bn2_gamma": 1.0 + 0.1 * jax.random.normal(ks[7], (32,), jnp.float32),
        "bn2_beta": rnd(ks[8], (32,), 0.1),
        "fc_w": 0.03 * jax.random.normal(ks[9], (num_c, 512), jnp.float32),
        "fc_b": jnp.linspace(-0.1, 0.1, num_c).astype(jnp.float32),
    }


if __name__ == "__main__":
    num_c = 10
    batch = 2
    key = jax.random.PRNGKey(0)
    kx, kp = jax.random.split(key)
    x = jax.random.normal(kx, (batch, 3, 32, 32), jnp.float32)   # NCHW like PyTorch
    params = init_params(kp, num_c)

    fwd = jax.jit(probenet_s)
    out = jax.block_until_ready(fwd(x, params))
    ref = jax.block_until_ready(reference(x, params))

    assert out.shape == (batch, num_c), out.shape
    # bf16 MXU operands (per the perf review) -> compare at bf16-level tolerance.
    assert jnp.allclose(out, ref, atol=2e-2, rtol=2e-2), (out, ref)
    print("KERNEL_OK")
</pallas_src>

<mosaic_0001>
module attributes {stable_mosaic.version = 11 : i64} {
  func.func @conv_bn_relu_pool_kernel(%arg0: i32, %arg1: memref<27x2048xbf16, #tpu.memory_space<vmem>>, %arg2: memref<8x27xbf16, #tpu.memory_space<vmem>>, %arg3: memref<8x1xf32, #tpu.memory_space<vmem>>, %arg4: memref<8x1xf32, #tpu.memory_space<vmem>>, %arg5: memref<8x512xf32, #tpu.memory_space<vmem>>) attributes {dimension_semantics = [#tpu.dimension_semantics<arbitrary>], iteration_bounds = array<i64: 1>, scalar_prefetch = 0 : i64, scratch_operands = 0 : i64, tpu.core_type = #tpu.core_type<tc>, window_params = [{pipeline_mode = #tpu.pipeline_mode<synchronous>, transform_indices = @transform_0, window_bounds = array<i64: 27, 2048>}, {pipeline_mode = #tpu.pipeline_mode<synchronous>, transform_indices = @transform_1, window_bounds = array<i64: 8, 27>}, {pipeline_mode = #tpu.pipeline_mode<synchronous>, transform_indices = @transform_2, window_bounds = array<i64: 8, 1>}, {pipeline_mode = #tpu.pipeline_mode<synchronous>, transform_indices = @transform_3, window_bounds = array<i64: 8, 1>}, {pipeline_mode = #tpu.pipeline_mode<synchronous>, transform_indices = @transform_4, window_bounds = array<i64: 8, 512>}]} {
    %c0 = arith.constant 0 : index
    %c0_0 = arith.constant 0 : index
    %0 = vector.load %arg2[%c0, %c0_0] : memref<8x27xbf16, #tpu.memory_space<vmem>>, vector<8x27xbf16>
    %c0_1 = arith.constant 0 : index
    %c0_2 = arith.constant 0 : index
    %1 = vector.load %arg1[%c0_1, %c0_2] : memref<27x2048xbf16, #tpu.memory_space<vmem>>, vector<27x2048xbf16>
    %cst = arith.constant dense<0.000000e+00> : vector<8x2048xf32>
    %2 = tpu.matmul %0, %1, %cst {dimension_numbers = #tpu.dot_dimension_numbers<[1], [0], [0], [1], [0, 0, 1, 1], [], []>} : vector<8x27xbf16>, vector<27x2048xbf16>, vector<8x2048xf32> -> vector<8x2048xf32>
    %cst_3 = arith.constant dense<0.000000e+00> : vector<8xf32>
    %3 = vector.multi_reduction <add>, %2, %cst_3 [1] : vector<8x2048xf32> to vector<8xf32>
    %4 = vector.shape_cast %3 : vector<8xf32> to vector<8x1xf32>
    %cst_4 = arith.constant 4.8828125E-4 : f32
    %5 = vector.broadcast %cst_4 : f32 to vector<8x1xf32>
    %6 = arith.mulf %4, %5 : vector<8x1xf32>
    %7 = arith.mulf %2, %2 : vector<8x2048xf32>
    %cst_5 = arith.constant dense<0.000000e+00> : vector<8xf32>
    %8 = vector.multi_reduction <add>, %7, %cst_5 [1] : vector<8x2048xf32> to vector<8xf32>
    %9 = vector.shape_cast %8 : vector<8xf32> to vector<8x1xf32>
    %cst_6 = arith.constant 4.8828125E-4 : f32
    %10 = vector.broadcast %cst_6 : f32 to vector<8x1xf32>
    %11 = arith.mulf %9, %10 : vector<8x1xf32>
    %12 = arith.mulf %6, %6 : vector<8x1xf32>
    %13 = arith.subf %11, %12 : vector<8x1xf32>
    %cst_7 = arith.constant 9.99999974E-6 : f32
    %14 = vector.broadcast %cst_7 : f32 to vector<8x1xf32>
    %15 = arith.addf %13, %14 : vector<8x1xf32>
    %16 = math.rsqrt %15 : vector<8x1xf32>
    %c0_8 = arith.constant 0 : index
    %c0_9 = arith.constant 0 : index
    %17 = vector.load %arg3[%c0_8, %c0_9] : memref<8x1xf32, #tpu.memory_space<vmem>>, vector<8x1xf32>
    %18 = arith.mulf %17, %16 : vector<8x1xf32>
    %c0_10 = arith.constant 0 : index
    %c0_11 = arith.constant 0 : index
    %19 = vector.load %arg4[%c0_10, %c0_11] : memref<8x1xf32, #tpu.memory_space<vmem>>, vector<8x1xf32>
    %20 = arith.mulf %6, %18 : vector<8x1xf32>
    %21 = arith.subf %19, %20 : vector<8x1xf32>
    %22 = vector.broadcast %18 : vector<8x1xf32> to vector<8x2048xf32>
    %23 = arith.mulf %2, %22 : vector<8x2048xf32>
    %24 = vector.broadcast %21 : vector<8x1xf32> to vector<8x2048xf32>
    %25 = arith.addf %23, %24 : vector<8x2048xf32>
    %cst_12 = arith.constant 0.000000e+00 : f32
    %26 = vector.broadcast %cst_12 : f32 to vector<8x2048xf32>
    %27 = arith.maximumf %25, %26 : vector<8x2048xf32>
    %28 = vector.extract_strided_slice %27 {offsets = [0, 0], sizes = [8, 512], strides = [1, 1]} : vector<8x2048xf32> to vector<8x512xf32>
    %29 = vector.extract_strided_slice %27 {offsets = [0, 512], sizes = [8, 512], strides = [1, 1]} : vector<8x2048xf32> to vector<8x512xf32>
    %30 = arith.maximumf %28, %29 : vector<8x512xf32>
    %31 = vector.extract_strided_slice %27 {offsets = [0, 1024], sizes = [8, 512], strides = [1, 1]} : vector<8x2048xf32> to vector<8x512xf32>
    %32 = vector.extract_strided_slice %27 {offsets = [0, 1536], sizes = [8, 512], strides = [1, 1]} : vector<8x2048xf32> to vector<8x512xf32>
    %33 = arith.maximumf %31, %32 : vector<8x512xf32>
    %34 = arith.maximumf %30, %33 : vector<8x512xf32>
    %c0_13 = arith.constant 0 : index
    %c0_14 = arith.constant 0 : index
    %35 = vector.load %arg5[%c0_13, %c0_14] : memref<8x512xf32, #tpu.memory_space<vmem>>, vector<8x512xf32>
    tpu.vector_store %arg5[%c0_13, %c0_14], %34 {strides = array<i32>} : memref<8x512xf32, #tpu.memory_space<vmem>>, vector<8x512xf32>,
    return
  }
  func.func @transform_0(%arg0: i32) -> (i32, i32) {
    %c0_i32 = arith.constant 0 : i32
    %c0_i32_0 = arith.constant 0 : i32
    %c0_i32_1 = arith.constant 0 : i32
    return %c0_i32, %c0_i32_0 : i32, i32
  }
  func.func @transform_1(%arg0: i32) -> (i32, i32) {
    %c0_i32 = arith.constant 0 : i32
    %c0_i32_0 = arith.constant 0 : i32
    %c0_i32_1 = arith.constant 0 : i32
    return %c0_i32, %c0_i32_0 : i32, i32
  }
  func.func @transform_2(%arg0: i32) -> (i32, i32) {
    %c0_i32 = arith.constant 0 : i32
    %c0_i32_0 = arith.constant 0 : i32
    %c0_i32_1 = arith.constant 0 : i32
    return %c0_i32, %c0_i32_0 : i32, i32
  }
  func.func @transform_3(%arg0: i32) -> (i32, i32) {
    %c0_i32 = arith.constant 0 : i32
    %c0_i32_0 = arith.constant 0 : i32
    %c0_i32_1 = arith.constant 0 : i32
    return %c0_i32, %c0_i32_0 : i32, i32
  }
  func.func @transform_4(%arg0: i32) -> (i32, i32) {
    %c0_i32 = arith.constant 0 : i32
    %c0_i32_0 = arith.constant 0 : i32
    %c0_i32_1 = arith.constant 0 : i32
    return %c0_i32, %c0_i32_0 : i32, i32
  }
}

module attributes {stable_mosaic.version = 11 : i64} {
  func.func @conv_bn_relu_pool_kernel(%arg0: i32, %arg1: memref<72x512xbf16, #tpu.memory_space<vmem>>, %arg2: memref<16x72xbf16, #tpu.memory_space<vmem>>, %arg3: memref<16x1xf32, #tpu.memory_space<vmem>>, %arg4: memref<16x1xf32, #tpu.memory_space<vmem>>, %arg5: memref<16x128xf32, #tpu.memory_space<vmem>>) attributes {dimension_semantics = [#tpu.dimension_semantics<arbitrary>], iteration_bounds = array<i64: 1>, scalar_prefetch = 0 : i64, scratch_operands = 0 : i64, tpu.core_type = #tpu.core_type<tc>, window_params = [{pipeline_mode = #tpu.pipeline_mode<synchronous>, transform_indices = @transform_0, window_bounds = array<i64: 72, 512>}, {pipeline_mode = #tpu.pipeline_mode<synchronous>, transform_indices = @transform_1, window_bounds = array<i64: 16, 72>}, {pipeline_mode = #tpu.pipeline_mode<synchronous>, transform_indices = @transform_2, window_bounds = array<i64: 16, 1>}, {pipeline_mode = #tpu.pipeline_mode<synchronous>, transform_indices = @transform_3, window_bounds = array<i64: 16, 1>}, {pipeline_mode = #tpu.pipeline_mode<synchronous>, transform_indices = @transform_4, window_bounds = array<i64: 16, 128>}]} {
    %c0 = arith.constant 0 : index
    %c0_0 = arith.constant 0 : index
    %0 = vector.load %arg2[%c0, %c0_0] : memref<16x72xbf16, #tpu.memory_space<vmem>>, vector<16x72xbf16>
    %c0_1 = arith.constant 0 : index
    %c0_2 = arith.constant 0 : index
    %1 = vector.load %arg1[%c0_1, %c0_2] : memref<72x512xbf16, #tpu.memory_space<vmem>>, vector<72x512xbf16>
    %cst = arith.constant dense<0.000000e+00> : vector<16x512xf32>
    %2 = tpu.matmul %0, %1, %cst {dimension_numbers = #tpu.dot_dimension_numbers<[1], [0], [0], [1], [0, 0, 1, 1], [], []>} : vector<16x72xbf16>, vector<72x512xbf16>, vector<16x512xf32> -> vector<16x512xf32>
    %cst_3 = arith.constant dense<0.000000e+00> : vector<16xf32>
    %3 = vector.multi_reduction <add>, %2, %cst_3 [1] : vector<16x512xf32> to vector<16xf32>
    %4 = vector.shape_cast %3 : vector<16xf32> to vector<16x1xf32>
    %cst_4 = arith.constant 0.001953125 : f32
    %5 = vector.broadcast %cst_4 : f32 to vector<16x1xf32>
    %6 = arith.mulf %4, %5 : vector<16x1xf32>
    %7 = arith.mulf %2, %2 : vector<16x512xf32>
    %cst_5 = arith.constant dense<0.000000e+00> : vector<16xf32>
    %8 = vector.multi_reduction <add>, %7, %cst_5 [1] : vector<16x512xf32> to vector<16xf32>
    %9 = vector.shape_cast %8 : vector<16xf32> to vector<16x1xf32>
    %cst_6 = arith.constant 0.001953125 : f32
    %10 = vector.broadcast %cst_6 : f32 to vector<16x1xf32>
    %11 = arith.mulf %9, %10 : vector<16x1xf32>
    %12 = arith.mulf %6, %6 : vector<16x1xf32>
    %13 = arith.subf %11, %12 : vector<16x1xf32>
    %cst_7 = arith.constant 9.99999974E-6 : f32
    %14 = vector.broadcast %cst_7 : f32 to vector<16x1xf32>
    %15 = arith.addf %13, %14 : vector<16x1xf32>
    %16 = math.rsqrt %15 : vector<16x1xf32>
    %c0_8 = arith.constant 0 : index
    %c0_9 = arith.constant 0 : index
    %17 = vector.load %arg3[%c0_8, %c0_9] : memref<16x1xf32, #tpu.memory_space<vmem>>, vector<16x1xf32>
    %18 = arith.mulf %17, %16 : vector<16x1xf32>
    %c0_10 = arith.constant 0 : index
    %c0_11 = arith.constant 0 : index
    %19 = vector.load %arg4[%c0_10, %c0_11] : memref<16x1xf32, #tpu.memory_space<vmem>>, vector<16x1xf32>
    %20 = arith.mulf %6, %18 : vector<16x1xf32>
    %21 = arith.subf %19, %20 : vector<16x1xf32>
    %22 = vector.broadcast %18 : vector<16x1xf32> to vector<16x512xf32>
    %23 = arith.mulf %2, %22 : vector<16x512xf32>
    %24 = vector.broadcast %21 : vector<16x1xf32> to vector<16x512xf32>
    %25 = arith.addf %23, %24 : vector<16x512xf32>
    %cst_12 = arith.constant 0.000000e+00 : f32
    %26 = vector.broadcast %cst_12 : f32 to vector<16x512xf32>
    %27 = arith.maximumf %25, %26 : vector<16x512xf32>
    %28 = vector.extract_strided_slice %27 {offsets = [0, 0], sizes = [16, 128], strides = [1, 1]} : vector<16x512xf32> to vector<16x128xf32>
    %29 = vector.extract_strided_slice %27 {offsets = [0, 128], sizes = [16, 128], strides = [1, 1]} : vector<16x512xf32> to vector<16x128xf32>
    %30 = arith.maximumf %28, %29 : vector<16x128xf32>
    %31 = vector.extract_strided_slice %27 {offsets = [0, 256], sizes = [16, 128], strides = [1, 1]} : vector<16x512xf32> to vector<16x128xf32>
    %32 = vector.extract_strided_slice %27 {offsets = [0, 384], sizes = [16, 128], strides = [1, 1]} : vector<16x512xf32> to vector<16x128xf32>
    %33 = arith.maximumf %31, %32 : vector<16x128xf32>
    %34 = arith.maximumf %30, %33 : vector<16x128xf32>
    %c0_13 = arith.constant 0 : index
    %c0_14 = arith.constant 0 : index
    %35 = vector.load %arg5[%c0_13, %c0_14] : memref<16x128xf32, #tpu.memory_space<vmem>>, vector<16x128xf32>
    tpu.vector_store %arg5[%c0_13, %c0_14], %34 {strides = array<i32>} : memref<16x128xf32, #tpu.memory_space<vmem>>, vector<16x128xf32>,
    return
  }
  func.func @transform_0(%arg0: i32) -> (i32, i32) {
    %c0_i32 = arith.constant 0 : i32
    %c0_i32_0 = arith.constant 0 : i32
    %c0_i32_1 = arith.constant 0 : i32
    return %c0_i32, %c0_i32_0 : i32, i32
  }
  func.func @transform_1(%arg0: i32) -> (i32, i32) {
    %c0_i32 = arith.constant 0 : i32
    %c0_i32_0 = arith.constant 0 : i32
    %c0_i32_1 = arith.constant 0 : i32
    return %c0_i32, %c0_i32_0 : i32, i32
  }
  func.func @transform_2(%arg0: i32) -> (i32, i32) {
    %c0_i32 = arith.constant 0 : i32
    %c0_i32_0 = arith.constant 0 : i32
    %c0_i32_1 = arith.constant 0 : i32
    return %c0_i32, %c0_i32_0 : i32, i32
  }
  func.func @transform_3(%arg0: i32) -> (i32, i32) {
    %c0_i32 = arith.constant 0 : i32
    %c0_i32_0 = arith.constant 0 : i32
    %c0_i32_1 = arith.constant 0 : i32
    return %c0_i32, %c0_i32_0 : i32, i32
  }
  func.func @transform_4(%arg0: i32) -> (i32, i32) {
    %c0_i32 = arith.constant 0 : i32
    %c0_i32_0 = arith.constant 0 : i32
    %c0_i32_1 = arith.constant 0 : i32
    return %c0_i32, %c0_i32_0 : i32, i32
  }
}

module attributes {stable_mosaic.version = 11 : i64} {
  func.func @conv_bn_relu_pool_fc_kernel(%arg0: i32, %arg1: memref<128x144xbf16, #tpu.memory_space<vmem>>, %arg2: memref<144x32xbf16, #tpu.memory_space<vmem>>, %arg3: memref<1x32xf32, #tpu.memory_space<vmem>>, %arg4: memref<1x32xf32, #tpu.memory_space<vmem>>, %arg5: memref<16x32x128xf32, #tpu.memory_space<vmem>>, %arg6: memref<1x128xf32, #tpu.memory_space<vmem>>, %arg7: memref<2x128xf32, #tpu.memory_space<vmem>>) attributes {dimension_semantics = [#tpu.dimension_semantics<arbitrary>], iteration_bounds = array<i64: 1>, scalar_prefetch = 0 : i64, scratch_operands = 0 : i64, tpu.core_type = #tpu.core_type<tc>, window_params = [{pipeline_mode = #tpu.pipeline_mode<synchronous>, transform_indices = @transform_0, window_bounds = array<i64: 128, 144>}, {pipeline_mode = #tpu.pipeline_mode<synchronous>, transform_indices = @transform_1, window_bounds = array<i64: 144, 32>}, {pipeline_mode = #tpu.pipeline_mode<synchronous>, transform_indices = @transform_2, window_bounds = array<i64: 1, 32>}, {pipeline_mode = #tpu.pipeline_mode<synchronous>, transform_indices = @transform_3, window_bounds = array<i64: 1, 32>}, {pipeline_mode = #tpu.pipeline_mode<synchronous>, transform_indices = @transform_4, window_bounds = array<i64: 16, 32, 128>}, {pipeline_mode = #tpu.pipeline_mode<synchronous>, transform_indices = @transform_5, window_bounds = array<i64: 1, 128>}, {pipeline_mode = #tpu.pipeline_mode<synchronous>, transform_indices = @transform_6, window_bounds = array<i64: 2, 128>}]} {
    %c0 = arith.constant 0 : index
    %c0_0 = arith.constant 0 : index
    %0 = vector.load %arg1[%c0, %c0_0] : memref<128x144xbf16, #tpu.memory_space<vmem>>, vector<128x144xbf16>
    %c0_1 = arith.constant 0 : index
    %c0_2 = arith.constant 0 : index
    %1 = vector.load %arg2[%c0_1, %c0_2] : memref<144x32xbf16, #tpu.memory_space<vmem>>, vector<144x32xbf16>
    %cst = arith.constant dense<0.000000e+00> : vector<128x32xf32>
    %2 = tpu.matmul %0, %1, %cst {dimension_numbers = #tpu.dot_dimension_numbers<[1], [0], [0], [1], [0, 0, 1, 1], [], []>} : vector<128x144xbf16>, vector<144x32xbf16>, vector<128x32xf32> -> vector<128x32xf32>
    %cst_3 = arith.constant dense<0.000000e+00> : vector<32xf32>
    %3 = vector.multi_reduction <add>, %2, %cst_3 [0] : vector<128x32xf32> to vector<32xf32>
    %4 = vector.shape_cast %3 : vector<32xf32> to vector<1x32xf32>
    %cst_4 = arith.constant 7.812500e-03 : f32
    %5 = vector.broadcast %cst_4 : f32 to vector<1x32xf32>
    %6 = arith.mulf %4, %5 : vector<1x32xf32>
    %7 = arith.mulf %2, %2 : vector<128x32xf32>
    %cst_5 = arith.constant dense<0.000000e+00> : vector<32xf32>
    %8 = vector.multi_reduction <add>, %7, %cst_5 [0] : vector<128x32xf32> to vector<32xf32>
    %9 = vector.shape_cast %8 : vector<32xf32> to vector<1x32xf32>
    %cst_6 = arith.constant 7.812500e-03 : f32
    %10 = vector.broadcast %cst_6 : f32 to vector<1x32xf32>
    %11 = arith.mulf %9, %10 : vector<1x32xf32>
    %12 = arith.mulf %6, %6 : vector<1x32xf32>
    %13 = arith.subf %11, %12 : vector<1x32xf32>
    %cst_7 = arith.constant 9.99999974E-6 : f32
    %14 = vector.broadcast %cst_7 : f32 to vector<1x32xf32>
    %15 = arith.addf %13, %14 : vector<1x32xf32>
    %16 = math.rsqrt %15 : vector<1x32xf32>
    %c0_8 = arith.constant 0 : index
    %c0_9 = arith.constant 0 : index
    %17 = vector.load %arg3[%c0_8, %c0_9] : memref<1x32xf32, #tpu.memory_space<vmem>>, vector<1x32xf32>
    %18 = arith.mulf %17, %16 : vector<1x32xf32>
    %c0_10 = arith.constant 0 : index
    %c0_11 = arith.constant 0 : index
    %19 = vector.load %arg4[%c0_10, %c0_11] : memref<1x32xf32, #tpu.memory_space<vmem>>, vector<1x32xf32>
    %20 = arith.mulf %6, %18 : vector<1x32xf32>
    %21 = arith.subf %19, %20 : vector<1x32xf32>
    %22 = vector.broadcast %18 : vector<1x32xf32> to vector<128x32xf32>
    %23 = arith.mulf %2, %22 : vector<128x32xf32>
    %24 = vector.broadcast %21 : vector<1x32xf32> to vector<128x32xf32>
    %25 = arith.addf %23, %24 : vector<128x32xf32>
    %cst_12 = arith.constant 0.000000e+00 : f32
    %26 = vector.broadcast %cst_12 : f32 to vector<128x32xf32>
    %27 = arith.maximumf %25, %26 : vector<128x32xf32>
    %28 = vector.extract_strided_slice %27 {offsets = [0, 0], sizes = [32, 32], strides = [1, 1]} : vector<128x32xf32> to vector<32x32xf32>
    %29 = vector.extract_strided_slice %27 {offsets = [32, 0], sizes = [32, 32], strides = [1, 1]} : vector<128x32xf32> to vector<32x32xf32>
    %30 = arith.maximumf %28, %29 : vector<32x32xf32>
    %31 = vector.extract_strided_slice %27 {offsets = [64, 0], sizes = [32, 32], strides = [1, 1]} : vector<128x32xf32> to vector<32x32xf32>
    %32 = vector.extract_strided_slice %27 {offsets = [96, 0], sizes = [32, 32], strides = [1, 1]} : vector<128x32xf32> to vector<32x32xf32>
    %33 = arith.maximumf %31, %32 : vector<32x32xf32>
    %34 = arith.maximumf %30, %33 : vector<32x32xf32>
    %c0_13 = arith.constant 0 : index
    %c0_14 = arith.constant 0 : index
    %35 = vector.load %arg6[%c0_13, %c0_14] : memref<1x128xf32, #tpu.memory_space<vmem>>, vector<1x128xf32>
    %36 = vector.shape_cast %35 : vector<1x128xf32> to vector<1x128xf32>
    %37 = vector.broadcast %36 : vector<1x128xf32> to vector<2x128xf32>
    %38 = vector.extract_strided_slice %34 {offsets = [0, 0], sizes = [2, 32], strides = [1, 1]} : vector<32x32xf32> to vector<2x32xf32>
    %c0_15 = arith.constant 0 : index
    %c0_16 = arith.constant 0 : index
    %c0_17 = arith.constant 0 : index
    %39 = vector.load %arg5[%c0_15, %c0_16, %c0_17] : memref<16x32x128xf32, #tpu.memory_space<vmem>>, vector<1x32x128xf32>
    %40 = vector.shape_cast %39 : vector<1x32x128xf32> to vector<32x128xf32>
    %cst_18 = arith.constant dense<0.000000e+00> : vector<2x128xf32>
    %41 = tpu.matmul %38, %40, %cst_18 {dimension_numbers = #tpu.dot_dimension_numbers<[1], [0], [0], [1], [0, 0, 1, 1], [], []>} : vector<2x32xf32>, vector<32x128xf32>, vector<2x128xf32> -> vector<2x128xf32>
    %42 = arith.addf %37, %41 : vector<2x128xf32>
    %43 = vector.extract_strided_slice %34 {offsets = [2, 0], sizes = [2, 32], strides = [1, 1]} : vector<32x32xf32> to vector<2x32xf32>
    %c1 = arith.constant 1 : index
    %c0_19 = arith.constant 0 : index
    %c0_20 = arith.constant 0 : index
    %44 = vector.load %arg5[%c1, %c0_19, %c0_20] : memref<16x32x128xf32, #tpu.memory_space<vmem>>, vector<1x32x128xf32>
    %45 = vector.shape_cast %44 : vector<1x32x128xf32> to vector<32x128xf32>
    %cst_21 = arith.constant dense<0.000000e+00> : vector<2x128xf32>
    %46 = tpu.matmul %43, %45, %cst_21 {dimension_numbers = #tpu.dot_dimension_numbers<[1], [0], [0], [1], [0, 0, 1, 1], [], []>} : vector<2x32xf32>, vector<32x128xf32>, vector<2x128xf32> -> vector<2x128xf32>
    %47 = arith.addf %42, %46 : vector<2x128xf32>
    %48 = vector.extract_strided_slice %34 {offsets = [4, 0], sizes = [2, 32], strides = [1, 1]} : vector<32x32xf32> to vector<2x32xf32>
    %c2 = arith.constant 2 : index
    %c0_22 = arith.constant 0 : index
    %c0_23 = arith.constant 0 : index
    %49 = vector.load %arg5[%c2, %c0_22, %c0_23] : memref<16x32x128xf32, #tpu.memory_space<vmem>>, vector<1x32x128xf32>
    %50 = vector.shape_cast %49 : vector<1x32x128xf32> to vector<32x128xf32>
    %cst_24 = arith.constant dense<0.000000e+00> : vector<2x128xf32>
    %51 = tpu.matmul %48, %50, %cst_24 {dimension_numbers = #tpu.dot_dimension_numbers<[1], [0], [0], [1], [0, 0, 1, 1], [], []>} : vector<2x32xf32>, vector<32x128xf32>, vector<2x128xf32> -> vector<2x128xf32>
    %52 = arith.addf %47, %51 : vector<2x128xf32>
    %53 = vector.extract_strided_slice %34 {offsets = [6, 0], sizes = [2, 32], strides = [1, 1]} : vector<32x32xf32> to vector<2x32xf32>
    %c3 = arith.constant 3 : index
    %c0_25 = arith.constant 0 : index
    %c0_26 = arith.constant 0 : index
    %54 = vector.load %arg5[%c3, %c0_25, %c0_26] : memref<16x32x128xf32, #tpu.memory_space<vmem>>, vector<1x32x128xf32>
    %55 = vector.shape_cast %54 : vector<1x32x128xf32> to vector<32x128xf32>
    %cst_27 = arith.constant dense<0.000000e+00> : vector<2x128xf32>
    %56 = tpu.matmul %53, %55, %cst_27 {dimension_numbers = #tpu.dot_dimension_numbers<[1], [0], [0], [1], [0, 0, 1, 1], [], []>} : vector<2x32xf32>, vector<32x128xf32>, vector<2x128xf32> -> vector<2x128xf32>
    %57 = arith.addf %52, %56 : vector<2x128xf32>
    %58 = vector.extract_strided_slice %34 {offsets = [8, 0], sizes = [2, 32], strides = [1, 1]} : vector<32x32xf32> to vector<2x32xf32>
    %c4 = arith.constant 4 : index
    %c0_28 = arith.constant 0 : index
    %c0_29 = arith.constant 0 : index
    %59 = vector.load %arg5[%c4, %c0_28, %c0_29] : memref<16x32x128xf32, #tpu.memory_space<vmem>>, vector<1x32x128xf32>
    %60 = vector.shape_cast %59 : vector<1x32x128xf32> to vector<32x128xf32>
    %cst_30 = arith.constant dense<0.000000e+00> : vector<2x128xf32>
    %61 = tpu.matmul %58, %60, %cst_30 {dimension_numbers = #tpu.dot_dimension_numbers<[1], [0], [0], [1], [0, 0, 1, 1], [], []>} : vector<2x32xf32>, vector<32x128xf32>, vector<2x128xf32> -> vector<2x128xf32>
    %62 = arith.addf %57, %61 : vector<2x128xf32>
    %63 = vector.extract_strided_slice %34 {offsets = [10, 0], sizes = [2, 32], strides = [1, 1]} : vector<32x32xf32> to vector<2x32xf32>
    %c5 = arith.constant 5 : index
    %c0_31 = arith.constant 0 : index
    %c0_32 = arith.constant 0 : index
    %64 = vector.load %arg5[%c5, %c0_31, %c0_32] : memref<16x32x128xf32, #tpu.memory_space<vmem>>, vector<1x32x128xf32>
    %65 = vector.shape_cast %64 : vector<1x32x128xf32> to vector<32x128xf32>
    %cst_33 = arith.constant dense<0.000000e+00> : vector<2x128xf32>
    %66 = tpu.matmul %63, %65, %cst_33 {dimension_numbers = #tpu.dot_dimension_numbers<[1], [0], [0], [1], [0, 0, 1, 1], [], []>} : vector<2x32xf32>, vector<32x128xf32>, vector<2x128xf32> -> vector<2x128xf32>
    %67 = arith.addf %62, %66 : vector<2x128xf32>
    %68 = vector.extract_strided_slice %34 {offsets = [12, 0], sizes = [2, 32], strides = [1, 1]} : vector<32x32xf32> to vector<2x32xf32>
    %c6 = arith.constant 6 : index
    %c0_34 = arith.constant 0 : index
    %c0_35 = arith.constant 0 : index
    %69 = vector.load %arg5[%c6, %c0_34, %c0_35] : memref<16x32x128xf32, #tpu.memory_space<vmem>>, vector<1x32x128xf32>
    %70 = vector.shape_cast %69 : vector<1x32x128xf32> to vector<32x128xf32>
    %cst_36 = arith.constant dense<0.000000e+00> : vector<2x128xf32>
    %71 = tpu.matmul %68, %70, %cst_36 {dimension_numbers = #tpu.dot_dimension_numbers<[1], [0], [0], [1], [0, 0, 1, 1], [], []>} : vector<2x32xf32>, vector<32x128xf32>, vector<2x128xf32> -> vector<2x128xf32>
    %72 = arith.addf %67, %71 : vector<2x128xf32>
    %73 = vector.extract_strided_slice %34 {offsets = [14, 0], sizes = [2, 32], strides = [1, 1]} : vector<32x32xf32> to vector<2x32xf32>
    %c7 = arith.constant 7 : index
    %c0_37 = arith.constant 0 : index
    %c0_38 = arith.constant 0 : index
    %74 = vector.load %arg5[%c7, %c0_37, %c0_38] : memref<16x32x128xf32, #tpu.memory_space<vmem>>, vector<1x32x128xf32>
    %75 = vector.shape_cast %74 : vector<1x32x128xf32> to vector<32x128xf32>
    %cst_39 = arith.constant dense<0.000000e+00> : vector<2x128xf32>
    %76 = tpu.matmul %73, %75, %cst_39 {dimension_numbers = #tpu.dot_dimension_numbers<[1], [0], [0], [1], [0, 0, 1, 1], [], []>} : vector<2x32xf32>, vector<32x128xf32>, vector<2x128xf32> -> vector<2x128xf32>
    %77 = arith.addf %72, %76 : vector<2x128xf32>
    %78 = vector.extract_strided_slice %34 {offsets = [16, 0], sizes = [2, 32], strides = [1, 1]} : vector<32x32xf32> to vector<2x32xf32>
    %c8 = arith.constant 8 : index
    %c0_40 = arith.constant 0 : index
    %c0_41 = arith.constant 0 : index
    %79 = vector.load %arg5[%c8, %c0_40, %c0_41] : memref<16x32x128xf32, #tpu.memory_space<vmem>>, vector<1x32x128xf32>
    %80 = vector.shape_cast %79 : vector<1x32x128xf32> to vector<32x128xf32>
    %cst_42 = arith.constant dense<0.000000e+00> : vector<2x128xf32>
    %81 = tpu.matmul %78, %80, %cst_42 {dimension_numbers = #tpu.dot_dimension_numbers<[1], [0], [0], [1], [0, 0, 1, 1], [], []>} : vector<2x32xf32>, vector<32x128xf32>, vector<2x128xf32> -> vector<2x128xf32>
    %82 = arith.addf %77, %81 : vector<2x128xf32>
    %83 = vector.extract_strided_slice %34 {offsets = [18, 0], sizes = [2, 32], strides = [1, 1]} : vector<32x32xf32> to vector<2x32xf32>
    %c9 = arith.constant 9 : index
    %c0_43 = arith.constant 0 : index
    %c0_44 = arith.constant 0 : index
    %84 = vector.load %arg5[%c9, %c0_43, %c0_44] : memref<16x32x128xf32, #tpu.memory_space<vmem>>, vector<1x32x128xf32>
    %85 = vector.shape_cast %84 : vector<1x32x128xf32> to vector<32x128xf32>
    %cst_45 = arith.constant dense<0.000000e+00> : vector<2x128xf32>
    %86 = tpu.matmul %83, %85, %cst_45 {dimension_numbers = #tpu.dot_dimension_numbers<[1], [0], [0], [1], [0, 0, 1, 1], [], []>} : vector<2x32xf32>, vector<32x128xf32>, vector<2x128xf32> -> vector<2x128xf32>
    %87 = arith.addf %82, %86 : vector<2x128xf32>
    %88 = vector.extract_strided_slice %34 {offsets = [20, 0], sizes = [2, 32], strides = [1, 1]} : vector<32x32xf32> to vector<2x32xf32>
    %c10 = arith.constant 10 : index
    %c0_46 = arith.constant 0 : index
    %c0_47 = arith.constant 0 : index
    %89 = vector.load %arg5[%c10, %c0_46, %c0_47] : memref<16x32x128xf32, #tpu.memory_space<vmem>>, vector<1x32x128xf32>
    %90 = vector.shape_cast %89 : vector<1x32x128xf32> to vector<32x128xf32>
    %cst_48 = arith.constant dense<0.000000e+00> : vector<2x128xf32>
    %91 = tpu.matmul %88, %90, %cst_48 {dimension_numbers = #tpu.dot_dimension_numbers<[1], [0], [0], [1], [0, 0, 1, 1], [], []>} : vector<2x32xf32>, vector<32x128xf32>, vector<2x128xf32> -> vector<2x128xf32>
    %92 = arith.addf %87, %91 : vector<2x128xf32>
    %93 = vector.extract_strided_slice %34 {offsets = [22, 0], sizes = [2, 32], strides = [1, 1]} : vector<32x32xf32> to vector<2x32xf32>
    %c11 = arith.constant 11 : index
    %c0_49 = arith.constant 0 : index
    %c0_50 = arith.constant 0 : index
    %94 = vector.load %arg5[%c11, %c0_49, %c0_50] : memref<16x32x128xf32, #tpu.memory_space<vmem>>, vector<1x32x128xf32>
    %95 = vector.shape_cast %94 : vector<1x32x128xf32> to vector<32x128xf32>
    %cst_51 = arith.constant dense<0.000000e+00> : vector<2x128xf32>
    %96 = tpu.matmul %93, %95, %cst_51 {dimension_numbers = #tpu.dot_dimension_numbers<[1], [0], [0], [1], [0, 0, 1, 1], [], []>} : vector<2x32xf32>, vector<32x128xf32>, vector<2x128xf32> -> vector<2x128xf32>
    %97 = arith.addf %92, %96 : vector<2x128xf32>
    %98 = vector.extract_strided_slice %34 {offsets = [24, 0], sizes = [2, 32], strides = [1, 1]} : vector<32x32xf32> to vector<2x32xf32>
    %c12 = arith.constant 12 : index
    %c0_52 = arith.constant 0 : index
    %c0_53 = arith.constant 0 : index
    %99 = vector.load %arg5[%c12, %c0_52, %c0_53] : memref<16x32x128xf32, #tpu.memory_space<vmem>>, vector<1x32x128xf32>
    %100 = vector.shape_cast %99 : vector<1x32x128xf32> to vector<32x128xf32>
    %cst_54 = arith.constant dense<0.000000e+00> : vector<2x128xf32>
    %101 = tpu.matmul %98, %100, %cst_54 {dimension_numbers = #tpu.dot_dimension_numbers<[1], [0], [0], [1], [0, 0, 1, 1], [], []>} : vector<2x32xf32>, vector<32x128xf32>, vector<2x128xf32> -> vector<2x128xf32>
    %102 = arith.addf %97, %101 : vector<2x128xf32>
    %103 = vector.extract_strided_slice %34 {offsets = [26, 0], sizes = [2, 32], strides = [1, 1]} : vector<32x32xf32> to vector<2x32xf32>
    %c13 = arith.constant 13 : index
    %c0_55 = arith.constant 0 : index
    %c0_56 = arith.constant 0 : index
    %104 = vector.load %arg5[%c13, %c0_55, %c0_56] : memref<16x32x128xf32, #tpu.memory_space<vmem>>, vector<1x32x128xf32>
    %105 = vector.shape_cast %104 : vector<1x32x128xf32> to vector<32x128xf32>
    %cst_57 = arith.constant dense<0.000000e+00> : vector<2x128xf32>
    %106 = tpu.matmul %103, %105, %cst_57 {dimension_numbers = #tpu.dot_dimension_numbers<[1], [0], [0], [1], [0, 0, 1, 1], [], []>} : vector<2x32xf32>, vector<32x128xf32>, vector<2x128xf32> -> vector<2x128xf32>
    %107 = arith.addf %102, %106 : vector<2x128xf32>
    %108 = vector.extract_strided_slice %34 {offsets = [28, 0], sizes = [2, 32], strides = [1, 1]} : vector<32x32xf32> to vector<2x32xf32>
    %c14 = arith.constant 14 : index
    %c0_58 = arith.constant 0 : index
    %c0_59 = arith.constant 0 : index
    %109 = vector.load %arg5[%c14, %c0_58, %c0_59] : memref<16x32x128xf32, #tpu.memory_space<vmem>>, vector<1x32x128xf32>
    %110 = vector.shape_cast %109 : vector<1x32x128xf32> to vector<32x128xf32>
    %cst_60 = arith.constant dense<0.000000e+00> : vector<2x128xf32>
    %111 = tpu.matmul %108, %110, %cst_60 {dimension_numbers = #tpu.dot_dimension_numbers<[1], [0], [0], [1], [0, 0, 1, 1], [], []>} : vector<2x32xf32>, vector<32x128xf32>, vector<2x128xf32> -> vector<2x128xf32>
    %112 = arith.addf %107, %111 : vector<2x128xf32>
    %113 = vector.extract_strided_slice %34 {offsets = [30, 0], sizes = [2, 32], strides = [1, 1]} : vector<32x32xf32> to vector<2x32xf32>
    %c15 = arith.constant 15 : index
    %c0_61 = arith.constant 0 : index
    %c0_62 = arith.constant 0 : index
    %114 = vector.load %arg5[%c15, %c0_61, %c0_62] : memref<16x32x128xf32, #tpu.memory_space<vmem>>, vector<1x32x128xf32>
    %115 = vector.shape_cast %114 : vector<1x32x128xf32> to vector<32x128xf32>
    %cst_63 = arith.constant dense<0.000000e+00> : vector<2x128xf32>
    %116 = tpu.matmul %113, %115, %cst_63 {dimension_numbers = #tpu.dot_dimension_numbers<[1], [0], [0], [1], [0, 0, 1, 1], [], []>} : vector<2x32xf32>, vector<32x128xf32>, vector<2x128xf32> -> vector<2x128xf32>
    %117 = arith.addf %112, %116 : vector<2x128xf32>
    %c0_64 = arith.constant 0 : index
    %c0_65 = arith.constant 0 : index
    %118 = vector.load %arg7[%c0_64, %c0_65] : memref<2x128xf32, #tpu.memory_space<vmem>>, vector<2x128xf32>
    tpu.vector_store %arg7[%c0_64, %c0_65], %117 {strides = array<i32>} : memref<2x128xf32, #tpu.memory_space<vmem>>, vector<2x128xf32>,
    return
  }
  func.func @transform_0(%arg0: i32) -> (i32, i32) {
    %c0_i32 = arith.constant 0 : i32
    %c0_i32_0 = arith.constant 0 : i32
    %c0_i32_1 = arith.constant 0 : i32
    return %c0_i32, %c0_i32_0 : i32, i32
  }
  func.func @transform_1(%arg0: i32) -> (i32, i32) {
    %c0_i32 = arith.constant 0 : i32
    %c0_i32_0 = arith.constant 0 : i32
    %c0_i32_1 = arith.constant 0 : i32
    return %c0_i32, %c0_i32_0 : i32, i32
  }
  func.func @transform_2(%arg0: i32) -> (i32, i32) {
    %c0_i32 = arith.constant 0 : i32
    %c0_i32_0 = arith.constant 0 : i32
    %c0_i32_1 = arith.constant 0 : i32
    return %c0_i32, %c0_i32_0 : i32, i32
  }
  func.func @transform_3(%arg0: i32) -> (i32, i32) {
    %c0_i32 = arith.constant 0 : i32
    %c0_i32_0 = arith.constant 0 : i32
    %c0_i32_1 = arith.constant 0 : i32
    return %c0_i32, %c0_i32_0 : i32, i32
  }
  func.func @transform_4(%arg0: i32) -> (i32, i32, i32) {
    %c0_i32 = arith.constant 0 : i32
    %c0_i32_0 = arith.constant 0 : i32
    %c0_i32_1 = arith.constant 0 : i32
    %c0_i32_2 = arith.constant 0 : i32
    return %c0_i32, %c0_i32_0, %c0_i32_1 : i32, i32, i32
  }
  func.func @transform_5(%arg0: i32) -> (i32, i32) {
    %c0_i32 = arith.constant 0 : i32
    %c0_i32_0 = arith.constant 0 : i32
    %c0_i32_1 = arith.constant 0 : i32
    return %c0_i32, %c0_i32_0 : i32, i32
  }
  func.func @transform_6(%arg0: i32) -> (i32, i32) {
    %c0_i32 = arith.constant 0 : i32
    %c0_i32_0 = arith.constant 0 : i32
    %c0_i32_1 = arith.constant 0 : i32
    return %c0_i32, %c0_i32_0 : i32, i32
  }
}

</mosaic_0001>

<llo_original>
// kernel: probenet_s.3
$region0: #{probenet_s.3}
  #allocation0 [shape = 'u32[]', space=smem, size = 0x4, offset = 0x4, fixed_abs, tag = 'smem constant byte address 0x4 - core index']
  #allocation1 [shape = 'u32[144,128]{1,0:T(1,128)}', space=vmem, size = 0x12000, scoped, tag = 'internal scratch']
  %s0 = inlined_call_operand.vmem [shape: bf16[27,2048], index: 0, kind: input, shape index: {}]
  %s1 = inlined_call_operand.vmem [shape: bf16[8,27], index: 1, kind: input, shape index: {}]
  %s2 = inlined_call_operand.vmem [shape: f32[8,1], index: 2, kind: input, shape index: {}]
  %s3 = inlined_call_operand.vmem [shape: f32[8,1], index: 3, kind: input, shape index: {}]
  %s4 = inlined_call_operand.vmem [shape: f32[8,512], index: 4, kind: output, shape index: {}]
  %s5 = sld [smem:[#allocation0]]
  $region26: #{probenet_s.3} parent=0
    _
  %s7 = ssub.s32 1, %s5
  %s8 = scalar_select 0, %s7, %s5
  // Predicated region
  $region2: #{probenet_s.3} parent=0 // pred_check
    _
  $region3: #{probenet_s.3} parent=0 // pred_check_branch
    %10 = sbr.rel (0) target = $region5
  $region4: #{probenet_s.3} parent=0 // pred_region
    _
  $region5: #{probenet_s.3} parent=0 // pred_fallthru
    _
  // Predicated region
  $region6: #{probenet_s.3} parent=0 // pred_check
    _
  $region7: #{probenet_s.3} parent=0 // pred_check_branch
    %12 = sbr.rel (0) target = $region9
  $region8: #{probenet_s.3} parent=0 // pred_region
    _
  $region9: #{probenet_s.3} parent=0 // pred_fallthru
    _
  // Predicated region
  $region10: #{probenet_s.3} parent=0 // pred_check
    _
  $region11: #{probenet_s.3} parent=0 // pred_check_branch
    %14 = sbr.rel (0) target = $region13
  $region12: #{probenet_s.3} parent=0 // pred_region
    _
  $region13: #{probenet_s.3} parent=0 // pred_fallthru
    _
  // Predicated region
  $region14: #{probenet_s.3} parent=0 // pred_check
    _
  $region15: #{probenet_s.3} parent=0 // pred_check_branch
    %16 = sbr.rel (0) target = $region17
  $region16: #{probenet_s.3} parent=0 // pred_region
    _
  $region17: #{probenet_s.3} parent=0 // pred_fallthru
    _
  %v18 = vld [vmem:[%s1] sm:$0xf]
  %v19 = vld [vmem:[%s0] sm:$0xff]
  %v20 = vld [vmem:[%s0 + $0x8] sm:$0xff]
  %v21 = vld [vmem:[%s0 + $0x10] sm:$0xff]
  %v22 = vld [vmem:[%s0 + $0x18] sm:$0xff]
  %v23 = vld [vmem:[%s0 + $0x20] sm:$0xff]
  %v24 = vld [vmem:[%s0 + $0x28] sm:$0xff]
  %v25 = vld [vmem:[%s0 + $0x30] sm:$0xff]
  %v26 = vld [vmem:[%s0 + $0x38] sm:$0xff]
  %v27 = vld [vmem:[%s0 + $0x40] sm:$0xff]
  %v28 = vld [vmem:[%s0 + $0x48] sm:$0xff]
  %v29 = vld [vmem:[%s0 + $0x50] sm:$0xff]
  %v30 = vld [vmem:[%s0 + $0x58] sm:$0xff]
  %v31 = vld [vmem:[%s0 + $0x60] sm:$0xff]
  %v32 = vld [vmem:[%s0 + $0x68] sm:$0xff]
  %v33 = vld [vmem:[%s0 + $0x70] sm:$0xff]
  %v34 = vld [vmem:[%s0 + $0x78] sm:$0xff]
  %v35 = vld [vmem:[%s0 + $0x80] sm:$0xff]
  %v36 = vld [vmem:[%s0 + $0x88] sm:$0xff]
  %v37 = vld [vmem:[%s0 + $0x90] sm:$0xff]
  %v38 = vld [vmem:[%s0 + $0x98] sm:$0xff]
  %v39 = vld [vmem:[%s0 + $0xa0] sm:$0xff]
  %v40 = vld [vmem:[%s0 + $0xa8] sm:$0xff]
  %v41 = vld [vmem:[%s0 + $0xb0] sm:$0xff]
  %v42 = vld [vmem:[%s0 + $0xb8] sm:$0xff]
  %v43 = vld [vmem:[%s0 + $0xc0] sm:$0x33]
  %v44 = vld [vmem:[%s0 + $0xc8] sm:$0x33]
  %v45 = vld [vmem:[%s0 + $0xd0] sm:$0x33]
  %v46 = vld [vmem:[%s0 + $0xd8] sm:$0x33]
  %v47 = vld [vmem:[%s0 + $0xe0] sm:$0x33]
  %v48 = vld [vmem:[%s0 + $0xe8] sm:$0x33]
  %v49 = vld [vmem:[%s0 + $0xf0] sm:$0x33]
  %v50 = vld [vmem:[%s0 + $0xf8] sm:$0x33]
  %v83 = vunpack.c.l.b16 %v19
  %v84 = vunpack.c.h.b16 %v19
  %v85 = vunpack.c.l.b16 %v20
  %v86 = vunpack.c.h.b16 %v20
  %v87 = vunpack.c.l.b16 %v21
  %v88 = vunpack.c.h.b16 %v21
  %v89 = vunpack.c.l.b16 %v22
  %v90 = vunpack.c.h.b16 %v22
  %v91 = vunpack.c.l.b16 %v23
  %v92 = vunpack.c.h.b16 %v23
  %v93 = vunpack.c.l.b16 %v24
  %v94 = vunpack.c.h.b16 %v24
  %v95 = vunpack.c.l.b16 %v25
  %v96 = vunpack.c.h.b16 %v25
  %v97 = vunpack.c.l.b16 %v26
  %v98 = vunpack.c.h.b16 %v26
  %v99 = vunpack.c.l.b16 %v27
  %v100 = vunpack.c.h.b16 %v27
  %v101 = vunpack.c.l.b16 %v28
  %v102 = vunpack.c.h.b16 %v28
  %v103 = vunpack.c.l.b16 %v29
  %v104 = vunpack.c.h.b16 %v29
  %v105 = vunpack.c.l.b16 %v30
  %v106 = vunpack.c.h.b16 %v30
  %v107 = vunpack.c.l.b16 %v31
  %v108 = vunpack.c.h.b16 %v31
  %v109 = vunpack.c.l.b16 %v32
  %v110 = vunpack.c.h.b16 %v32
  %v111 = vunpack.c.l.b16 %v33
  %v112 = vunpack.c.h.b16 %v33
  %v113 = vunpack.c.l.b16 %v34
  %v114 = vunpack.c.h.b16 %v34
  %v115 = vunpack.c.l.b16 %v35
  %v116 = vunpack.c.h.b16 %v35
  %v117 = vunpack.c.l.b16 %v36
  %v118 = vunpack.c.h.b16 %v36
  %v119 = vunpack.c.l.b16 %v37
  %v120 = vunpack.c.h.b16 %v37
  %v121 = vunpack.c.l.b16 %v38
  %v122 = vunpack.c.h.b16 %v38
  %v123 = vunpack.c.l.b16 %v39
  %v124 = vunpack.c.h.b16 %v39
  %v125 = vunpack.c.l.b16 %v40
  %v126 = vunpack.c.h.b16 %v40
  %v127 = vunpack.c.l.b16 %v41
  %v128 = vunpack.c.h.b16 %v41
  %v129 = vunpack.c.l.b16 %v42
  %v130 = vunpack.c.h.b16 %v42
  %v131 = vunpack.c.l.b16 %v43
  %v132 = vunpack.c.h.b16 %v43
  %v133 = vunpack.c.l.b16 %v44
  %v134 = vunpack.c.h.b16 %v44
  %v135 = vunpack.c.l.b16 %v45
  %v136 = vunpack.c.h.b16 %v45
  %v137 = vunpack.c.l.b16 %v46
  %v138 = vunpack.c.h.b16 %v46
  %v139 = vunpack.c.l.b16 %v47
  %v140 = vunpack.c.h.b16 %v47
  %v141 = vunpack.c.l.b16 %v48
  %v142 = vunpack.c.h.b16 %v48
  %v143 = vunpack.c.l.b16 %v49
  %v144 = vunpack.c.h.b16 %v49
  %v145 = vunpack.c.l.b16 %v50
  %v146 = vunpack.c.h.b16 %v50
  %v147 = vpack.c.b16 %v99, %v83
  %v148 = vpack.c.b16 %v100, %v84
  %v149 = vpack.c.b16 %v101, %v85
  %v150 = vpack.c.b16 %v102, %v86
  %v151 = vpack.c.b16 %v103, %v87
  %v152 = vpack.c.b16 %v104, %v88
  %v153 = vpack.c.b16 %v105, %v89
  %v154 = vpack.c.b16 %v106, %v90
  %v155 = vpack.c.b16 %v107, %v91
  %v156 = vpack.c.b16 %v108, %v92
  %v157 = vpack.c.b16 %v109, %v93
  %v158 = vpack.c.b16 %v110, %v94
  %v159 = vpack.c.b16 %v111, %v95
  %v160 = vpack.c.b16 %v112, %v96
  %v161 = vpack.c.b16 %v113, %v97
  %v162 = vpack.c.b16 %v114, %v98
  %v163 = vpack.c.b16 %v131, %v115
  %v164 = vpack.c.b16 %v132, %v116
  %v165 = vpack.c.b16 %v133, %v117
  %v166 = vpack.c.b16 %v134, %v118
  %v167 = vpack.c.b16 %v135, %v119
  %v168 = vpack.c.b16 %v136, %v120
  %v169 = vpack.c.b16 %v137, %v121
  %v170 = vpack.c.b16 %v138, %v122
  %v171 = vpack.c.b16 %v139, %v123
  %v172 = vpack.c.b16 %v140, %v124
  %v173 = vpack.c.b16 %v141, %v125
  %v174 = vpack.c.b16 %v142, %v126
  %v175 = vpack.c.b16 %v143, %v127
  %v176 = vpack.c.b16 %v144, %v128
  %v177 = vpack.c.b16 %v145, %v129
  %v178 = vpack.c.b16 %v146, %v130
  %vm195 = vcmask 220160
  %v197 = vsel %vm195, %v18, 0
  %vm199 = vcmask 1044480
  %vm200 = vcmask 1045504
  %v201 = vsel %vm199, 4294967295, 65535
  %v202 = vsel %vm200, %v201, 0
  %v204 = vand.u32 %v163, %v202
  %v207 = vand.u32 %v164, %v202
  %v210 = vand.u32 %v165, %v202
  %v213 = vand.u32 %v166, %v202
  %v216 = vand.u32 %v167, %v202
  %v219 = vand.u32 %v168, %v202
  %v222 = vand.u32 %v169, %v202
  %v225 = vand.u32 %v170, %v202
  %v228 = vand.u32 %v171, %v202
  %v231 = vand.u32 %v172, %v202
  %v234 = vand.u32 %v173, %v202
  %v237 = vand.u32 %v174, %v202
  %v240 = vand.u32 %v175, %v202
  %v243 = vand.u32 %v176, %v202
  %v246 = vand.u32 %v177, %v202
  %v249 = vand.u32 %v178, %v202
  %251 = vmatprep.subr.bf16.mxu0 0
  %252 = vmatpush1.bf16.msra.mxu0 0
  %253 = vmatprep.subr.bf16.mxu0 0
  %254 = vmatpush1.bf16.msra.mxu0 0
  %255 = vmatprep.subr.bf16.mxu0 0
  %256 = vmatpush1.bf16.msra.mxu0 0
  %257 = vmatprep.subr.bf16.mxu0 0
  %258 = vmatpush1.bf16.msra.mxu0 0
  %259 = vmatprep.subr.bf16.mxu0 0
  %260 = vmatpush1.bf16.msra.mxu0 0
  %261 = vmatprep.subr.bf16.mxu0 0
  %262 = vmatpush1.bf16.msra.mxu0 0
  %263 = vmatprep.subr.bf16.mxu0 %v207
  %264 = vmatpush1.bf16.msra.mxu0 %v204
  %265 = vmatprep.subr.bf16.mxu0 %v148
  %266 = vmatpush1.bf16.msra.mxu0 %v147
  %267 = vmatprep.subr.bf16.mxu0 0
  %268 = vmatpush2.bf16.msra.mxu0 0
  %269 = vmatprep.subr.bf16.mxu0 0
  %270 = vmatpush2.bf16.msra.mxu0 0
  %271 = vmatprep.subr.bf16.mxu0 0
  %272 = vmatpush2.bf16.msra.mxu0 0
  %273 = vmatprep.subr.bf16.mxu0 0
  %274 = vmatpush2.bf16.msra.mxu0 0
  %275 = vmatprep.subr.bf16.mxu0 0
  %276 = vmatpush2.bf16.msra.mxu0 0
  %277 = vmatprep.subr.bf16.mxu0 0
  %278 = vmatpush2.bf16.msra.mxu0 0
  %279 = vmatprep.subr.bf16.mxu0 0
  %280 = vmatpush2.bf16.msra.mxu0 0
  %281 = vmatprep.subr.bf16.mxu0 0
  %282 = vmatpush2.bf16.msra.mxu0 0
  %283 = vmatprep.mubr.bf16.mxu0 0
  %284 = vmatmul.mubr.bf16.gmra.mxu0 %v197
  %v285 = vpop.f32.mrf.mxu0
  %v286 = vadd.f32 0.0, %v285
  %v287 = vpop.f32.mrf.mxu0
  %v288 = vadd.f32 0.0, %v287
  %v289 = vpop.f32.mrf.mxu0
  %v290 = vpop.f32.mrf.mxu0
  %291 = vdwg.mxu0
  %292 = vmatprep.subr.bf16.mxu0 0
  %293 = vmatpush1.bf16.msra.mxu0 0
  %294 = vmatprep.subr.bf16.mxu0 0
  %295 = vmatpush1.bf16.msra.mxu0 0
  %296 = vmatprep.subr.bf16.mxu0 0
  %297 = vmatpush1.bf16.msra.mxu0 0
  %298 = vmatprep.subr.bf16.mxu0 0
  %299 = vmatpush1.bf16.msra.mxu0 0
  %300 = vmatprep.subr.bf16.mxu0 0
  %301 = vmatpush1.bf16.msra.mxu0 0
  %302 = vmatprep.subr.bf16.mxu0 0
  %303 = vmatpush1.bf16.msra.mxu0 0
  %304 = vmatprep.subr.bf16.mxu0 %v213
  %305 = vmatpush1.bf16.msra.mxu0 %v210
  %306 = vmatprep.subr.bf16.mxu0 %v150
  %307 = vmatpush1.bf16.msra.mxu0 %v149
  %308 = vmatprep.subr.bf16.mxu0 0
  %309 = vmatpush2.bf16.msra.mxu0 0
  %310 = vmatprep.subr.bf16.mxu0 0
  %311 = vmatpush2.bf16.msra.mxu0 0
  %312 = vmatprep.subr.bf16.mxu0 0
  %313 = vmatpush2.bf16.msra.mxu0 0
  %314 = vmatprep.subr.bf16.mxu0 0
  %315 = vmatpush2.bf16.msra.mxu0 0
  %316 = vmatprep.subr.bf16.mxu0 0
  %317 = vmatpush2.bf16.msra.mxu0 0
  %318 = vmatprep.subr.bf16.mxu0 0
  %319 = vmatpush2.bf16.msra.mxu0 0
  %320 = vmatprep.subr.bf16.mxu0 0
  %321 = vmatpush2.bf16.msra.mxu0 0
  %322 = vmatprep.subr.bf16.mxu0 0
  %323 = vmatpush2.bf16.msra.mxu0 0
  %324 = vmatprep.mubr.bf16.mxu0 0
  %325 = vmatmul.mubr.bf16.gmra.mxu0 %v197
  %v326 = vpop.f32.mrf.mxu0
  %v327 = vadd.f32 0.0, %v326
  %v328 = vpop.f32.mrf.mxu0
  %v329 = vadd.f32 0.0, %v328
  %v330 = vpop.f32.mrf.mxu0
  %v331 = vpop.f32.mrf.mxu0
  %332 = vdwg.mxu0
  %333 = vmatprep.subr.bf16.mxu0 0
  %334 = vmatpush1.bf16.msra.mxu0 0
  %335 = vmatprep.subr.bf16.mxu0 0
  %336 = vmatpush1.bf16.msra.mxu0 0
  %337 = vmatprep.subr.bf16.mxu0 0
  %338 = vmatpush1.bf16.msra.mxu0 0
  %339 = vmatprep.subr.bf16.mxu0 0
  %340 = vmatpush1.bf16.msra.mxu0 0
  %341 = vmatprep.subr.bf16.mxu0 0
  %342 = vmatpush1.bf16.msra.mxu0 0
  %343 = vmatprep.subr.bf16.mxu0 0
  %344 = vmatpush1.bf16.msra.mxu0 0
  %345 = vmatprep.subr.bf16.mxu0 %v219
  %346 = vmatpush1.bf16.msra.mxu0 %v216
  %347 = vmatprep.subr.bf16.mxu0 %v152
  %348 = vmatpush1.bf16.msra.mxu0 %v151
  %349 = vmatprep.subr.bf16.mxu0 0
  %350 = vmatpush2.bf16.msra.mxu0 0
  %351 = vmatprep.subr.bf16.mxu0 0
  %352 = vmatpush2.bf16.msra.mxu0 0
  %353 = vmatprep.subr.bf16.mxu0 0
  %354 = vmatpush2.bf16.msra.mxu0 0
  %355 = vmatprep.subr.bf16.mxu0 0
  %356 = vmatpush2.bf16.msra.mxu0 0
  %357 = vmatprep.subr.bf16.mxu0 0
  %358 = vmatpush2.bf16.msra.mxu0 0
  %359 = vmatprep.subr.bf16.mxu0 0
  %360 = vmatpush2.bf16.msra.mxu0 0
  %361 = vmatprep.subr.bf16.mxu0 0
  %362 = vmatpush2.bf16.msra.mxu0 0
  %363 = vmatprep.subr.bf16.mxu0 0
  %364 = vmatpush2.bf16.msra.mxu0 0
  %365 = vmatprep.mubr.bf16.mxu0 0
  %366 = vmatmul.mubr.bf16.gmra.mxu0 %v197
  %v367 = vpop.f32.mrf.mxu0
  %v368 = vadd.f32 0.0, %v367
  %v369 = vpop.f32.mrf.mxu0
  %v370 = vadd.f32 0.0, %v369
  %v371 = vpop.f32.mrf.mxu0
  %v372 = vpop.f32.mrf.mxu0
  %373 = vdwg.mxu0
  %374 = vmatprep.subr.bf16.mxu0 0
  %375 = vmatpush1.bf16.msra.mxu0 0
  %376 = vmatprep.subr.bf16.mxu0 0
  %377 = vmatpush1.bf16.msra.mxu0 0
  %378 = vmatprep.subr.bf16.mxu0 0
  %379 = vmatpush1.bf16.msra.mxu0 0
  %380 = vmatprep.subr.bf16.mxu0 0
  %381 = vmatpush1.bf16.msra.mxu0 0
  %382 = vmatprep.subr.bf16.mxu0 0
  %383 = vmatpush1.bf16.msra.mxu0 0
  %384 = vmatprep.subr.bf16.mxu0 0
  %385 = vmatpush1.bf16.msra.mxu0 0
  %386 = vmatprep.subr.bf16.mxu0 %v225
  %387 = vmatpush1.bf16.msra.mxu0 %v222
  %388 = vmatprep.subr.bf16.mxu0 %v154
  %389 = vmatpush1.bf16.msra.mxu0 %v153
  %390 = vmatprep.subr.bf16.mxu0 0
  %391 = vmatpush2.bf16.msra.mxu0 0
  %392 = vmatprep.subr.bf16.mxu0 0
  %393 = vmatpush2.bf16.msra.mxu0 0
  %394 = vmatprep.subr.bf16.mxu0 0
  %395 = vmatpush2.bf16.msra.mxu0 0
  %396 = vmatprep.subr.bf16.mxu0 0
  %397 = vmatpush2.bf16.msra.mxu0 0
  %398 = vmatprep.subr.bf16.mxu0 0
  %399 = vmatpush2.bf16.msra.mxu0 0
  %400 = vmatprep.subr.bf16.mxu0 0
  %401 = vmatpush2.bf16.msra.mxu0 0
  %402 = vmatprep.subr.bf16.mxu0 0
  %403 = vmatpush2.bf16.msra.mxu0 0
  %404 = vmatprep.subr.bf16.mxu0 0
  %405 = vmatpush2.bf16.msra.mxu0 0
  %406 = vmatprep.mubr.bf16.mxu0 0
  %407 = vmatmul.mubr.bf16.gmra.mxu0 %v197
  %v408 = vpop.f32.mrf.mxu0
  %v409 = vadd.f32 0.0, %v408
  %v410 = vpop.f32.mrf.mxu0
  %v411 = vadd.f32 0.0, %v410
  %v412 = vpop.f32.mrf.mxu0
  %v413 = vpop.f32.mrf.mxu0
  %414 = vdwg.mxu0
  %415 = vmatprep.subr.bf16.mxu0 0
  %416 = vmatpush1.bf16.msra.mxu0 0
  %417 = vmatprep.subr.bf16.mxu0 0
  %418 = vmatpush1.bf16.msra.mxu0 0
  %419 = vmatprep.subr.bf16.mxu0 0
  %420 = vmatpush1.bf16.msra.mxu0 0
  %421 = vmatprep.subr.bf16.mxu0 0
  %422 = vmatpush1.bf16.msra.mxu0 0
  %423 = vmatprep.subr.bf16.mxu0 0
  %424 = vmatpush1.bf16.msra.mxu0 0
  %425 = vmatprep.subr.bf16.mxu0 0
  %426 = vmatpush1.bf16.msra.mxu0 0
  %427 = vmatprep.subr.bf16.mxu0 %v231
  %428 = vmatpush1.bf16.msra.mxu0 %v228
  %429 = vmatprep.subr.bf16.mxu0 %v156
  %430 = vmatpush1.bf16.msra.mxu0 %v155
  %431 = vmatprep.subr.bf16.mxu0 0
  %432 = vmatpush2.bf16.msra.mxu0 0
  %433 = vmatprep.subr.bf16.mxu0 0
  %434 = vmatpush2.bf16.msra.mxu0 0
  %435 = vmatprep.subr.bf16.mxu0 0
  %436 = vmatpush2.bf16.msra.mxu0 0
  %437 = vmatprep.subr.bf16.mxu0 0
  %438 = vmatpush2.bf16.msra.mxu0 0
  %439 = vmatprep.subr.bf16.mxu0 0
  %440 = vmatpush2.bf16.msra.mxu0 0
  %441 = vmatprep.subr.bf16.mxu0 0
  %442 = vmatpush2.bf16.msra.mxu0 0
  %443 = vmatprep.subr.bf16.mxu0 0
  %444 = vmatpush2.bf16.msra.mxu0 0
  %445 = vmatprep.subr.bf16.mxu0 0
  %446 = vmatpush2.bf16.msra.mxu0 0
  %447 = vmatprep.mubr.bf16.mxu0 0
  %448 = vmatmul.mubr.bf16.gmra.mxu0 %v197
  %v449 = vpop.f32.mrf.mxu0
  %v450 = vadd.f32 0.0, %v449
  %v451 = vpop.f32.mrf.mxu0
  %v452 = vadd.f32 0.0, %v451
  %v453 = vpop.f32.mrf.mxu0
  %v454 = vpop.f32.mrf.mxu0
  %455 = vdwg.mxu0
  %456 = vmatprep.subr.bf16.mxu0 0
  %457 = vmatpush1.bf16.msra.mxu0 0
  %458 = vmatprep.subr.bf16.mxu0 0
  %459 = vmatpush1.bf16.msra.mxu0 0
  %460 = vmatprep.subr.bf16.mxu0 0
  %461 = vmatpush1.bf16.msra.mxu0 0
  %462 = vmatprep.subr.bf16.mxu0 0
  %463 = vmatpush1.bf16.msra.mxu0 0
  %464 = vmatprep.subr.bf16.mxu0 0
  %465 = vmatpush1.bf16.msra.mxu0 0
  %466 = vmatprep.subr.bf16.mxu0 0
  %467 = vmatpush1.bf16.msra.mxu0 0
  %468 = vmatprep.subr.bf16.mxu0 %v237
  %469 = vmatpush1.bf16.msra.mxu0 %v234
  %470 = vmatprep.subr.bf16.mxu0 %v158
  %471 = vmatpush1.bf16.msra.mxu0 %v157
  %472 = vmatprep.subr.bf16.mxu0 0
  %473 = vmatpush2.bf16.msra.mxu0 0
  %474 = vmatprep.subr.bf16.mxu0 0
  %475 = vmatpush2.bf16.msra.mxu0 0
  %476 = vmatprep.subr.bf16.mxu0 0
  %477 = vmatpush2.bf16.msra.mxu0 0
  %478 = vmatprep.subr.bf16.mxu0 0
  %479 = vmatpush2.bf16.msra.mxu0 0
  %480 = vmatprep.subr.bf16.mxu0 0
  %481 = vmatpush2.bf16.msra.mxu0 0
  %482 = vmatprep.subr.bf16.mxu0 0
  %483 = vmatpush2.bf16.msra.mxu0 0
  %484 = vmatprep.subr.bf16.mxu0 0
  %485 = vmatpush2.bf16.msra.mxu0 0
  %486 = vmatprep.subr.bf16.mxu0 0
  %487 = vmatpush2.bf16.msra.mxu0 0
  %488 = vmatprep.mubr.bf16.mxu0 0
  %489 = vmatmul.mubr.bf16.gmra.mxu0 %v197
  %v490 = vpop.f32.mrf.mxu0
  %v491 = vadd.f32 0.0, %v490
  %v492 = vpop.f32.mrf.mxu0
  %v493 = vadd.f32 0.0, %v492
  %v494 = vpop.f32.mrf.mxu0
  %v495 = vpop.f32.mrf.mxu0
  %496 = vdwg.mxu0
  %497 = vmatprep.subr.bf16.mxu0 0
  %498 = vmatpush1.bf16.msra.mxu0 0
  %499 = vmatprep.subr.bf16.mxu0 0
  %500 = vmatpush1.bf16.msra.mxu0 0
  %501 = vmatprep.subr.bf16.mxu0 0
  %502 = vmatpush1.bf16.msra.mxu0 0
  %503 = vmatprep.subr.bf16.mxu0 0
  %504 = vmatpush1.bf16.msra.mxu0 0
  %505 = vmatprep.subr.bf16.mxu0 0
  %506 = vmatpush1.bf16.msra.mxu0 0
  %507 = vmatprep.subr.bf16.mxu0 0
  %508 = vmatpush1.bf16.msra.mxu0 0
  %509 = vmatprep.subr.bf16.mxu0 %v243
  %510 = vmatpush1.bf16.msra.mxu0 %v240
  %511 = vmatprep.subr.bf16.mxu0 %v160
  %512 = vmatpush1.bf16.msra.mxu0 %v159
  %513 = vmatprep.subr.bf16.mxu0 0
  %514 = vmatpush2.bf16.msra.mxu0 0
  %515 = vmatprep.subr.bf16.mxu0 0
  %516 = vmatpush2.bf16.msra.mxu0 0
  %517 = vmatprep.subr.bf16.mxu0 0
  %518 = vmatpush2.bf16.msra.mxu0 0
  %519 = vmatprep.subr.bf16.mxu0 0
  %520 = vmatpush2.bf16.msra.mxu0 0
  %521 = vmatprep.subr.bf16.mxu0 0
  %522 = vmatpush2.bf16.msra.mxu0 0
  %523 = vmatprep.subr.bf16.mxu0 0
  %524 = vmatpush2.bf16.msra.mxu0 0
  %525 = vmatprep.subr.bf16.mxu0 0
  %526 = vmatpush2.bf16.msra.mxu0 0
  %527 = vmatprep.subr.bf16.mxu0 0
  %528 = vmatpush2.bf16.msra.mxu0 0
  %529 = vmatprep.mubr.bf16.mxu0 0
  %530 = vmatmul.mubr.bf16.gmra.mxu0 %v197
  %v531 = vpop.f32.mrf.mxu0
  %v532 = vadd.f32 0.0, %v531
  %v533 = vpop.f32.mrf.mxu0
  %v534 = vadd.f32 0.0, %v533
  %v535 = vpop.f32.mrf.mxu0
  %v536 = vpop.f32.mrf.mxu0
  %537 = vdwg.mxu0
  %538 = vmatprep.subr.bf16.mxu0 0
  %539 = vmatpush1.bf16.msra.mxu0 0
  %540 = vmatprep.subr.bf16.mxu0 0
  %541 = vmatpush1.bf16.msra.mxu0 0
  %542 = vmatprep.subr.bf16.mxu0 0
  %543 = vmatpush1.bf16.msra.mxu0 0
  %544 = vmatprep.subr.bf16.mxu0 0
  %545 = vmatpush1.bf16.msra.mxu0 0
  %546 = vmatprep.subr.bf16.mxu0 0
  %547 = vmatpush1.bf16.msra.mxu0 0
  %548 = vmatprep.subr.bf16.mxu0 0
  %549 = vmatpush1.bf16.msra.mxu0 0
  %550 = vmatprep.subr.bf16.mxu0 %v249
  %551 = vmatpush1.bf16.msra.mxu0 %v246
  %552 = vmatprep.subr.bf16.mxu0 %v162
  %553 = vmatpush1.bf16.msra.mxu0 %v161
  %554 = vmatprep.subr.bf16.mxu0 0
  %555 = vmatpush2.bf16.msra.mxu0 0
  %556 = vmatprep.subr.bf16.mxu0 0
  %557 = vmatpush2.bf16.msra.mxu0 0
  %558 = vmatprep.subr.bf16.mxu0 0
  %559 = vmatpush2.bf16.msra.mxu0 0
  %560 = vmatprep.subr.bf16.mxu0 0
  %561 = vmatpush2.bf16.msra.mxu0 0
  %562 = vmatprep.subr.bf16.mxu0 0
  %563 = vmatpush2.bf16.msra.mxu0 0
  %564 = vmatprep.subr.bf16.mxu0 0
  %565 = vmatpush2.bf16.msra.mxu0 0
  %566 = vmatprep.subr.bf16.mxu0 0
  %567 = vmatpush2.bf16.msra.mxu0 0
  %568 = vmatprep.subr.bf16.mxu0 0
  %569 = vmatpush2.bf16.msra.mxu0 0
  %570 = vmatprep.mubr.bf16.mxu0 0
  %571 = vmatmul.mubr.bf16.gmra.mxu0 %v197
  %v572 = vpop.f32.mrf.mxu0
  %v573 = vadd.f32 0.0, %v572
  %v574 = vpop.f32.mrf.mxu0
  %v575 = vadd.f32 0.0, %v574
  %v576 = vpop.f32.mrf.mxu0
  %v577 = vpop.f32.mrf.mxu0
  %578 = vdwg.mxu0
  %v579 = vadd.f32 %v286, %v288
  %v580 = vadd.f32 %v579, %v327
  %v581 = vadd.f32 %v580, %v329
  %v582 = vadd.f32 %v581, %v368
  %v583 = vadd.f32 %v582, %v370
  %v584 = vadd.f32 %v583, %v409
  %v585 = vadd.f32 %v584, %v411
  %v586 = vadd.f32 %v585, %v450
  %v587 = vadd.f32 %v586, %v452
  %v588 = vadd.f32 %v587, %v491
  %v589 = vadd.f32 %v588, %v493
  %v590 = vadd.f32 %v589, %v532
  %v591 = vadd.f32 %v590, %v534
  %v592 = vadd.f32 %v591, %v573
  %v593 = vadd.f32 %v592, %v575
  %594 = vadd.xlane.f32.xlu0 %v593
  %v595 = vpop.xlane.xlu0 %594
  %v596 = vmul.f32 %v595, 0.00048828125
  %v597 = vmul.f32 %v286, %v286
  %v598 = vmul.f32 %v288, %v288
  %v599 = vmul.f32 %v327, %v327
  %v600 = vmul.f32 %v329, %v329
  %v601 = vmul.f32 %v368, %v368
  %v602 = vmul.f32 %v370, %v370
  %v603 = vmul.f32 %v409, %v409
  %v604 = vmul.f32 %v411, %v411
  %v605 = vmul.f32 %v450, %v450
  %v606 = vmul.f32 %v452, %v452
  %v607 = vmul.f32 %v491, %v491
  %v608 = vmul.f32 %v493, %v493
  %v609 = vmul.f32 %v532, %v532
  %v610 = vmul.f32 %v534, %v534
  %v611 = vmul.f32 %v573, %v573
  %v612 = vmul.f32 %v575, %v575
  %v613 = vadd.f32 %v597, %v598
  %v614 = vadd.f32 %v613, %v599
  %v615 = vadd.f32 %v614, %v600
  %v616 = vadd.f32 %v615, %v601
  %v617 = vadd.f32 %v616, %v602
  %v618 = vadd.f32 %v617, %v603
  %v619 = vadd.f32 %v618, %v604
  %v620 = vadd.f32 %v619, %v605
  %v621 = vadd.f32 %v620, %v606
  %v622 = vadd.f32 %v621, %v607
  %v623 = vadd.f32 %v622, %v608
  %v624 = vadd.f32 %v623, %v609
  %v625 = vadd.f32 %v624, %v610
  %v626 = vadd.f32 %v625, %v611
  %v627 = vadd.f32 %v626, %v612
  %628 = vadd.xlane.f32.xlu0 %v627
  %v629 = vpop.xlane.xlu0 %628
  %v630 = vmul.f32 %v629, 0.00048828125
  %v631 = vmul.f32 %v596, %v596
  %v632 = vsub.f32 %v630, %v631
  %v633 = vadd.f32 %v632, 1e-05
  %v634 = vrsqrt.pop %v633
  %v635 = vld [vmem:[%s2] sm:$0xff]
  %v636 = vmul.f32 %v635, %v634
  %v637 = vld [vmem:[%s3] sm:$0xff]
  %v638 = vmul.f32 %v596, %v636
  %v639 = vsub.f32 %v637, %v638
  %641 = vset.pattern.permute.xlu0 0
  %642 = vperm.xlu0 %641, %v636
  %v643 = vpop.permute.xlu0 %642
  %v645 = vmul.f32 %v286, %v643
  %v646 = vmul.f32 %v288, %v643
  %v647 = vmul.f32 %v327, %v643
  %v648 = vmul.f32 %v329, %v643
  %v649 = vmul.f32 %v368, %v643
  %v650 = vmul.f32 %v370, %v643
  %v651 = vmul.f32 %v409, %v643
  %v652 = vmul.f32 %v411, %v643
  %v653 = vmul.f32 %v450, %v643
  %v654 = vmul.f32 %v452, %v643
  %v655 = vmul.f32 %v491, %v643
  %v656 = vmul.f32 %v493, %v643
  %v657 = vmul.f32 %v532, %v643
  %v658 = vmul.f32 %v534, %v643
  %v659 = vmul.f32 %v573, %v643
  %v660 = vmul.f32 %v575, %v643
  %662 = vset.pattern.permute.xlu0 0
  %663 = vperm.xlu0 %662, %v639
  %v664 = vpop.permute.xlu0 %663
  %v666 = vadd.f32 %v645, %v664
  %v667 = vadd.f32 %v646, %v664
  %v668 = vadd.f32 %v647, %v664
  %v669 = vadd.f32 %v648, %v664
  %v670 = vadd.f32 %v649, %v664
  %v671 = vadd.f32 %v650, %v664
  %v672 = vadd.f32 %v651, %v664
  %v673 = vadd.f32 %v652, %v664
  %v674 = vadd.f32 %v653, %v664
  %v675 = vadd.f32 %v654, %v664
  %v676 = vadd.f32 %v655, %v664
  %v677 = vadd.f32 %v656, %v664
  %v678 = vadd.f32 %v657, %v664
  %v679 = vadd.f32 %v658, %v664
  %v680 = vadd.f32 %v659, %v664
  %v681 = vadd.f32 %v660, %v664
  %v682 = vmax.f32 %v666, 0.0
  %v683 = vmax.f32 %v667, 0.0
  %v684 = vmax.f32 %v668, 0.0
  %v685 = vmax.f32 %v669, 0.0
  %v686 = vmax.f32 %v670, 0.0
  %v687 = vmax.f32 %v671, 0.0
  %v688 = vmax.f32 %v672, 0.0
  %v689 = vmax.f32 %v673, 0.0
  %v690 = vmax.f32 %v674, 0.0
  %v691 = vmax.f32 %v675, 0.0
  %v692 = vmax.f32 %v676, 0.0
  %v693 = vmax.f32 %v677, 0.0
  %v694 = vmax.f32 %v678, 0.0
  %v695 = vmax.f32 %v679, 0.0
  %v696 = vmax.f32 %v680, 0.0
  %v697 = vmax.f32 %v681, 0.0
  %v698 = vmax.f32 %v682, %v686
  %v699 = vmax.f32 %v683, %v687
  %v700 = vmax.f32 %v684, %v688
  %v701 = vmax.f32 %v685, %v689
  %v702 = vmax.f32 %v690, %v694
  %v703 = vmax.f32 %v691, %v695
  %v704 = vmax.f32 %v692, %v696
  %v705 = vmax.f32 %v693, %v697
  %v706 = vmax.f32 %v698, %v702
  %v707 = vmax.f32 %v699, %v703
  %v708 = vmax.f32 %v700, %v704
  %v709 = vmax.f32 %v701, %v705
  %710 = vst [vmem:[%s4] sm:$0xff] %v706
  %711 = vst [vmem:[%s4 + $0x8] sm:$0xff] %v707
  %712 = vst [vmem:[%s4 + $0x10] sm:$0xff] %v708
  %713 = vst [vmem:[%s4 + $0x18] sm:$0xff] %v709
  // Predicated region
  $region18: #{probenet_s.3} parent=0 // pred_check
    _
  $region19: #{probenet_s.3} parent=0 // pred_check_branch
    %715 = sbr.rel (0) target = $region21
  $region20: #{probenet_s.3} parent=0 // pred_region
    _
  $region21: #{probenet_s.3} parent=0 // pred_fallthru
    _
  // Predicated region
  $region22: #{probenet_s.3} parent=0 // pred_check
    _
  $region23: #{probenet_s.3} parent=0 // pred_check_branch
    %717 = sbr.rel (0) target = $region25
  $region24: #{probenet_s.3} parent=0 // pred_region
    _
  $region25: #{probenet_s.3} parent=0 // pred_fallthru
    _

// kernel: probenet_s.4
$region0: #{probenet_s.4}
  #allocation0 [shape = 'u32[]', space=smem, size = 0x4, offset = 0x4, fixed_abs, tag = 'smem constant byte address 0x4 - core index']
  #allocation1 [shape = 'u32[144,128]{1,0:T(1,128)}', space=vmem, size = 0x12000, scoped, tag = 'internal scratch']
  %s0 = inlined_call_operand.vmem [shape: bf16[72,512], index: 0, kind: input, shape index: {}]
  %s1 = inlined_call_operand.vmem [shape: bf16[16,72], index: 1, kind: input, shape index: {}]
  %s2 = inlined_call_operand.vmem [shape: f32[16,1], index: 2, kind: input, shape index: {}]
  %s3 = inlined_call_operand.vmem [shape: f32[16,1], index: 3, kind: input, shape index: {}]
  %s4 = inlined_call_operand.vmem [shape: f32[16,128], index: 4, kind: output, shape index: {}]
  %s5 = sld [smem:[#allocation0]]
  $region26: #{probenet_s.4} parent=0
    _
  %s7 = ssub.s32 1, %s5
  %s8 = scalar_select 0, %s7, %s5
  // Predicated region
  $region2: #{probenet_s.4} parent=0 // pred_check
    _
  $region3: #{probenet_s.4} parent=0 // pred_check_branch
    %10 = sbr.rel (0) target = $region5
  $region4: #{probenet_s.4} parent=0 // pred_region
    _
  $region5: #{probenet_s.4} parent=0 // pred_fallthru
    _
  // Predicated region
  $region6: #{probenet_s.4} parent=0 // pred_check
    _
  $region7: #{probenet_s.4} parent=0 // pred_check_branch
    %12 = sbr.rel (0) target = $region9
  $region8: #{probenet_s.4} parent=0 // pred_region
    _
  $region9: #{probenet_s.4} parent=0 // pred_fallthru
    _
  // Predicated region
  $region10: #{probenet_s.4} parent=0 // pred_check
    _
  $region11: #{probenet_s.4} parent=0 // pred_check_branch
    %14 = sbr.rel (0) target = $region13
  $region12: #{probenet_s.4} parent=0 // pred_region
    _
  $region13: #{probenet_s.4} parent=0 // pred_fallthru
    _
  // Predicated region
  $region14: #{probenet_s.4} parent=0 // pred_check
    _
  $region15: #{probenet_s.4} parent=0 // pred_check_branch
    %16 = sbr.rel (0) target = $region17
  $region16: #{probenet_s.4} parent=0 // pred_region
    _
  $region17: #{probenet_s.4} parent=0 // pred_fallthru
    _
  %v18 = vld [vmem:[%s1] sm:$0xf]
  %v19 = vld [vmem:[%s1 + $0x4] sm:$0xf]
  %v20 = vld [vmem:[%s0] sm:$0xff]
  %v21 = vld [vmem:[%s0 + $0x8] sm:$0xff]
  %v22 = vld [vmem:[%s0 + $0x10] sm:$0xff]
  %v23 = vld [vmem:[%s0 + $0x18] sm:$0xff]
  %v24 = vld [vmem:[%s0 + $0x20] sm:$0xff]
  %v25 = vld [vmem:[%s0 + $0x28] sm:$0xff]
  %v26 = vld [vmem:[%s0 + $0x30] sm:$0xff]
  %v27 = vld [vmem:[%s0 + $0x38] sm:$0xff]
  %v28 = vld [vmem:[%s0 + $0x40] sm:$0xff]
  %v29 = vld [vmem:[%s0 + $0x48] sm:$0xff]
  %v30 = vld [vmem:[%s0 + $0x50] sm:$0xff]
  %v31 = vld [vmem:[%s0 + $0x58] sm:$0xff]
  %v32 = vld [vmem:[%s0 + $0x60] sm:$0xff]
  %v33 = vld [vmem:[%s0 + $0x68] sm:$0xff]
  %v34 = vld [vmem:[%s0 + $0x70] sm:$0xff]
  %v35 = vld [vmem:[%s0 + $0x78] sm:$0xff]
  %v36 = vld [vmem:[%s0 + $0x80] sm:$0xff]
  %v37 = vld [vmem:[%s0 + $0x88] sm:$0xff]
  %v40 = vunpack.c.l.b16 %v18
  %v41 = vunpack.c.l.b16 %v19
  %v42 = vpack.c.b16 %v41, %v40
  %v61 = vunpack.c.l.b16 %v20
  %v62 = vunpack.c.h.b16 %v20
  %v63 = vunpack.c.l.b16 %v21
  %v64 = vunpack.c.h.b16 %v21
  %v65 = vunpack.c.l.b16 %v22
  %v66 = vunpack.c.h.b16 %v22
  %v67 = vunpack.c.l.b16 %v23
  %v68 = vunpack.c.h.b16 %v23
  %v69 = vunpack.c.l.b16 %v24
  %v70 = vunpack.c.h.b16 %v24
  %v71 = vunpack.c.l.b16 %v25
  %v72 = vunpack.c.h.b16 %v25
  %v73 = vunpack.c.l.b16 %v26
  %v74 = vunpack.c.h.b16 %v26
  %v75 = vunpack.c.l.b16 %v27
  %v76 = vunpack.c.h.b16 %v27
  %v77 = vunpack.c.l.b16 %v28
  %v78 = vunpack.c.h.b16 %v28
  %v79 = vunpack.c.l.b16 %v29
  %v80 = vunpack.c.h.b16 %v29
  %v81 = vunpack.c.l.b16 %v30
  %v82 = vunpack.c.h.b16 %v30
  %v83 = vunpack.c.l.b16 %v31
  %v84 = vunpack.c.h.b16 %v31
  %v85 = vunpack.c.l.b16 %v32
  %v86 = vunpack.c.h.b16 %v32
  %v87 = vunpack.c.l.b16 %v33
  %v88 = vunpack.c.h.b16 %v33
  %v89 = vunpack.c.l.b16 %v34
  %v90 = vunpack.c.h.b16 %v34
  %v91 = vunpack.c.l.b16 %v35
  %v92 = vunpack.c.h.b16 %v35
  %v93 = vunpack.c.l.b16 %v36
  %v94 = vunpack.c.h.b16 %v36
  %v95 = vunpack.c.l.b16 %v37
  %v96 = vunpack.c.h.b16 %v37
  %v97 = vpack.c.b16 %v65, %v61
  %v98 = vpack.c.b16 %v66, %v62
  %v99 = vpack.c.b16 %v67, %v63
  %v100 = vpack.c.b16 %v68, %v64
  %v101 = vpack.c.b16 %v73, %v69
  %v102 = vpack.c.b16 %v74, %v70
  %v103 = vpack.c.b16 %v75, %v71
  %v104 = vpack.c.b16 %v76, %v72
  %v105 = vpack.c.b16 %v81, %v77
  %v106 = vpack.c.b16 %v82, %v78
  %v107 = vpack.c.b16 %v83, %v79
  %v108 = vpack.c.b16 %v84, %v80
  %v109 = vpack.c.b16 %v89, %v85
  %v110 = vpack.c.b16 %v90, %v86
  %v111 = vpack.c.b16 %v91, %v87
  %v112 = vpack.c.b16 %v92, %v88
  %v113 = vpack.c.b16 %v93, %v93
  %v114 = vpack.c.b16 %v94, %v94
  %v115 = vpack.c.b16 %v95, %v95
  %v116 = vpack.c.b16 %v96, %v96
  %vm133 = vcmask 588800
  %v135 = vsel %vm133, %v42, 0
  %vm137 = vcmask 1043456
  %v139 = vsel %vm137, %v113, 0
  %v142 = vsel %vm137, %v114, 0
  %v145 = vsel %vm137, %v115, 0
  %v148 = vsel %vm137, %v116, 0
  %150 = vmatprep.subr.bf16.mxu0 0
  %151 = vmatpush1.bf16.msra.mxu0 0
  %152 = vmatprep.subr.bf16.mxu0 0
  %153 = vmatpush1.bf16.msra.mxu0 0
  %154 = vmatprep.subr.bf16.mxu0 0
  %155 = vmatpush1.bf16.msra.mxu0 0
  %156 = vmatprep.subr.bf16.mxu0 %v142
  %157 = vmatpush1.bf16.msra.mxu0 %v139
  %158 = vmatprep.subr.bf16.mxu0 %v110
  %159 = vmatpush1.bf16.msra.mxu0 %v109
  %160 = vmatprep.subr.bf16.mxu0 %v106
  %161 = vmatpush1.bf16.msra.mxu0 %v105
  %162 = vmatprep.subr.bf16.mxu0 %v102
  %163 = vmatpush1.bf16.msra.mxu0 %v101
  %164 = vmatprep.subr.bf16.mxu0 %v98
  %165 = vmatpush1.bf16.msra.mxu0 %v97
  %166 = vmatprep.subr.bf16.mxu0 0
  %167 = vmatpush2.bf16.msra.mxu0 0
  %168 = vmatprep.subr.bf16.mxu0 0
  %169 = vmatpush2.bf16.msra.mxu0 0
  %170 = vmatprep.subr.bf16.mxu0 0
  %171 = vmatpush2.bf16.msra.mxu0 0
  %172 = vmatprep.subr.bf16.mxu0 0
  %173 = vmatpush2.bf16.msra.mxu0 0
  %174 = vmatprep.subr.bf16.mxu0 0
  %175 = vmatpush2.bf16.msra.mxu0 0
  %176 = vmatprep.subr.bf16.mxu0 0
  %177 = vmatpush2.bf16.msra.mxu0 0
  %178 = vmatprep.subr.bf16.mxu0 0
  %179 = vmatpush2.bf16.msra.mxu0 0
  %180 = vmatprep.subr.bf16.mxu0 0
  %181 = vmatpush2.bf16.msra.mxu0 0
  %182 = vmatprep.mubr.bf16.mxu0 0
  %183 = vmatmul.mubr.bf16.gmra.mxu0 %v135
  %v184 = vpop.f32.mrf.mxu0
  %v185 = vadd.f32 0.0, %v184
  %v186 = vpop.f32.mrf.mxu0
  %v187 = vadd.f32 0.0, %v186
  %v188 = vpop.f32.mrf.mxu0
  %v189 = vadd.f32 0.0, %v188
  %v190 = vpop.f32.mrf.mxu0
  %v191 = vadd.f32 0.0, %v190
  %192 = vdwg.mxu0
  %193 = vmatprep.subr.bf16.mxu0 0
  %194 = vmatpush1.bf16.msra.mxu0 0
  %195 = vmatprep.subr.bf16.mxu0 0
  %196 = vmatpush1.bf16.msra.mxu0 0
  %197 = vmatprep.subr.bf16.mxu0 0
  %198 = vmatpush1.bf16.msra.mxu0 0
  %199 = vmatprep.subr.bf16.mxu0 %v148
  %200 = vmatpush1.bf16.msra.mxu0 %v145
  %201 = vmatprep.subr.bf16.mxu0 %v112
  %202 = vmatpush1.bf16.msra.mxu0 %v111
  %203 = vmatprep.subr.bf16.mxu0 %v108
  %204 = vmatpush1.bf16.msra.mxu0 %v107
  %205 = vmatprep.subr.bf16.mxu0 %v104
  %206 = vmatpush1.bf16.msra.mxu0 %v103
  %207 = vmatprep.subr.bf16.mxu0 %v100
  %208 = vmatpush1.bf16.msra.mxu0 %v99
  %209 = vmatprep.subr.bf16.mxu0 0
  %210 = vmatpush2.bf16.msra.mxu0 0
  %211 = vmatprep.subr.bf16.mxu0 0
  %212 = vmatpush2.bf16.msra.mxu0 0
  %213 = vmatprep.subr.bf16.mxu0 0
  %214 = vmatpush2.bf16.msra.mxu0 0
  %215 = vmatprep.subr.bf16.mxu0 0
  %216 = vmatpush2.bf16.msra.mxu0 0
  %217 = vmatprep.subr.bf16.mxu0 0
  %218 = vmatpush2.bf16.msra.mxu0 0
  %219 = vmatprep.subr.bf16.mxu0 0
  %220 = vmatpush2.bf16.msra.mxu0 0
  %221 = vmatprep.subr.bf16.mxu0 0
  %222 = vmatpush2.bf16.msra.mxu0 0
  %223 = vmatprep.subr.bf16.mxu0 0
  %224 = vmatpush2.bf16.msra.mxu0 0
  %225 = vmatprep.mubr.bf16.mxu0 0
  %226 = vmatmul.mubr.bf16.gmra.mxu0 %v135
  %v227 = vpop.f32.mrf.mxu0
  %v228 = vadd.f32 0.0, %v227
  %v229 = vpop.f32.mrf.mxu0
  %v230 = vadd.f32 0.0, %v229
  %v231 = vpop.f32.mrf.mxu0
  %v232 = vadd.f32 0.0, %v231
  %v233 = vpop.f32.mrf.mxu0
  %v234 = vadd.f32 0.0, %v233
  %235 = vdwg.mxu0
  %v236 = vadd.f32 %v185, %v187
  %v237 = vadd.f32 %v236, %v228
  %v238 = vadd.f32 %v237, %v230
  %239 = vadd.xlane.f32.xlu0 %v238
  %v240 = vpop.xlane.xlu0 %239
  %v241 = vadd.f32 %v189, %v191
  %v242 = vadd.f32 %v241, %v232
  %v243 = vadd.f32 %v242, %v234
  %244 = vadd.xlane.f32.xlu0 %v243
  %v245 = vpop.xlane.xlu0 %244
  %v246 = vmul.f32 %v240, 0.001953125
  %v247 = vmul.f32 %v245, 0.001953125
  %v248 = vmul.f32 %v185, %v185
  %v249 = vmul.f32 %v187, %v187
  %v250 = vmul.f32 %v228, %v228
  %v251 = vmul.f32 %v230, %v230
  %v252 = vmul.f32 %v189, %v189
  %v253 = vmul.f32 %v191, %v191
  %v254 = vmul.f32 %v232, %v232
  %v255 = vmul.f32 %v234, %v234
  %v256 = vadd.f32 %v248, %v249
  %v257 = vadd.f32 %v256, %v250
  %v258 = vadd.f32 %v257, %v251
  %259 = vadd.xlane.f32.xlu0 %v258
  %v260 = vpop.xlane.xlu0 %259
  %v261 = vadd.f32 %v252, %v253
  %v262 = vadd.f32 %v261, %v254
  %v263 = vadd.f32 %v262, %v255
  %264 = vadd.xlane.f32.xlu0 %v263
  %v265 = vpop.xlane.xlu0 %264
  %v266 = vmul.f32 %v260, 0.001953125
  %v267 = vmul.f32 %v265, 0.001953125
  %v268 = vmul.f32 %v246, %v246
  %v269 = vmul.f32 %v247, %v247
  %v270 = vsub.f32 %v266, %v268
  %v271 = vsub.f32 %v267, %v269
  %v272 = vadd.f32 %v270, 1e-05
  %v273 = vadd.f32 %v271, 1e-05
  %v274 = vrsqrt.pop %v272
  %v275 = vrsqrt.pop %v273
  %v276 = vld [vmem:[%s2] sm:$0xff]
  %v277 = vld [vmem:[%s2 + $0x8] sm:$0xff]
  %v278 = vmul.f32 %v276, %v274
  %v279 = vmul.f32 %v277, %v275
  %v280 = vld [vmem:[%s3] sm:$0xff]
  %v281 = vld [vmem:[%s3 + $0x8] sm:$0xff]
  %v282 = vmul.f32 %v246, %v278
  %v283 = vmul.f32 %v247, %v279
  %v284 = vsub.f32 %v280, %v282
  %v285 = vsub.f32 %v281, %v283
  %287 = vset.pattern.permute.xlu0 0
  %288 = vperm.xlu0 %287, %v278
  %v289 = vpop.permute.xlu0 %288
  %292 = vset.pattern.permute.xlu0 0
  %293 = vperm.xlu0 %292, %v279
  %v294 = vpop.permute.xlu0 %293
  %v296 = vmul.f32 %v185, %v289
  %v297 = vmul.f32 %v187, %v289
  %v298 = vmul.f32 %v228, %v289
  %v299 = vmul.f32 %v230, %v289
  %v300 = vmul.f32 %v189, %v294
  %v301 = vmul.f32 %v191, %v294
  %v302 = vmul.f32 %v232, %v294
  %v303 = vmul.f32 %v234, %v294
  %305 = vset.pattern.permute.xlu0 0
  %306 = vperm.xlu0 %305, %v284
  %v307 = vpop.permute.xlu0 %306
  %310 = vset.pattern.permute.xlu0 0
  %311 = vperm.xlu0 %310, %v285
  %v312 = vpop.permute.xlu0 %311
  %v314 = vadd.f32 %v296, %v307
  %v315 = vadd.f32 %v297, %v307
  %v316 = vadd.f32 %v298, %v307
  %v317 = vadd.f32 %v299, %v307
  %v318 = vadd.f32 %v300, %v312
  %v319 = vadd.f32 %v301, %v312
  %v320 = vadd.f32 %v302, %v312
  %v321 = vadd.f32 %v303, %v312
  %v322 = vmax.f32 %v314, 0.0
  %v323 = vmax.f32 %v315, 0.0
  %v324 = vmax.f32 %v316, 0.0
  %v325 = vmax.f32 %v317, 0.0
  %v326 = vmax.f32 %v318, 0.0
  %v327 = vmax.f32 %v319, 0.0
  %v328 = vmax.f32 %v320, 0.0
  %v329 = vmax.f32 %v321, 0.0
  %v330 = vmax.f32 %v322, %v323
  %v331 = vmax.f32 %v326, %v327
  %v332 = vmax.f32 %v324, %v325
  %v333 = vmax.f32 %v328, %v329
  %v334 = vmax.f32 %v330, %v332
  %v335 = vmax.f32 %v331, %v333
  %336 = vst [vmem:[%s4] sm:$0xff] %v334
  %337 = vst [vmem:[%s4 + $0x8] sm:$0xff] %v335
  // Predicated region
  $region18: #{probenet_s.4} parent=0 // pred_check
    _
  $region19: #{probenet_s.4} parent=0 // pred_check_branch
    %339 = sbr.rel (0) target = $region21
  $region20: #{probenet_s.4} parent=0 // pred_region
    _
  $region21: #{probenet_s.4} parent=0 // pred_fallthru
    _
  // Predicated region
  $region22: #{probenet_s.4} parent=0 // pred_check
    _
  $region23: #{probenet_s.4} parent=0 // pred_check_branch
    %341 = sbr.rel (0) target = $region25
  $region24: #{probenet_s.4} parent=0 // pred_region
    _
  $region25: #{probenet_s.4} parent=0 // pred_fallthru
    _

// kernel: probenet_s.5
$region0: #{probenet_s.5}
  #allocation0 [shape = 'u32[]', space=smem, size = 0x4, offset = 0x4, fixed_abs, tag = 'smem constant byte address 0x4 - core index']
  #allocation1 [shape = 'u32[144,128]{1,0:T(1,128)}', space=vmem, size = 0x12000, scoped, tag = 'internal scratch']
  %s0 = inlined_call_operand.vmem [shape: bf16[128,144], index: 0, kind: input, shape index: {}]
  %s1 = inlined_call_operand.vmem [shape: bf16[144,32], index: 1, kind: input, shape index: {}]
  %s2 = inlined_call_operand.vmem [shape: f32[1,32], index: 2, kind: input, shape index: {}]
  %s3 = inlined_call_operand.vmem [shape: f32[1,32], index: 3, kind: input, shape index: {}]
  %s4 = inlined_call_operand.vmem [shape: f32[16,32,128], index: 4, kind: input, shape index: {}]
  %s5 = inlined_call_operand.vmem [shape: f32[1,128], index: 5, kind: input, shape index: {}]
  %s6 = inlined_call_operand.hbm [shape: f32[2,128], index: 6, kind: output, shape index: {}]
  %s7 = sld [smem:[#allocation0]]
  $region34: #{probenet_s.5} parent=0
    _
  %s9 = ssub.s32 1, %s7
  %s10 = scalar_select 0, %s9, %s7
  $region1: #{probenet_s.5} parent=0
    #allocation2 [shape = 'u8[1024]{0}', space=vmem, size = 0x400, scoped, tag = 'output window, operand 0, single buffered']
    #allocation3 [shape = 's32[1]{0}', space=sflag, size = 0x4, scoped, tag = 'scoped memory for probenet_s.5']
    %11 = vsyncpa [#allocation3], 0
    // Predicated region
    $region2: #{probenet_s.5} parent=1 // pred_check
      _
    $region3: #{probenet_s.5} parent=1 // pred_check_branch
      %13 = sbr.rel (0) target = $region5
    $region4: #{probenet_s.5} parent=1 // pred_region
      _
    $region5: #{probenet_s.5} parent=1 // pred_fallthru
      _
    // Predicated region
    $region6: #{probenet_s.5} parent=1 // pred_check
      _
    $region7: #{probenet_s.5} parent=1 // pred_check_branch
      %15 = sbr.rel (0) target = $region9
    $region8: #{probenet_s.5} parent=1 // pred_region
      _
    $region9: #{probenet_s.5} parent=1 // pred_fallthru
      _
    // Predicated region
    $region10: #{probenet_s.5} parent=1 // pred_check
      _
    $region11: #{probenet_s.5} parent=1 // pred_check_branch
      %17 = sbr.rel (0) target = $region13
    $region12: #{probenet_s.5} parent=1 // pred_region
      _
    $region13: #{probenet_s.5} parent=1 // pred_fallthru
      _
    // Predicated region
    $region14: #{probenet_s.5} parent=1 // pred_check
      _
    $region15: #{probenet_s.5} parent=1 // pred_check_branch
      %19 = sbr.rel (0) target = $region17
    $region16: #{probenet_s.5} parent=1 // pred_region
      _
    $region17: #{probenet_s.5} parent=1 // pred_fallthru
      _
    // Predicated region
    $region18: #{probenet_s.5} parent=1 // pred_check
      _
    $region19: #{probenet_s.5} parent=1 // pred_check_branch
      %21 = sbr.rel (0) target = $region21
    $region20: #{probenet_s.5} parent=1 // pred_region
      _
    $region21: #{probenet_s.5} parent=1 // pred_fallthru
      _
    // Predicated region
    $region22: #{probenet_s.5} parent=1 // pred_check
      _
    $region23: #{probenet_s.5} parent=1 // pred_check_branch
      %23 = sbr.rel (0) target = $region25
    $region24: #{probenet_s.5} parent=1 // pred_region
      _
    $region25: #{probenet_s.5} parent=1 // pred_fallthru
      _
    %v25 = vld [vmem:[%s0] sm:$0xff]
    %v26 = vld [vmem:[%s0 + $0x8] sm:$0xff]
    %v27 = vld [vmem:[%s0 + $0x10] sm:$0xff]
    %v28 = vld [vmem:[%s0 + $0x18] sm:$0xff]
    %v29 = vld [vmem:[%s0 + $0x20] sm:$0xff]
    %v30 = vld [vmem:[%s0 + $0x28] sm:$0xff]
    %v31 = vld [vmem:[%s0 + $0x30] sm:$0xff]
    %v32 = vld [vmem:[%s0 + $0x38] sm:$0xff]
    %v33 = vld [vmem:[%s0 + $0x40] sm:$0xff]
    %v34 = vld [vmem:[%s0 + $0x48] sm:$0xff]
    %v35 = vld [vmem:[%s0 + $0x50] sm:$0xff]
    %v36 = vld [vmem:[%s0 + $0x58] sm:$0xff]
    %v37 = vld [vmem:[%s0 + $0x60] sm:$0xff]
    %v38 = vld [vmem:[%s0 + $0x68] sm:$0xff]
    %v39 = vld [vmem:[%s0 + $0x70] sm:$0xff]
    %v40 = vld [vmem:[%s0 + $0x78] sm:$0xff]
    %v41 = vld [vmem:[%s1] sm:$0xf]
    %v42 = vld [vmem:[%s1 + $0x4] sm:$0xf]
    %v43 = vld [vmem:[%s1 + $0x8] sm:$0xf]
    %v44 = vld [vmem:[%s1 + $0xc] sm:$0xf]
    %v45 = vld [vmem:[%s1 + $0x10] sm:$0xf]
    %v46 = vld [vmem:[%s1 + $0x14] sm:$0xf]
    %v47 = vld [vmem:[%s1 + $0x18] sm:$0xf]
    %v48 = vld [vmem:[%s1 + $0x1c] sm:$0xf]
    %v49 = vld [vmem:[%s1 + $0x20] sm:$0xf]
    %v50 = vld [vmem:[%s1 + $0x24] sm:$0xf]
    %v51 = vld [vmem:[%s1 + $0x28] sm:$0xf]
    %v52 = vld [vmem:[%s1 + $0x2c] sm:$0xf]
    %v53 = vld [vmem:[%s1 + $0x30] sm:$0xf]
    %v54 = vld [vmem:[%s1 + $0x34] sm:$0xf]
    %v55 = vld [vmem:[%s1 + $0x38] sm:$0xf]
    %v56 = vld [vmem:[%s1 + $0x3c] sm:$0xf]
    %v57 = vld [vmem:[%s1 + $0x40] sm:$0xf]
    %v58 = vld [vmem:[%s1 + $0x44] sm:$0xf]
    %v75 = vunpack.c.l.b16 %v25
    %v76 = vunpack.c.h.b16 %v25
    %v77 = vunpack.c.l.b16 %v26
    %v78 = vunpack.c.h.b16 %v26
    %v79 = vunpack.c.l.b16 %v27
    %v80 = vunpack.c.h.b16 %v27
    %v81 = vunpack.c.l.b16 %v28
    %v82 = vunpack.c.h.b16 %v28
    %v83 = vunpack.c.l.b16 %v29
    %v84 = vunpack.c.h.b16 %v29
    %v85 = vunpack.c.l.b16 %v30
    %v86 = vunpack.c.h.b16 %v30
    %v87 = vunpack.c.l.b16 %v31
    %v88 = vunpack.c.h.b16 %v31
    %v89 = vunpack.c.l.b16 %v32
    %v90 = vunpack.c.h.b16 %v32
    %v91 = vunpack.c.l.b16 %v33
    %v92 = vunpack.c.h.b16 %v33
    %v93 = vunpack.c.l.b16 %v34
    %v94 = vunpack.c.h.b16 %v34
    %v95 = vunpack.c.l.b16 %v35
    %v96 = vunpack.c.h.b16 %v35
    %v97 = vunpack.c.l.b16 %v36
    %v98 = vunpack.c.h.b16 %v36
    %v99 = vunpack.c.l.b16 %v37
    %v100 = vunpack.c.h.b16 %v37
    %v101 = vunpack.c.l.b16 %v38
    %v102 = vunpack.c.h.b16 %v38
    %v103 = vunpack.c.l.b16 %v39
    %v104 = vunpack.c.h.b16 %v39
    %v105 = vunpack.c.l.b16 %v40
    %v106 = vunpack.c.h.b16 %v40
    %v107 = vpack.c.b16 %v77, %v75
    %v108 = vpack.c.b16 %v78, %v76
    %v109 = vpack.c.b16 %v81, %v79
    %v110 = vpack.c.b16 %v82, %v80
    %v111 = vpack.c.b16 %v85, %v83
    %v112 = vpack.c.b16 %v86, %v84
    %v113 = vpack.c.b16 %v89, %v87
    %v114 = vpack.c.b16 %v90, %v88
    %v115 = vpack.c.b16 %v93, %v91
    %v116 = vpack.c.b16 %v94, %v92
    %v117 = vpack.c.b16 %v97, %v95
    %v118 = vpack.c.b16 %v98, %v96
    %v119 = vpack.c.b16 %v101, %v99
    %v120 = vpack.c.b16 %v102, %v100
    %v121 = vpack.c.b16 %v105, %v103
    %v122 = vpack.c.b16 %v106, %v104
    %v149 = vunpack.c.l.b16 %v41
    %v150 = vunpack.c.l.b16 %v42
    %v151 = vunpack.c.l.b16 %v43
    %v152 = vunpack.c.l.b16 %v44
    %v153 = vunpack.c.l.b16 %v45
    %v154 = vunpack.c.l.b16 %v46
    %v155 = vunpack.c.l.b16 %v47
    %v156 = vunpack.c.l.b16 %v48
    %v157 = vunpack.c.l.b16 %v49
    %v158 = vunpack.c.l.b16 %v50
    %v159 = vunpack.c.l.b16 %v51
    %v160 = vunpack.c.l.b16 %v52
    %v161 = vunpack.c.l.b16 %v53
    %v162 = vunpack.c.l.b16 %v54
    %v163 = vunpack.c.l.b16 %v55
    %v164 = vunpack.c.l.b16 %v56
    %v165 = vunpack.c.l.b16 %v57
    %v166 = vunpack.c.l.b16 %v58
    %v167 = vpack.c.b16 %v150, %v149
    %v168 = vpack.c.b16 %v152, %v151
    %v169 = vpack.c.b16 %v154, %v153
    %v170 = vpack.c.b16 %v156, %v155
    %v171 = vpack.c.b16 %v158, %v157
    %v172 = vpack.c.b16 %v160, %v159
    %v173 = vpack.c.b16 %v162, %v161
    %v174 = vpack.c.b16 %v164, %v163
    %v175 = vpack.c.b16 %v166, %v165
    %vm185 = vcmask 130048
    %v187 = vsel %vm185, %v108, 0
    %v190 = vsel %vm185, %v110, 0
    %v193 = vsel %vm185, %v112, 0
    %v196 = vsel %vm185, %v114, 0
    %v199 = vsel %vm185, %v116, 0
    %v202 = vsel %vm185, %v118, 0
    %v205 = vsel %vm185, %v120, 0
    %v208 = vsel %vm185, %v122, 0
    %210 = vmatprep.subr.bf16.mxu0 0
    %211 = vmatpush1.bf16.msra.mxu0 %v174
    %212 = vmatprep.subr.bf16.mxu0 0
    %213 = vmatpush1.bf16.msra.mxu0 %v173
    %214 = vmatprep.subr.bf16.mxu0 0
    %215 = vmatpush1.bf16.msra.mxu0 %v172
    %216 = vmatprep.subr.bf16.mxu0 0
    %217 = vmatpush1.bf16.msra.mxu0 %v171
    %218 = vmatprep.subr.bf16.mxu0 0
    %219 = vmatpush1.bf16.msra.mxu0 %v170
    %220 = vmatprep.subr.bf16.mxu0 0
    %221 = vmatpush1.bf16.msra.mxu0 %v169
    %222 = vmatprep.subr.bf16.mxu0 0
    %223 = vmatpush1.bf16.msra.mxu0 %v168
    %224 = vmatprep.subr.bf16.mxu0 0
    %225 = vmatpush1.bf16.msra.mxu0 %v167
    %226 = vmatprep.subr.bf16.mxu0 0
    %227 = vmatpush2.bf16.msra.mxu0 0
    %228 = vmatprep.subr.bf16.mxu0 0
    %229 = vmatpush2.bf16.msra.mxu0 0
    %230 = vmatprep.subr.bf16.mxu0 0
    %231 = vmatpush2.bf16.msra.mxu0 0
    %232 = vmatprep.subr.bf16.mxu0 0
    %233 = vmatpush2.bf16.msra.mxu0 0
    %234 = vmatprep.subr.bf16.mxu0 0
    %235 = vmatpush2.bf16.msra.mxu0 0
    %236 = vmatprep.subr.bf16.mxu0 0
    %237 = vmatpush2.bf16.msra.mxu0 0
    %238 = vmatprep.subr.bf16.mxu0 0
    %239 = vmatpush2.bf16.msra.mxu0 0
    %240 = vmatprep.subr.bf16.mxu0 0
    %241 = vmatpush2.bf16.msra.mxu0 %v175
    %242 = vmatprep.mubr.bf16.mxu0 %v187
    %243 = vmatmul.mubr.bf16.gmra.mxu0 %v107
    %v244 = vpop.f32.mrf.mxu0
    %v245 = vadd.f32 0.0, %v244
    %v246 = vpop.f32.mrf.mxu0
    %v247 = vpop.f32.mrf.mxu0
    %v248 = vadd.f32 0.0, %v247
    %v249 = vpop.f32.mrf.mxu0
    %250 = vmatprep.mubr.bf16.mxu0 %v190
    %251 = vmatmul.mubr.bf16.gmra.mxu0 %v109
    %v252 = vpop.f32.mrf.mxu0
    %v253 = vadd.f32 0.0, %v252
    %v254 = vpop.f32.mrf.mxu0
    %v255 = vpop.f32.mrf.mxu0
    %v256 = vadd.f32 0.0, %v255
    %v257 = vpop.f32.mrf.mxu0
    %258 = vmatprep.mubr.bf16.mxu0 %v193
    %259 = vmatmul.mubr.bf16.gmra.mxu0 %v111
    %v260 = vpop.f32.mrf.mxu0
    %v261 = vadd.f32 0.0, %v260
    %v262 = vpop.f32.mrf.mxu0
    %v263 = vpop.f32.mrf.mxu0
    %v264 = vadd.f32 0.0, %v263
    %v265 = vpop.f32.mrf.mxu0
    %266 = vmatprep.mubr.bf16.mxu0 %v196
    %267 = vmatmul.mubr.bf16.gmra.mxu0 %v113
    %v268 = vpop.f32.mrf.mxu0
    %v269 = vadd.f32 0.0, %v268
    %v270 = vpop.f32.mrf.mxu0
    %v271 = vpop.f32.mrf.mxu0
    %v272 = vadd.f32 0.0, %v271
    %v273 = vpop.f32.mrf.mxu0
    %274 = vmatprep.mubr.bf16.mxu0 %v199
    %275 = vmatmul.mubr.bf16.gmra.mxu0 %v115
    %v276 = vpop.f32.mrf.mxu0
    %v277 = vadd.f32 0.0, %v276
    %v278 = vpop.f32.mrf.mxu0
    %v279 = vpop.f32.mrf.mxu0
    %v280 = vadd.f32 0.0, %v279
    %v281 = vpop.f32.mrf.mxu0
    %282 = vmatprep.mubr.bf16.mxu0 %v202
    %283 = vmatmul.mubr.bf16.gmra.mxu0 %v117
    %v284 = vpop.f32.mrf.mxu0
    %v285 = vadd.f32 0.0, %v284
    %v286 = vpop.f32.mrf.mxu0
    %v287 = vpop.f32.mrf.mxu0
    %v288 = vadd.f32 0.0, %v287
    %v289 = vpop.f32.mrf.mxu0
    %290 = vmatprep.mubr.bf16.mxu0 %v205
    %291 = vmatmul.mubr.bf16.gmra.mxu0 %v119
    %v292 = vpop.f32.mrf.mxu0
    %v293 = vadd.f32 0.0, %v292
    %v294 = vpop.f32.mrf.mxu0
    %v295 = vpop.f32.mrf.mxu0
    %v296 = vadd.f32 0.0, %v295
    %v297 = vpop.f32.mrf.mxu0
    %298 = vmatprep.mubr.bf16.mxu0 %v208
    %299 = vmatmul.mubr.bf16.gmra.mxu0 %v121
    %v300 = vpop.f32.mrf.mxu0
    %v301 = vadd.f32 0.0, %v300
    %v302 = vpop.f32.mrf.mxu0
    %v303 = vpop.f32.mrf.mxu0
    %v304 = vadd.f32 0.0, %v303
    %v305 = vpop.f32.mrf.mxu0
    %306 = vdwg.mxu0
    %vm307 = vcmask 261120
    %v308 = vsel %vm307, %v245, 0.0
    %v309 = vsel %vm307, %v248, 0.0
    %v310 = vadd.f32 %v308, %v309
    %v311 = vsel %vm307, %v253, 0.0
    %v312 = vadd.f32 %v310, %v311
    %v313 = vsel %vm307, %v256, 0.0
    %v314 = vadd.f32 %v312, %v313
    %v315 = vsel %vm307, %v261, 0.0
    %v316 = vadd.f32 %v314, %v315
    %v317 = vsel %vm307, %v264, 0.0
    %v318 = vadd.f32 %v316, %v317
    %v319 = vsel %vm307, %v269, 0.0
    %v320 = vadd.f32 %v318, %v319
    %v321 = vsel %vm307, %v272, 0.0
    %v322 = vadd.f32 %v320, %v321
    %v323 = vsel %vm307, %v277, 0.0
    %v324 = vadd.f32 %v322, %v323
    %v325 = vsel %vm307, %v280, 0.0
    %v326 = vadd.f32 %v324, %v325
    %v327 = vsel %vm307, %v285, 0.0
    %v328 = vadd.f32 %v326, %v327
    %v329 = vsel %vm307, %v288, 0.0
    %v330 = vadd.f32 %v328, %v329
    %v331 = vsel %vm307, %v293, 0.0
    %v332 = vadd.f32 %v330, %v331
    %v333 = vsel %vm307, %v296, 0.0
    %v334 = vadd.f32 %v332, %v333
    %v335 = vsel %vm307, %v301, 0.0
    %v336 = vadd.f32 %v334, %v335
    %v337 = vsel %vm307, %v304, 0.0
    %v338 = vadd.f32 %v336, %v337
    %v339 = vrot.slane %v338, 4
    %v340 = vadd.f32 %v338, %v339
    %v341 = vrot.slane %v340, 2
    %v342 = vadd.f32 %v340, %v341
    %v343 = vrot.slane %v342, 1
    %v344 = vadd.f32 %v342, %v343
    %v345 = vmul.f32 %v344, 0.0078125
    %v346 = vmul.f32 %v245, %v245
    %v347 = vmul.f32 %v248, %v248
    %v348 = vmul.f32 %v253, %v253
    %v349 = vmul.f32 %v256, %v256
    %v350 = vmul.f32 %v261, %v261
    %v351 = vmul.f32 %v264, %v264
    %v352 = vmul.f32 %v269, %v269
    %v353 = vmul.f32 %v272, %v272
    %v354 = vmul.f32 %v277, %v277
    %v355 = vmul.f32 %v280, %v280
    %v356 = vmul.f32 %v285, %v285
    %v357 = vmul.f32 %v288, %v288
    %v358 = vmul.f32 %v293, %v293
    %v359 = vmul.f32 %v296, %v296
    %v360 = vmul.f32 %v301, %v301
    %v361 = vmul.f32 %v304, %v304
    %v362 = vsel %vm307, %v346, 0.0
    %v363 = vsel %vm307, %v347, 0.0
    %v364 = vadd.f32 %v362, %v363
    %v365 = vsel %vm307, %v348, 0.0
    %v366 = vadd.f32 %v364, %v365
    %v367 = vsel %vm307, %v349, 0.0
    %v368 = vadd.f32 %v366, %v367
    %v369 = vsel %vm307, %v350, 0.0
    %v370 = vadd.f32 %v368, %v369
    %v371 = vsel %vm307, %v351, 0.0
    %v372 = vadd.f32 %v370, %v371
    %v373 = vsel %vm307, %v352, 0.0
    %v374 = vadd.f32 %v372, %v373
    %v375 = vsel %vm307, %v353, 0.0
    %v376 = vadd.f32 %v374, %v375
    %v377 = vsel %vm307, %v354, 0.0
    %v378 = vadd.f32 %v376, %v377
    %v379 = vsel %vm307, %v355, 0.0
    %v380 = vadd.f32 %v378, %v379
    %v381 = vsel %vm307, %v356, 0.0
    %v382 = vadd.f32 %v380, %v381
    %v383 = vsel %vm307, %v357, 0.0
    %v384 = vadd.f32 %v382, %v383
    %v385 = vsel %vm307, %v358, 0.0
    %v386 = vadd.f32 %v384, %v385
    %v387 = vsel %vm307, %v359, 0.0
    %v388 = vadd.f32 %v386, %v387
    %v389 = vsel %vm307, %v360, 0.0
    %v390 = vadd.f32 %v388, %v389
    %v391 = vsel %vm307, %v361, 0.0
    %v392 = vadd.f32 %v390, %v391
    %v393 = vrot.slane %v392, 4
    %v394 = vadd.f32 %v392, %v393
    %v395 = vrot.slane %v394, 2
    %v396 = vadd.f32 %v394, %v395
    %v397 = vrot.slane %v396, 1
    %v398 = vadd.f32 %v396, %v397
    %v399 = vmul.f32 %v398, 0.0078125
    %v400 = vmul.f32 %v345, %v345
    %v401 = vsub.f32 %v399, %v400
    %v402 = vadd.f32 %v401, 1e-05
    %v403 = vrsqrt.pop %v402
    %v404 = vld [vmem:[%s2] sm:$0x1]
    %v405 = vmul.f32 %v404, %v403
    %v406 = vld [vmem:[%s3] sm:$0x1]
    %v407 = vmul.f32 %v345, %v405
    %v408 = vsub.f32 %v406, %v407
    %v410 = vlaneseq
    %v411 = vshrl.u32 %v410, 7
    %v412 = vsub.s32 0, %v411
    %v413 = vrot.slane %v405, %v412
    %v415 = vmul.f32 %v245, %v413
    %v416 = vmul.f32 %v248, %v413
    %v417 = vmul.f32 %v253, %v413
    %v418 = vmul.f32 %v256, %v413
    %v419 = vmul.f32 %v261, %v413
    %v420 = vmul.f32 %v264, %v413
    %v421 = vmul.f32 %v269, %v413
    %v422 = vmul.f32 %v272, %v413
    %v423 = vmul.f32 %v277, %v413
    %v424 = vmul.f32 %v280, %v413
    %v425 = vmul.f32 %v285, %v413
    %v426 = vmul.f32 %v288, %v413
    %v427 = vmul.f32 %v293, %v413
    %v428 = vmul.f32 %v296, %v413
    %v429 = vmul.f32 %v301, %v413
    %v430 = vmul.f32 %v304, %v413
    %v432 = vlaneseq
    %v433 = vshrl.u32 %v432, 7
    %v434 = vsub.s32 0, %v433
    %v435 = vrot.slane %v408, %v434
    %v437 = vadd.f32 %v415, %v435
    %v438 = vadd.f32 %v416, %v435
    %v439 = vadd.f32 %v417, %v435
    %v440 = vadd.f32 %v418, %v435
    %v441 = vadd.f32 %v419, %v435
    %v442 = vadd.f32 %v420, %v435
    %v443 = vadd.f32 %v421, %v435
    %v444 = vadd.f32 %v422, %v435
    %v445 = vadd.f32 %v423, %v435
    %v446 = vadd.f32 %v424, %v435
    %v447 = vadd.f32 %v425, %v435
    %v448 = vadd.f32 %v426, %v435
    %v449 = vadd.f32 %v427, %v435
    %v450 = vadd.f32 %v428, %v435
    %v451 = vadd.f32 %v429, %v435
    %v452 = vadd.f32 %v430, %v435
    %v453 = vmax.f32 %v437, 0.0
    %v454 = vmax.f32 %v438, 0.0
    %v455 = vmax.f32 %v439, 0.0
    %v456 = vmax.f32 %v440, 0.0
    %v457 = vmax.f32 %v441, 0.0
    %v458 = vmax.f32 %v442, 0.0
    %v459 = vmax.f32 %v443, 0.0
    %v460 = vmax.f32 %v444, 0.0
    %v461 = vmax.f32 %v445, 0.0
    %v462 = vmax.f32 %v446, 0.0
    %v463 = vmax.f32 %v447, 0.0
    %v464 = vmax.f32 %v448, 0.0
    %v465 = vmax.f32 %v449, 0.0
    %v466 = vmax.f32 %v450, 0.0
    %v467 = vmax.f32 %v451, 0.0
    %v468 = vmax.f32 %v452, 0.0
    %v469 = vmax.f32 %v453, %v457
    %v470 = vmax.f32 %v454, %v458
    %v471 = vmax.f32 %v455, %v459
    %v472 = vmax.f32 %v456, %v460
    %v473 = vmax.f32 %v461, %v465
    %v474 = vmax.f32 %v462, %v466
    %v475 = vmax.f32 %v463, %v467
    %v476 = vmax.f32 %v464, %v468
    %v477 = vmax.f32 %v469, %v473
    %v478 = vmax.f32 %v470, %v474
    %v479 = vmax.f32 %v471, %v475
    %v480 = vmax.f32 %v472, %v476
    %v481 = vld [vmem:[%s5] sm:$0x1]
    %v483 = vlaneseq
    %v484 = vshrl.u32 %v483, 7
    %v485 = vsub.s32 0, %v484
    %v486 = vrot.slane %v481, %v485
    %v488 = vld [vmem:[%s4] sm:$0xff]
    %v489 = vld [vmem:[%s4 + $0x8] sm:$0xff]
    %v490 = vld [vmem:[%s4 + $0x10] sm:$0xff]
    %v491 = vld [vmem:[%s4 + $0x18] sm:$0xff]
    %v493 = vsel %vm307, %v477, 0
    %495 = vmatprep.subr.mxu0 0.0
    %496 = vmatpush1.msra.mxu0 0.0
    %497 = vmatprep.subr.mxu0 0.0
    %498 = vmatpush1.msra.mxu0 0.0
    %499 = vmatprep.subr.mxu0 0.0
    %500 = vmatpush1.msra.mxu0 0.0
    %501 = vmatprep.subr.mxu0 0.0
    %502 = vmatpush1.msra.mxu0 0.0
    %503 = vmatprep.subr.mxu0 0.0
    %504 = vmatpush1.msra.mxu0 0.0
    %505 = vmatprep.subr.mxu0 0.0
    %506 = vmatpush1.msra.mxu0 0.0
    %507 = vmatprep.subr.mxu0 0.0
    %508 = vmatpush1.msra.mxu0 0.0
    %509 = vmatprep.subr.mxu0 0.0
    %510 = vmatpush1.msra.mxu0 0.0
    %511 = vmatprep.subr.mxu0 0.0
    %512 = vmatpush1.msra.mxu0 0.0
    %513 = vmatprep.subr.mxu0 0.0
    %514 = vmatpush1.msra.mxu0 0.0
    %515 = vmatprep.subr.mxu0 0.0
    %516 = vmatpush1.msra.mxu0 0.0
    %517 = vmatprep.subr.mxu0 0.0
    %518 = vmatpush1.msra.mxu0 0.0
    %519 = vmatprep.subr.mxu0 0.0
    %520 = vmatpush1.msra.mxu0 %v491
    %521 = vmatprep.subr.mxu0 0.0
    %522 = vmatpush1.msra.mxu0 %v490
    %523 = vmatprep.subr.mxu0 0.0
    %524 = vmatpush1.msra.mxu0 %v489
    %525 = vmatprep.subr.mxu0 0.0
    %526 = vmatpush1.msra.mxu0 %v488
    %527 = vmatprep.subr.mxu0 0.0
    %528 = vmatpush2.msra.mxu0 0.0
    %529 = vmatprep.subr.mxu0 0.0
    %530 = vmatpush2.msra.mxu0 0.0
    %531 = vmatprep.subr.mxu0 0.0
    %532 = vmatpush2.msra.mxu0 0.0
    %533 = vmatprep.subr.mxu0 0.0
    %534 = vmatpush2.msra.mxu0 0.0
    %535 = vmatprep.subr.mxu0 0.0
    %536 = vmatpush2.msra.mxu0 0.0
    %537 = vmatprep.subr.mxu0 0.0
    %538 = vmatpush2.msra.mxu0 0.0
    %539 = vmatprep.subr.mxu0 0.0
    %540 = vmatpush2.msra.mxu0 0.0
    %541 = vmatprep.subr.mxu0 0.0
    %542 = vmatpush2.msra.mxu0 0.0
    %543 = vmatprep.subr.mxu0 0.0
    %544 = vmatpush2.msra.mxu0 0.0
    %545 = vmatprep.subr.mxu0 0.0
    %546 = vmatpush2.msra.mxu0 0.0
    %547 = vmatprep.subr.mxu0 0.0
    %548 = vmatpush2.msra.mxu0 0.0
    %549 = vmatprep.subr.mxu0 0.0
    %550 = vmatpush2.msra.mxu0 0.0
    %551 = vmatprep.subr.mxu0 0.0
    %552 = vmatpush2.msra.mxu0 0.0
    %553 = vmatprep.subr.mxu0 0.0
    %554 = vmatpush2.msra.mxu0 0.0
    %555 = vmatprep.subr.mxu0 0.0
    %556 = vmatpush2.msra.mxu0 0.0
    %557 = vmatprep.subr.mxu0 0.0
    %558 = vmatpush2.msra.mxu0 0.0
    %559 = vmatprep.mubr.f32.mxu0 0.0
    %560 = vmatmul.mubr.f32.gmra.mxu0 %v493
    %v561 = vpop.f32.mrf.mxu0
    %v562 = vadd.f32 0.0, %v561
    %v563 = vpop.f32.mrf.mxu0
    %564 = vdwg.mxu0
    %v565 = vadd.f32 %v486, %v562
    %s566 = scalar_lea.vmem %s4, 32
    %v567 = vld [vmem:[%s566] sm:$0xff]
    %v568 = vld [vmem:[%s566 + $0x8] sm:$0xff]
    %v569 = vld [vmem:[%s566 + $0x10] sm:$0xff]
    %v570 = vld [vmem:[%s566 + $0x18] sm:$0xff]
    %v571 = vrot.slane %v477, 2
    %v572 = vsel %vm307, %v571, 0
    %574 = vmatprep.subr.mxu0 0.0
    %575 = vmatpush1.msra.mxu0 0.0
    %576 = vmatprep.subr.mxu0 0.0
    %577 = vmatpush1.msra.mxu0 0.0
    %578 = vmatprep.subr.mxu0 0.0
    %579 = vmatpush1.msra.mxu0 0.0
    %580 = vmatprep.subr.mxu0 0.0
    %581 = vmatpush1.msra.mxu0 0.0
    %582 = vmatprep.subr.mxu0 0.0
    %583 = vmatpush1.msra.mxu0 0.0
    %584 = vmatprep.subr.mxu0 0.0
    %585 = vmatpush1.msra.mxu0 0.0
    %586 = vmatprep.subr.mxu0 0.0
    %587 = vmatpush1.msra.mxu0 0.0
    %588 = vmatprep.subr.mxu0 0.0
    %589 = vmatpush1.msra.mxu0 0.0
    %590 = vmatprep.subr.mxu0 0.0
    %591 = vmatpush1.msra.mxu0 0.0
    %592 = vmatprep.subr.mxu0 0.0
    %593 = vmatpush1.msra.mxu0 0.0
    %594 = vmatprep.subr.mxu0 0.0
    %595 = vmatpush1.msra.mxu0 0.0
    %596 = vmatprep.subr.mxu0 0.0
    %597 = vmatpush1.msra.mxu0 0.0
    %598 = vmatprep.subr.mxu0 0.0
    %599 = vmatpush1.msra.mxu0 %v570
    %600 = vmatprep.subr.mxu0 0.0
    %601 = vmatpush1.msra.mxu0 %v569
    %602 = vmatprep.subr.mxu0 0.0
    %603 = vmatpush1.msra.mxu0 %v568
    %604 = vmatprep.subr.mxu0 0.0
    %605 = vmatpush1.msra.mxu0 %v567
    %606 = vmatprep.subr.mxu0 0.0
    %607 = vmatpush2.msra.mxu0 0.0
    %608 = vmatprep.subr.mxu0 0.0
    %609 = vmatpush2.msra.mxu0 0.0
    %610 = vmatprep.subr.mxu0 0.0
    %611 = vmatpush2.msra.mxu0 0.0
    %612 = vmatprep.subr.mxu0 0.0
    %613 = vmatpush2.msra.mxu0 0.0
    %614 = vmatprep.subr.mxu0 0.0
    %615 = vmatpush2.msra.mxu0 0.0
    %616 = vmatprep.subr.mxu0 0.0
    %617 = vmatpush2.msra.mxu0 0.0
    %618 = vmatprep.subr.mxu0 0.0
    %619 = vmatpush2.msra.mxu0 0.0
    %620 = vmatprep.subr.mxu0 0.0
    %621 = vmatpush2.msra.mxu0 0.0
    %622 = vmatprep.subr.mxu0 0.0
    %623 = vmatpush2.msra.mxu0 0.0
    %624 = vmatprep.subr.mxu0 0.0
    %625 = vmatpush2.msra.mxu0 0.0
    %626 = vmatprep.subr.mxu0 0.0
    %627 = vmatpush2.msra.mxu0 0.0
    %628 = vmatprep.subr.mxu0 0.0
    %629 = vmatpush2.msra.mxu0 0.0
    %630 = vmatprep.subr.mxu0 0.0
    %631 = vmatpush2.msra.mxu0 0.0
    %632 = vmatprep.subr.mxu0 0.0
    %633 = vmatpush2.msra.mxu0 0.0
    %634 = vmatprep.subr.mxu0 0.0
    %635 = vmatpush2.msra.mxu0 0.0
    %636 = vmatprep.subr.mxu0 0.0
    %637 = vmatpush2.msra.mxu0 0.0
    %638 = vmatprep.mubr.f32.mxu0 0.0
    %639 = vmatmul.mubr.f32.gmra.mxu0 %v572
    %v640 = vpop.f32.mrf.mxu0
    %v641 = vadd.f32 0.0, %v640
    %v642 = vpop.f32.mrf.mxu0
    %643 = vdwg.mxu0
    %v644 = vadd.f32 %v565, %v641
    %s645 = scalar_lea.vmem %s4, 64
    %v646 = vld [vmem:[%s645] sm:$0xff]
    %v647 = vld [vmem:[%s645 + $0x8] sm:$0xff]
    %v648 = vld [vmem:[%s645 + $0x10] sm:$0xff]
    %v649 = vld [vmem:[%s645 + $0x18] sm:$0xff]
    %v650 = vrot.slane %v477, 4
    %v651 = vsel %vm307, %v650, 0
    %653 = vmatprep.subr.mxu0 0.0
    %654 = vmatpush1.msra.mxu0 0.0
    %655 = vmatprep.subr.mxu0 0.0
    %656 = vmatpush1.msra.mxu0 0.0
    %657 = vmatprep.subr.mxu0 0.0
    %658 = vmatpush1.msra.mxu0 0.0
    %659 = vmatprep.subr.mxu0 0.0
    %660 = vmatpush1.msra.mxu0 0.0
    %661 = vmatprep.subr.mxu0 0.0
    %662 = vmatpush1.msra.mxu0 0.0
    %663 = vmatprep.subr.mxu0 0.0
    %664 = vmatpush1.msra.mxu0 0.0
    %665 = vmatprep.subr.mxu0 0.0
    %666 = vmatpush1.msra.mxu0 0.0
    %667 = vmatprep.subr.mxu0 0.0
    %668 = vmatpush1.msra.mxu0 0.0
    %669 = vmatprep.subr.mxu0 0.0
    %670 = vmatpush1.msra.mxu0 0.0
    %671 = vmatprep.subr.mxu0 0.0
    %672 = vmatpush1.msra.mxu0 0.0
    %673 = vmatprep.subr.mxu0 0.0
    %674 = vmatpush1.msra.mxu0 0.0
    %675 = vmatprep.subr.mxu0 0.0
    %676 = vmatpush1.msra.mxu0 0.0
    %677 = vmatprep.subr.mxu0 0.0
    %678 = vmatpush1.msra.mxu0 %v649
    %679 = vmatprep.subr.mxu0 0.0
    %680 = vmatpush1.msra.mxu0 %v648
    %681 = vmatprep.subr.mxu0 0.0
    %682 = vmatpush1.msra.mxu0 %v647
    %683 = vmatprep.subr.mxu0 0.0
    %684 = vmatpush1.msra.mxu0 %v646
    %685 = vmatprep.subr.mxu0 0.0
    %686 = vmatpush2.msra.mxu0 0.0
    %687 = vmatprep.subr.mxu0 0.0
    %688 = vmatpush2.msra.mxu0 0.0
    %689 = vmatprep.subr.mxu0 0.0
    %690 = vmatpush2.msra.mxu0 0.0
    %691 = vmatprep.subr.mxu0 0.0
    %692 = vmatpush2.msra.mxu0 0.0
    %693 = vmatprep.subr.mxu0 0.0
    %694 = vmatpush2.msra.mxu0 0.0
    %695 = vmatprep.subr.mxu0 0.0
    %696 = vmatpush2.msra.mxu0 0.0
    %697 = vmatprep.subr.mxu0 0.0
    %698 = vmatpush2.msra.mxu0 0.0
    %699 = vmatprep.subr.mxu0 0.0
    %700 = vmatpush2.msra.mxu0 0.0
    %701 = vmatprep.subr.mxu0 0.0
    %702 = vmatpush2.msra.mxu0 0.0
    %703 = vmatprep.subr.mxu0 0.0
    %704 = vmatpush2.msra.mxu0 0.0
    %705 = vmatprep.subr.mxu0 0.0
    %706 = vmatpush2.msra.mxu0 0.0
    %707 = vmatprep.subr.mxu0 0.0
    %708 = vmatpush2.msra.mxu0 0.0
    %709 = vmatprep.subr.mxu0 0.0
    %710 = vmatpush2.msra.mxu0 0.0
    %711 = vmatprep.subr.mxu0 0.0
    %712 = vmatpush2.msra.mxu0 0.0
    %713 = vmatprep.subr.mxu0 0.0
    %714 = vmatpush2.msra.mxu0 0.0
    %715 = vmatprep.subr.mxu0 0.0
    %716 = vmatpush2.msra.mxu0 0.0
    %717 = vmatprep.mubr.f32.mxu0 0.0
    %718 = vmatmul.mubr.f32.gmra.mxu0 %v651
    %v719 = vpop.f32.mrf.mxu0
    %v720 = vadd.f32 0.0, %v719
    %v721 = vpop.f32.mrf.mxu0
    %722 = vdwg.mxu0
    %v723 = vadd.f32 %v644, %v720
    %s724 = scalar_lea.vmem %s4, 96
    %v725 = vld [vmem:[%s724] sm:$0xff]
    %v726 = vld [vmem:[%s724 + $0x8] sm:$0xff]
    %v727 = vld [vmem:[%s724 + $0x10] sm:$0xff]
    %v728 = vld [vmem:[%s724 + $0x18] sm:$0xff]
    %v729 = vrot.slane %v477, 6
    %v730 = vsel %vm307, %v729, 0
    %732 = vmatprep.subr.mxu0 0.0
    %733 = vmatpush1.msra.mxu0 0.0
    %734 = vmatprep.subr.mxu0 0.0
    %735 = vmatpush1.msra.mxu0 0.0
    %736 = vmatprep.subr.mxu0 0.0
    %737 = vmatpush1.msra.mxu0 0.0
    %738 = vmatprep.subr.mxu0 0.0
    %739 = vmatpush1.msra.mxu0 0.0
    %740 = vmatprep.subr.mxu0 0.0
    %741 = vmatpush1.msra.mxu0 0.0
    %742 = vmatprep.subr.mxu0 0.0
    %743 = vmatpush1.msra.mxu0 0.0
    %744 = vmatprep.subr.mxu0 0.0
    %745 = vmatpush1.msra.mxu0 0.0
    %746 = vmatprep.subr.mxu0 0.0
    %747 = vmatpush1.msra.mxu0 0.0
    %748 = vmatprep.subr.mxu0 0.0
    %749 = vmatpush1.msra.mxu0 0.0
    %750 = vmatprep.subr.mxu0 0.0
    %751 = vmatpush1.msra.mxu0 0.0
    %752 = vmatprep.subr.mxu0 0.0
    %753 = vmatpush1.msra.mxu0 0.0
    %754 = vmatprep.subr.mxu0 0.0
    %755 = vmatpush1.msra.mxu0 0.0
    %756 = vmatprep.subr.mxu0 0.0
    %757 = vmatpush1.msra.mxu0 %v728
    %758 = vmatprep.subr.mxu0 0.0
    %759 = vmatpush1.msra.mxu0 %v727
    %760 = vmatprep.subr.mxu0 0.0
    %761 = vmatpush1.msra.mxu0 %v726
    %762 = vmatprep.subr.mxu0 0.0
    %763 = vmatpush1.msra.mxu0 %v725
    %764 = vmatprep.subr.mxu0 0.0
    %765 = vmatpush2.msra.mxu0 0.0
    %766 = vmatprep.subr.mxu0 0.0
    %767 = vmatpush2.msra.mxu0 0.0
    %768 = vmatprep.subr.mxu0 0.0
    %769 = vmatpush2.msra.mxu0 0.0
    %770 = vmatprep.subr.mxu0 0.0
    %771 = vmatpush2.msra.mxu0 0.0
    %772 = vmatprep.subr.mxu0 0.0
    %773 = vmatpush2.msra.mxu0 0.0
    %774 = vmatprep.subr.mxu0 0.0
    %775 = vmatpush2.msra.mxu0 0.0
    %776 = vmatprep.subr.mxu0 0.0
    %777 = vmatpush2.msra.mxu0 0.0
    %778 = vmatprep.subr.mxu0 0.0
    %779 = vmatpush2.msra.mxu0 0.0
    %780 = vmatprep.subr.mxu0 0.0
    %781 = vmatpush2.msra.mxu0 0.0
    %782 = vmatprep.subr.mxu0 0.0
    %783 = vmatpush2.msra.mxu0 0.0
    %784 = vmatprep.subr.mxu0 0.0
    %785 = vmatpush2.msra.mxu0 0.0
    %786 = vmatprep.subr.mxu0 0.0
    %787 = vmatpush2.msra.mxu0 0.0
    %788 = vmatprep.subr.mxu0 0.0
    %789 = vmatpush2.msra.mxu0 0.0
    %790 = vmatprep.subr.mxu0 0.0
    %791 = vmatpush2.msra.mxu0 0.0
    %792 = vmatprep.subr.mxu0 0.0
    %793 = vmatpush2.msra.mxu0 0.0
    %794 = vmatprep.subr.mxu0 0.0
    %795 = vmatpush2.msra.mxu0 0.0
    %796 = vmatprep.mubr.f32.mxu0 0.0
    %797 = vmatmul.mubr.f32.gmra.mxu0 %v730
    %v798 = vpop.f32.mrf.mxu0
    %v799 = vadd.f32 0.0, %v798
    %v800 = vpop.f32.mrf.mxu0
    %801 = vdwg.mxu0
    %v802 = vadd.f32 %v723, %v799
    %s803 = scalar_lea.vmem %s4, 128
    %v804 = vld [vmem:[%s803] sm:$0xff]
    %v805 = vld [vmem:[%s803 + $0x8] sm:$0xff]
    %v806 = vld [vmem:[%s803 + $0x10] sm:$0xff]
    %v807 = vld [vmem:[%s803 + $0x18] sm:$0xff]
    %v809 = vsel %vm307, %v478, 0
    %811 = vmatprep.subr.mxu0 0.0
    %812 = vmatpush1.msra.mxu0 0.0
    %813 = vmatprep.subr.mxu0 0.0
    %814 = vmatpush1.msra.mxu0 0.0
    %815 = vmatprep.subr.mxu0 0.0
    %816 = vmatpush1.msra.mxu0 0.0
    %817 = vmatprep.subr.mxu0 0.0
    %818 = vmatpush1.msra.mxu0 0.0
    %819 = vmatprep.subr.mxu0 0.0
    %820 = vmatpush1.msra.mxu0 0.0
    %821 = vmatprep.subr.mxu0 0.0
    %822 = vmatpush1.msra.mxu0 0.0
    %823 = vmatprep.subr.mxu0 0.0
    %824 = vmatpush1.msra.mxu0 0.0
    %825 = vmatprep.subr.mxu0 0.0
    %826 = vmatpush1.msra.mxu0 0.0
    %827 = vmatprep.subr.mxu0 0.0
    %828 = vmatpush1.msra.mxu0 0.0
    %829 = vmatprep.subr.mxu0 0.0
    %830 = vmatpush1.msra.mxu0 0.0
    %831 = vmatprep.subr.mxu0 0.0
    %832 = vmatpush1.msra.mxu0 0.0
    %833 = vmatprep.subr.mxu0 0.0
    %834 = vmatpush1.msra.mxu0 0.0
    %835 = vmatprep.subr.mxu0 0.0
    %836 = vmatpush1.msra.mxu0 %v807
    %837 = vmatprep.subr.mxu0 0.0
    %838 = vmatpush1.msra.mxu0 %v806
    %839 = vmatprep.subr.mxu0 0.0
    %840 = vmatpush1.msra.mxu0 %v805
    %841 = vmatprep.subr.mxu0 0.0
    %842 = vmatpush1.msra.mxu0 %v804
    %843 = vmatprep.subr.mxu0 0.0
    %844 = vmatpush2.msra.mxu0 0.0
    %845 = vmatprep.subr.mxu0 0.0
    %846 = vmatpush2.msra.mxu0 0.0
    %847 = vmatprep.subr.mxu0 0.0
    %848 = vmatpush2.msra.mxu0 0.0
    %849 = vmatprep.subr.mxu0 0.0
    %850 = vmatpush2.msra.mxu0 0.0
    %851 = vmatprep.subr.mxu0 0.0
    %852 = vmatpush2.msra.mxu0 0.0
    %853 = vmatprep.subr.mxu0 0.0
    %854 = vmatpush2.msra.mxu0 0.0
    %855 = vmatprep.subr.mxu0 0.0
    %856 = vmatpush2.msra.mxu0 0.0
    %857 = vmatprep.subr.mxu0 0.0
    %858 = vmatpush2.msra.mxu0 0.0
    %859 = vmatprep.subr.mxu0 0.0
    %860 = vmatpush2.msra.mxu0 0.0
    %861 = vmatprep.subr.mxu0 0.0
    %862 = vmatpush2.msra.mxu0 0.0
    %863 = vmatprep.subr.mxu0 0.0
    %864 = vmatpush2.msra.mxu0 0.0
    %865 = vmatprep.subr.mxu0 0.0
    %866 = vmatpush2.msra.mxu0 0.0
    %867 = vmatprep.subr.mxu0 0.0
    %868 = vmatpush2.msra.mxu0 0.0
    %869 = vmatprep.subr.mxu0 0.0
    %870 = vmatpush2.msra.mxu0 0.0
    %871 = vmatprep.subr.mxu0 0.0
    %872 = vmatpush2.msra.mxu0 0.0
    %873 = vmatprep.subr.mxu0 0.0
    %874 = vmatpush2.msra.mxu0 0.0
    %875 = vmatprep.mubr.f32.mxu0 0.0
    %876 = vmatmul.mubr.f32.gmra.mxu0 %v809
    %v877 = vpop.f32.mrf.mxu0
    %v878 = vadd.f32 0.0, %v877
    %v879 = vpop.f32.mrf.mxu0
    %880 = vdwg.mxu0
    %v881 = vadd.f32 %v802, %v878
    %s882 = scalar_lea.vmem %s4, 160
    %v883 = vld [vmem:[%s882] sm:$0xff]
    %v884 = vld [vmem:[%s882 + $0x8] sm:$0xff]
    %v885 = vld [vmem:[%s882 + $0x10] sm:$0xff]
    %v886 = vld [vmem:[%s882 + $0x18] sm:$0xff]
    %v887 = vrot.slane %v478, 2
    %v888 = vsel %vm307, %v887, 0
    %890 = vmatprep.subr.mxu0 0.0
    %891 = vmatpush1.msra.mxu0 0.0
    %892 = vmatprep.subr.mxu0 0.0
    %893 = vmatpush1.msra.mxu0 0.0
    %894 = vmatprep.subr.mxu0 0.0
    %895 = vmatpush1.msra.mxu0 0.0
    %896 = vmatprep.subr.mxu0 0.0
    %897 = vmatpush1.msra.mxu0 0.0
    %898 = vmatprep.subr.mxu0 0.0
    %899 = vmatpush1.msra.mxu0 0.0
    %900 = vmatprep.subr.mxu0 0.0
    %901 = vmatpush1.msra.mxu0 0.0
    %902 = vmatprep.subr.mxu0 0.0
    %903 = vmatpush1.msra.mxu0 0.0
    %904 = vmatprep.subr.mxu0 0.0
    %905 = vmatpush1.msra.mxu0 0.0
    %906 = vmatprep.subr.mxu0 0.0
    %907 = vmatpush1.msra.mxu0 0.0
    %908 = vmatprep.subr.mxu0 0.0
    %909 = vmatpush1.msra.mxu0 0.0
    %910 = vmatprep.subr.mxu0 0.0
    %911 = vmatpush1.msra.mxu0 0.0
    %912 = vmatprep.subr.mxu0 0.0
    %913 = vmatpush1.msra.mxu0 0.0
    %914 = vmatprep.subr.mxu0 0.0
    %915 = vmatpush1.msra.mxu0 %v886
    %916 = vmatprep.subr.mxu0 0.0
    %917 = vmatpush1.msra.mxu0 %v885
    %918 = vmatprep.subr.mxu0 0.0
    %919 = vmatpush1.msra.mxu0 %v884
    %920 = vmatprep.subr.mxu0 0.0
    %921 = vmatpush1.msra.mxu0 %v883
    %922 = vmatprep.subr.mxu0 0.0
    %923 = vmatpush2.msra.mxu0 0.0
    %924 = vmatprep.subr.mxu0 0.0
    %925 = vmatpush2.msra.mxu0 0.0
    %926 = vmatprep.subr.mxu0 0.0
    %927 = vmatpush2.msra.mxu0 0.0
    %928 = vmatprep.subr.mxu0 0.0
    %929 = vmatpush2.msra.mxu0 0.0
    %930 = vmatprep.subr.mxu0 0.0
    %931 = vmatpush2.msra.mxu0 0.0
    %932 = vmatprep.subr.mxu0 0.0
    %933 = vmatpush2.msra.mxu0 0.0
    %934 = vmatprep.subr.mxu0 0.0
    %935 = vmatpush2.msra.mxu0 0.0
    %936 = vmatprep.subr.mxu0 0.0
    %937 = vmatpush2.msra.mxu0 0.0
    %938 = vmatprep.subr.mxu0 0.0
    %939 = vmatpush2.msra.mxu0 0.0
    %940 = vmatprep.subr.mxu0 0.0
    %941 = vmatpush2.msra.mxu0 0.0
    %942 = vmatprep.subr.mxu0 0.0
    %943 = vmatpush2.msra.mxu0 0.0
    %944 = vmatprep.subr.mxu0 0.0
    %945 = vmatpush2.msra.mxu0 0.0
    %946 = vmatprep.subr.mxu0 0.0
    %947 = vmatpush2.msra.mxu0 0.0
    %948 = vmatprep.subr.mxu0 0.0
    %949 = vmatpush2.msra.mxu0 0.0
    %950 = vmatprep.subr.mxu0 0.0
    %951 = vmatpush2.msra.mxu0 0.0
    %952 = vmatprep.subr.mxu0 0.0
    %953 = vmatpush2.msra.mxu0 0.0
    %954 = vmatprep.mubr.f32.mxu0 0.0
    %955 = vmatmul.mubr.f32.gmra.mxu0 %v888
    %v956 = vpop.f32.mrf.mxu0
    %v957 = vadd.f32 0.0, %v956
    %v958 = vpop.f32.mrf.mxu0
    %959 = vdwg.mxu0
    %v960 = vadd.f32 %v881, %v957
    %s961 = scalar_lea.vmem %s4, 192
    %v962 = vld [vmem:[%s961] sm:$0xff]
    %v963 = vld [vmem:[%s961 + $0x8] sm:$0xff]
    %v964 = vld [vmem:[%s961 + $0x10] sm:$0xff]
    %v965 = vld [vmem:[%s961 + $0x18] sm:$0xff]
    %v966 = vrot.slane %v478, 4
    %v967 = vsel %vm307, %v966, 0
    %969 = vmatprep.subr.mxu0 0.0
    %970 = vmatpush1.msra.mxu0 0.0
    %971 = vmatprep.subr.mxu0 0.0
    %972 = vmatpush1.msra.mxu0 0.0
    %973 = vmatprep.subr.mxu0 0.0
    %974 = vmatpush1.msra.mxu0 0.0
    %975 = vmatprep.subr.mxu0 0.0
    %976 = vmatpush1.msra.mxu0 0.0
    %977 = vmatprep.subr.mxu0 0.0
    %978 = vmatpush1.msra.mxu0 0.0
    %979 = vmatprep.subr.mxu0 0.0
    %980 = vmatpush1.msra.mxu0 0.0
    %981 = vmatprep.subr.mxu0 0.0
    %982 = vmatpush1.msra.mxu0 0.0
    %983 = vmatprep.subr.mxu0 0.0
    %984 = vmatpush1.msra.mxu0 0.0
    %985 = vmatprep.subr.mxu0 0.0
    %986 = vmatpush1.msra.mxu0 0.0
    %987 = vmatprep.subr.mxu0 0.0
    %988 = vmatpush1.msra.mxu0 0.0
    %989 = vmatprep.subr.mxu0 0.0
    %990 = vmatpush1.msra.mxu0 0.0
    %991 = vmatprep.subr.mxu0 0.0
    %992 = vmatpush1.msra.mxu0 0.0
    %993 = vmatprep.subr.mxu0 0.0
    %994 = vmatpush1.msra.mxu0 %v965
    %995 = vmatprep.subr.mxu0 0.0
    %996 = vmatpush1.msra.mxu0 %v964
    %997 = vmatprep.subr.mxu0 0.0
    %998 = vmatpush1.msra.mxu0 %v963
    %999 = vmatprep.subr.mxu0 0.0
    %1000 = vmatpush1.msra.mxu0 %v962
    %1001 = vmatprep.subr.mxu0 0.0
    %1002 = vmatpush2.msra.mxu0 0.0
    %1003 = vmatprep.subr.mxu0 0.0
    %1004 = vmatpush2.msra.mxu0 0.0
    %1005 = vmatprep.subr.mxu0 0.0
    %1006 = vmatpush2.msra.mxu0 0.0
    %1007 = vmatprep.subr.mxu0 0.0
    %1008 = vmatpush2.msra.mxu0 0.0
    %1009 = vmatprep.subr.mxu0 0.0
    %1010 = vmatpush2.msra.mxu0 0.0
    %1011 = vmatprep.subr.mxu0 0.0
    %1012 = vmatpush2.msra.mxu0 0.0
    %1013 = vmatprep.subr.mxu0 0.0
    %1014 = vmatpush2.msra.mxu0 0.0
    %1015 = vmatprep.subr.mxu0 0.0
    %1016 = vmatpush2.msra.mxu0 0.0
    %1017 = vmatprep.subr.mxu0 0.0
    %1018 = vmatpush2.msra.mxu0 0.0
    %1019 = vmatprep.subr.mxu0 0.0
    %1020 = vmatpush2.msra.mxu0 0.0
    %1021 = vmatprep.subr.mxu0 0.0
    %1022 = vmatpush2.msra.mxu0 0.0
    %1023 = vmatprep.subr.mxu0 0.0
    %1024 = vmatpush2.msra.mxu0 0.0
    %1025 = vmatprep.subr.mxu0 0.0
    %1026 = vmatpush2.msra.mxu0 0.0
    %1027 = vmatprep.subr.mxu0 0.0
    %1028 = vmatpush2.msra.mxu0 0.0
    %1029 = vmatprep.subr.mxu0 0.0
    %1030 = vmatpush2.msra.mxu0 0.0
    %1031 = vmatprep.subr.mxu0 0.0
    %1032 = vmatpush2.msra.mxu0 0.0
    %1033 = vmatprep.mubr.f32.mxu0 0.0
    %1034 = vmatmul.mubr.f32.gmra.mxu0 %v967
    %v1035 = vpop.f32.mrf.mxu0
    %v1036 = vadd.f32 0.0, %v1035
    %v1037 = vpop.f32.mrf.mxu0
    %1038 = vdwg.mxu0
    %v1039 = vadd.f32 %v960, %v1036
    %s1040 = scalar_lea.vmem %s4, 224
    %v1041 = vld [vmem:[%s1040] sm:$0xff]
    %v1042 = vld [vmem:[%s1040 + $0x8] sm:$0xff]
    %v1043 = vld [vmem:[%s1040 + $0x10] sm:$0xff]
    %v1044 = vld [vmem:[%s1040 + $0x18] sm:$0xff]
    %v1045 = vrot.slane %v478, 6
    %v1046 = vsel %vm307, %v1045, 0
    %1048 = vmatprep.subr.mxu0 0.0
    %1049 = vmatpush1.msra.mxu0 0.0
    %1050 = vmatprep.subr.mxu0 0.0
    %1051 = vmatpush1.msra.mxu0 0.0
    %1052 = vmatprep.subr.mxu0 0.0
    %1053 = vmatpush1.msra.mxu0 0.0
    %1054 = vmatprep.subr.mxu0 0.0
    %1055 = vmatpush1.msra.mxu0 0.0
    %1056 = vmatprep.subr.mxu0 0.0
    %1057 = vmatpush1.msra.mxu0 0.0
    %1058 = vmatprep.subr.mxu0 0.0
    %1059 = vmatpush1.msra.mxu0 0.0
    %1060 = vmatprep.subr.mxu0 0.0
    %1061 = vmatpush1.msra.mxu0 0.0
    %1062 = vmatprep.subr.mxu0 0.0
    %1063 = vmatpush1.msra.mxu0 0.0
    %1064 = vmatprep.subr.mxu0 0.0
    %1065 = vmatpush1.msra.mxu0 0.0
    %1066 = vmatprep.subr.mxu0 0.0
    %1067 = vmatpush1.msra.mxu0 0.0
    %1068 = vmatprep.subr.mxu0 0.0
    %1069 = vmatpush1.msra.mxu0 0.0
    %1070 = vmatprep.subr.mxu0 0.0
    %1071 = vmatpush1.msra.mxu0 0.0
    %1072 = vmatprep.subr.mxu0 0.0
    %1073 = vmatpush1.msra.mxu0 %v1044
    %1074 = vmatprep.subr.mxu0 0.0
    %1075 = vmatpush1.msra.mxu0 %v1043
    %1076 = vmatprep.subr.mxu0 0.0
    %1077 = vmatpush1.msra.mxu0 %v1042
    %1078 = vmatprep.subr.mxu0 0.0
    %1079 = vmatpush1.msra.mxu0 %v1041
    %1080 = vmatprep.subr.mxu0 0.0
    %1081 = vmatpush2.msra.mxu0 0.0
    %1082 = vmatprep.subr.mxu0 0.0
    %1083 = vmatpush2.msra.mxu0 0.0
    %1084 = vmatprep.subr.mxu0 0.0
    %1085 = vmatpush2.msra.mxu0 0.0
    %1086 = vmatprep.subr.mxu0 0.0
    %1087 = vmatpush2.msra.mxu0 0.0
    %1088 = vmatprep.subr.mxu0 0.0
    %1089 = vmatpush2.msra.mxu0 0.0
    %1090 = vmatprep.subr.mxu0 0.0
    %1091 = vmatpush2.msra.mxu0 0.0
    %1092 = vmatprep.subr.mxu0 0.0
    %1093 = vmatpush2.msra.mxu0 0.0
    %1094 = vmatprep.subr.mxu0 0.0
    %1095 = vmatpush2.msra.mxu0 0.0
    %1096 = vmatprep.subr.mxu0 0.0
    %1097 = vmatpush2.msra.mxu0 0.0
    %1098 = vmatprep.subr.mxu0 0.0
    %1099 = vmatpush2.msra.mxu0 0.0
    %1100 = vmatprep.subr.mxu0 0.0
    %1101 = vmatpush2.msra.mxu0 0.0
    %1102 = vmatprep.subr.mxu0 0.0
    %1103 = vmatpush2.msra.mxu0 0.0
    %1104 = vmatprep.subr.mxu0 0.0
    %1105 = vmatpush2.msra.mxu0 0.0
    %1106 = vmatprep.subr.mxu0 0.0
    %1107 = vmatpush2.msra.mxu0 0.0
    %1108 = vmatprep.subr.mxu0 0.0
    %1109 = vmatpush2.msra.mxu0 0.0
    %1110 = vmatprep.subr.mxu0 0.0
    %1111 = vmatpush2.msra.mxu0 0.0
    %1112 = vmatprep.mubr.f32.mxu0 0.0
    %1113 = vmatmul.mubr.f32.gmra.mxu0 %v1046
    %v1114 = vpop.f32.mrf.mxu0
    %v1115 = vadd.f32 0.0, %v1114
    %v1116 = vpop.f32.mrf.mxu0
    %1117 = vdwg.mxu0
    %v1118 = vadd.f32 %v1039, %v1115
    %s1119 = scalar_lea.vmem %s4, 256
    %v1120 = vld [vmem:[%s1119] sm:$0xff]
    %v1121 = vld [vmem:[%s1119 + $0x8] sm:$0xff]
    %v1122 = vld [vmem:[%s1119 + $0x10] sm:$0xff]
    %v1123 = vld [vmem:[%s1119 + $0x18] sm:$0xff]
    %v1125 = vsel %vm307, %v479, 0
    %1127 = vmatprep.subr.mxu0 0.0
    %1128 = vmatpush1.msra.mxu0 0.0
    %1129 = vmatprep.subr.mxu0 0.0
    %1130 = vmatpush1.msra.mxu0 0.0
    %1131 = vmatprep.subr.mxu0 0.0
    %1132 = vmatpush1.msra.mxu0 0.0
    %1133 = vmatprep.subr.mxu0 0.0
    %1134 = vmatpush1.msra.mxu0 0.0
    %1135 = vmatprep.subr.mxu0 0.0
    %1136 = vmatpush1.msra.mxu0 0.0
    %1137 = vmatprep.subr.mxu0 0.0
    %1138 = vmatpush1.msra.mxu0 0.0
    %1139 = vmatprep.subr.mxu0 0.0
    %1140 = vmatpush1.msra.mxu0 0.0
    %1141 = vmatprep.subr.mxu0 0.0
    %1142 = vmatpush1.msra.mxu0 0.0
    %1143 = vmatprep.subr.mxu0 0.0
    %1144 = vmatpush1.msra.mxu0 0.0
    %1145 = vmatprep.subr.mxu0 0.0
    %1146 = vmatpush1.msra.mxu0 0.0
    %1147 = vmatprep.subr.mxu0 0.0
    %1148 = vmatpush1.msra.mxu0 0.0
    %1149 = vmatprep.subr.mxu0 0.0
    %1150 = vmatpush1.msra.mxu0 0.0
    %1151 = vmatprep.subr.mxu0 0.0
    %1152 = vmatpush1.msra.mxu0 %v1123
    %1153 = vmatprep.subr.mxu0 0.0
    %1154 = vmatpush1.msra.mxu0 %v1122
    %1155 = vmatprep.subr.mxu0 0.0
    %1156 = vmatpush1.msra.mxu0 %v1121
    %1157 = vmatprep.subr.mxu0 0.0
    %1158 = vmatpush1.msra.mxu0 %v1120
    %1159 = vmatprep.subr.mxu0 0.0
    %1160 = vmatpush2.msra.mxu0 0.0
    %1161 = vmatprep.subr.mxu0 0.0
    %1162 = vmatpush2.msra.mxu0 0.0
    %1163 = vmatprep.subr.mxu0 0.0
    %1164 = vmatpush2.msra.mxu0 0.0
    %1165 = vmatprep.subr.mxu0 0.0
    %1166 = vmatpush2.msra.mxu0 0.0
    %1167 = vmatprep.subr.mxu0 0.0
    %1168 = vmatpush2.msra.mxu0 0.0
    %1169 = vmatprep.subr.mxu0 0.0
    %1170 = vmatpush2.msra.mxu0 0.0
    %1171 = vmatprep.subr.mxu0 0.0
    %1172 = vmatpush2.msra.mxu0 0.0
    %1173 = vmatprep.subr.mxu0 0.0
    %1174 = vmatpush2.msra.mxu0 0.0
    %1175 = vmatprep.subr.mxu0 0.0
    %1176 = vmatpush2.msra.mxu0 0.0
    %1177 = vmatprep.subr.mxu0 0.0
    %1178 = vmatpush2.msra.mxu0 0.0
    %1179 = vmatprep.subr.mxu0 0.0
    %1180 = vmatpush2.msra.mxu0 0.0
    %1181 = vmatprep.subr.mxu0 0.0
    %1182 = vmatpush2.msra.mxu0 0.0
    %1183 = vmatprep.subr.mxu0 0.0
    %1184 = vmatpush2.msra.mxu0 0.0
    %1185 = vmatprep.subr.mxu0 0.0
    %1186 = vmatpush2.msra.mxu0 0.0
    %1187 = vmatprep.subr.mxu0 0.0
    %1188 = vmatpush2.msra.mxu0 0.0
    %1189 = vmatprep.subr.mxu0 0.0
    %1190 = vmatpush2.msra.mxu0 0.0
    %1191 = vmatprep.mubr.f32.mxu0 0.0
    %1192 = vmatmul.mubr.f32.gmra.mxu0 %v1125
    %v1193 = vpop.f32.mrf.mxu0
    %v1194 = vadd.f32 0.0, %v1193
    %v1195 = vpop.f32.mrf.mxu0
    %1196 = vdwg.mxu0
    %v1197 = vadd.f32 %v1118, %v1194
    %s1198 = scalar_lea.vmem %s4, 288
    %v1199 = vld [vmem:[%s1198] sm:$0xff]
    %v1200 = vld [vmem:[%s1198 + $0x8] sm:$0xff]
    %v1201 = vld [vmem:[%s1198 + $0x10] sm:$0xff]
    %v1202 = vld [vmem:[%s1198 + $0x18] sm:$0xff]
    %v1203 = vrot.slane %v479, 2
    %v1204 = vsel %vm307, %v1203, 0
    %1206 = vmatprep.subr.mxu0 0.0
    %1207 = vmatpush1.msra.mxu0 0.0
    %1208 = vmatprep.subr.mxu0 0.0
    %1209 = vmatpush1.msra.mxu0 0.0
    %1210 = vmatprep.subr.mxu0 0.0
    %1211 = vmatpush1.msra.mxu0 0.0
    %1212 = vmatprep.subr.mxu0 0.0
    %1213 = vmatpush1.msra.mxu0 0.0
    %1214 = vmatprep.subr.mxu0 0.0
    %1215 = vmatpush1.msra.mxu0 0.0
    %1216 = vmatprep.subr.mxu0 0.0
    %1217 = vmatpush1.msra.mxu0 0.0
    %1218 = vmatprep.subr.mxu0 0.0
    %1219 = vmatpush1.msra.mxu0 0.0
    %1220 = vmatprep.subr.mxu0 0.0
    %1221 = vmatpush1.msra.mxu0 0.0
    %1222 = vmatprep.subr.mxu0 0.0
    %1223 = vmatpush1.msra.mxu0 0.0
    %1224 = vmatprep.subr.mxu0 0.0
    %1225 = vmatpush1.msra.mxu0 0.0
    %1226 = vmatprep.subr.mxu0 0.0
    %1227 = vmatpush1.msra.mxu0 0.0
    %1228 = vmatprep.subr.mxu0 0.0
    %1229 = vmatpush1.msra.mxu0 0.0
    %1230 = vmatprep.subr.mxu0 0.0
    %1231 = vmatpush1.msra.mxu0 %v1202
    %1232 = vmatprep.subr.mxu0 0.0
    %1233 = vmatpush1.msra.mxu0 %v1201
    %1234 = vmatprep.subr.mxu0 0.0
    %1235 = vmatpush1.msra.mxu0 %v1200
    %1236 = vmatprep.subr.mxu0 0.0
    %1237 = vmatpush1.msra.mxu0 %v1199
    %1238 = vmatprep.subr.mxu0 0.0
    %1239 = vmatpush2.msra.mxu0 0.0
    %1240 = vmatprep.subr.mxu0 0.0
    %1241 = vmatpush2.msra.mxu0 0.0
    %1242 = vmatprep.subr.mxu0 0.0
    %1243 = vmatpush2.msra.mxu0 0.0
    %1244 = vmatprep.subr.mxu0 0.0
    %1245 = vmatpush2.msra.mxu0 0.0
    %1246 = vmatprep.subr.mxu0 0.0
    %1247 = vmatpush2.msra.mxu0 0.0
    %1248 = vmatprep.subr.mxu0 0.0
    %1249 = vmatpush2.msra.mxu0 0.0
    %1250 = vmatprep.subr.mxu0 0.0
    %1251 = vmatpush2.msra.mxu0 0.0
    %1252 = vmatprep.subr.mxu0 0.0
    %1253 = vmatpush2.msra.mxu0 0.0
    %1254 = vmatprep.subr.mxu0 0.0
    %1255 = vmatpush2.msra.mxu0 0.0
    %1256 = vmatprep.subr.mxu0 0.0
    %1257 = vmatpush2.msra.mxu0 0.0
    %1258 = vmatprep.subr.mxu0 0.0
    %1259 = vmatpush2.msra.mxu0 0.0
    %1260 = vmatprep.subr.mxu0 0.0
    %1261 = vmatpush2.msra.mxu0 0.0
    %1262 = vmatprep.subr.mxu0 0.0
    %1263 = vmatpush2.msra.mxu0 0.0
    %1264 = vmatprep.subr.mxu0 0.0
    %1265 = vmatpush2.msra.mxu0 0.0
    %1266 = vmatprep.subr.mxu0 0.0
    %1267 = vmatpush2.msra.mxu0 0.0
    %1268 = vmatprep.subr.mxu0 0.0
    %1269 = vmatpush2.msra.mxu0 0.0
    %1270 = vmatprep.mubr.f32.mxu0 0.0
    %1271 = vmatmul.mubr.f32.gmra.mxu0 %v1204
    %v1272 = vpop.f32.mrf.mxu0
    %v1273 = vadd.f32 0.0, %v1272
    %v1274 = vpop.f32.mrf.mxu0
    %1275 = vdwg.mxu0
    %v1276 = vadd.f32 %v1197, %v1273
    %s1277 = scalar_lea.vmem %s4, 320
    %v1278 = vld [vmem:[%s1277] sm:$0xff]
    %v1279 = vld [vmem:[%s1277 + $0x8] sm:$0xff]
    %v1280 = vld [vmem:[%s1277 + $0x10] sm:$0xff]
    %v1281 = vld [vmem:[%s1277 + $0x18] sm:$0xff]
    %v1282 = vrot.slane %v479, 4
    %v1283 = vsel %vm307, %v1282, 0
    %1285 = vmatprep.subr.mxu0 0.0
    %1286 = vmatpush1.msra.mxu0 0.0
    %1287 = vmatprep.subr.mxu0 0.0
    %1288 = vmatpush1.msra.mxu0 0.0
    %1289 = vmatprep.subr.mxu0 0.0
    %1290 = vmatpush1.msra.mxu0 0.0
    %1291 = vmatprep.subr.mxu0 0.0
    %1292 = vmatpush1.msra.mxu0 0.0
    %1293 = vmatprep.subr.mxu0 0.0
    %1294 = vmatpush1.msra.mxu0 0.0
    %1295 = vmatprep.subr.mxu0 0.0
    %1296 = vmatpush1.msra.mxu0 0.0
    %1297 = vmatprep.subr.mxu0 0.0
    %1298 = vmatpush1.msra.mxu0 0.0
    %1299 = vmatprep.subr.mxu0 0.0
    %1300 = vmatpush1.msra.mxu0 0.0
    %1301 = vmatprep.subr.mxu0 0.0
    %1302 = vmatpush1.msra.mxu0 0.0
    %1303 = vmatprep.subr.mxu0 0.0
    %1304 = vmatpush1.msra.mxu0 0.0
    %1305 = vmatprep.subr.mxu0 0.0
    %1306 = vmatpush1.msra.mxu0 0.0
    %1307 = vmatprep.subr.mxu0 0.0
    %1308 = vmatpush1.msra.mxu0 0.0
    %1309 = vmatprep.subr.mxu0 0.0
    %1310 = vmatpush1.msra.mxu0 %v1281
    %1311 = vmatprep.subr.mxu0 0.0
    %1312 = vmatpush1.msra.mxu0 %v1280
    %1313 = vmatprep.subr.mxu0 0.0
    %1314 = vmatpush1.msra.mxu0 %v1279
    %1315 = vmatprep.subr.mxu0 0.0
    %1316 = vmatpush1.msra.mxu0 %v1278
    %1317 = vmatprep.subr.mxu0 0.0
    %1318 = vmatpush2.msra.mxu0 0.0
    %1319 = vmatprep.subr.mxu0 0.0
    %1320 = vmatpush2.msra.mxu0 0.0
    %1321 = vmatprep.subr.mxu0 0.0
    %1322 = vmatpush2.msra.mxu0 0.0
    %1323 = vmatprep.subr.mxu0 0.0
    %1324 = vmatpush2.msra.mxu0 0.0
    %1325 = vmatprep.subr.mxu0 0.0
    %1326 = vmatpush2.msra.mxu0 0.0
    %1327 = vmatprep.subr.mxu0 0.0
    %1328 = vmatpush2.msra.mxu0 0.0
    %1329 = vmatprep.subr.mxu0 0.0
    %1330 = vmatpush2.msra.mxu0 0.0
    %1331 = vmatprep.subr.mxu0 0.0
    %1332 = vmatpush2.msra.mxu0 0.0
    %1333 = vmatprep.subr.mxu0 0.0
    %1334 = vmatpush2.msra.mxu0 0.0
    %1335 = vmatprep.subr.mxu0 0.0
    %1336 = vmatpush2.msra.mxu0 0.0
    %1337 = vmatprep.subr.mxu0 0.0
    %1338 = vmatpush2.msra.mxu0 0.0
    %1339 = vmatprep.subr.mxu0 0.0
    %1340 = vmatpush2.msra.mxu0 0.0
    %1341 = vmatprep.subr.mxu0 0.0
    %1342 = vmatpush2.msra.mxu0 0.0
    %1343 = vmatprep.subr.mxu0 0.0
    %1344 = vmatpush2.msra.mxu0 0.0
    %1345 = vmatprep.subr.mxu0 0.0
    %1346 = vmatpush2.msra.mxu0 0.0
    %1347 = vmatprep.subr.mxu0 0.0
    %1348 = vmatpush2.msra.mxu0 0.0
    %1349 = vmatprep.mubr.f32.mxu0 0.0
    %1350 = vmatmul.mubr.f32.gmra.mxu0 %v1283
    %v1351 = vpop.f32.mrf.mxu0
    %v1352 = vadd.f32 0.0, %v1351
    %v1353 = vpop.f32.mrf.mxu0
    %1354 = vdwg.mxu0
    %v1355 = vadd.f32 %v1276, %v1352
    %s1356 = scalar_lea.vmem %s4, 352
    %v1357 = vld [vmem:[%s1356] sm:$0xff]
    %v1358 = vld [vmem:[%s1356 + $0x8] sm:$0xff]
    %v1359 = vld [vmem:[%s1356 + $0x10] sm:$0xff]
    %v1360 = vld [vmem:[%s1356 + $0x18] sm:$0xff]
    %v1361 = vrot.slane %v479, 6
    %v1362 = vsel %vm307, %v1361, 0
    %1364 = vmatprep.subr.mxu0 0.0
    %1365 = vmatpush1.msra.mxu0 0.0
    %1366 = vmatprep.subr.mxu0 0.0
    %1367 = vmatpush1.msra.mxu0 0.0
    %1368 = vmatprep.subr.mxu0 0.0
    %1369 = vmatpush1.msra.mxu0 0.0
    %1370 = vmatprep.subr.mxu0 0.0
    %1371 = vmatpush1.msra.mxu0 0.0
    %1372 = vmatprep.subr.mxu0 0.0
    %1373 = vmatpush1.msra.mxu0 0.0
    %1374 = vmatprep.subr.mxu0 0.0
    %1375 = vmatpush1.msra.mxu0 0.0
    %1376 = vmatprep.subr.mxu0 0.0
    %1377 = vmatpush1.msra.mxu0 0.0
    %1378 = vmatprep.subr.mxu0 0.0
    %1379 = vmatpush1.msra.mxu0 0.0
    %1380 = vmatprep.subr.mxu0 0.0
    %1381 = vmatpush1.msra.mxu0 0.0
    %1382 = vmatprep.subr.mxu0 0.0
    %1383 = vmatpush1.msra.mxu0 0.0
    %1384 = vmatprep.subr.mxu0 0.0
    %1385 = vmatpush1.msra.mxu0 0.0
    %1386 = vmatprep.subr.mxu0 0.0
    %1387 = vmatpush1.msra.mxu0 0.0
    %1388 = vmatprep.subr.mxu0 0.0
    %1389 = vmatpush1.msra.mxu0 %v1360
    %1390 = vmatprep.subr.mxu0 0.0
    %1391 = vmatpush1.msra.mxu0 %v1359
    %1392 = vmatprep.subr.mxu0 0.0
    %1393 = vmatpush1.msra.mxu0 %v1358
    %1394 = vmatprep.subr.mxu0 0.0
    %1395 = vmatpush1.msra.mxu0 %v1357
    %1396 = vmatprep.subr.mxu0 0.0
    %1397 = vmatpush2.msra.mxu0 0.0
    %1398 = vmatprep.subr.mxu0 0.0
    %1399 = vmatpush2.msra.mxu0 0.0
    %1400 = vmatprep.subr.mxu0 0.0
    %1401 = vmatpush2.msra.mxu0 0.0
    %1402 = vmatprep.subr.mxu0 0.0
    %1403 = vmatpush2.msra.mxu0 0.0
    %1404 = vmatprep.subr.mxu0 0.0
    %1405 = vmatpush2.msra.mxu0 0.0
    %1406 = vmatprep.subr.mxu0 0.0
    %1407 = vmatpush2.msra.mxu0 0.0
    %1408 = vmatprep.subr.mxu0 0.0
    %1409 = vmatpush2.msra.mxu0 0.0
    %1410 = vmatprep.subr.mxu0 0.0
    %1411 = vmatpush2.msra.mxu0 0.0
    %1412 = vmatprep.subr.mxu0 0.0
    %1413 = vmatpush2.msra.mxu0 0.0
    %1414 = vmatprep.subr.mxu0 0.0
    %1415 = vmatpush2.msra.mxu0 0.0
    %1416 = vmatprep.subr.mxu0 0.0
    %1417 = vmatpush2.msra.mxu0 0.0
    %1418 = vmatprep.subr.mxu0 0.0
    %1419 = vmatpush2.msra.mxu0 0.0
    %1420 = vmatprep.subr.mxu0 0.0
    %1421 = vmatpush2.msra.mxu0 0.0
    %1422 = vmatprep.subr.mxu0 0.0
    %1423 = vmatpush2.msra.mxu0 0.0
    %1424 = vmatprep.subr.mxu0 0.0
    %1425 = vmatpush2.msra.mxu0 0.0
    %1426 = vmatprep.subr.mxu0 0.0
    %1427 = vmatpush2.msra.mxu0 0.0
    %1428 = vmatprep.mubr.f32.mxu0 0.0
    %1429 = vmatmul.mubr.f32.gmra.mxu0 %v1362
    %v1430 = vpop.f32.mrf.mxu0
    %v1431 = vadd.f32 0.0, %v1430
    %v1432 = vpop.f32.mrf.mxu0
    %1433 = vdwg.mxu0
    %v1434 = vadd.f32 %v1355, %v1431
    %s1435 = scalar_lea.vmem %s4, 384
    %v1436 = vld [vmem:[%s1435] sm:$0xff]
    %v1437 = vld [vmem:[%s1435 + $0x8] sm:$0xff]
    %v1438 = vld [vmem:[%s1435 + $0x10] sm:$0xff]
    %v1439 = vld [vmem:[%s1435 + $0x18] sm:$0xff]
    %v1441 = vsel %vm307, %v480, 0
    %1443 = vmatprep.subr.mxu0 0.0
    %1444 = vmatpush1.msra.mxu0 0.0
    %1445 = vmatprep.subr.mxu0 0.0
    %1446 = vmatpush1.msra.mxu0 0.0
    %1447 = vmatprep.subr.mxu0 0.0
    %1448 = vmatpush1.msra.mxu0 0.0
    %1449 = vmatprep.subr.mxu0 0.0
    %1450 = vmatpush1.msra.mxu0 0.0
    %1451 = vmatprep.subr.mxu0 0.0
    %1452 = vmatpush1.msra.mxu0 0.0
    %1453 = vmatprep.subr.mxu0 0.0
    %1454 = vmatpush1.msra.mxu0 0.0
    %1455 = vmatprep.subr.mxu0 0.0
    %1456 = vmatpush1.msra.mxu0 0.0
    %1457 = vmatprep.subr.mxu0 0.0
    %1458 = vmatpush1.msra.mxu0 0.0
    %1459 = vmatprep.subr.mxu0 0.0
    %1460 = vmatpush1.msra.mxu0 0.0
    %1461 = vmatprep.subr.mxu0 0.0
    %1462 = vmatpush1.msra.mxu0 0.0
    %1463 = vmatprep.subr.mxu0 0.0
    %1464 = vmatpush1.msra.mxu0 0.0
    %1465 = vmatprep.subr.mxu0 0.0
    %1466 = vmatpush1.msra.mxu0 0.0
    %1467 = vmatprep.subr.mxu0 0.0
    %1468 = vmatpush1.msra.mxu0 %v1439
    %1469 = vmatprep.subr.mxu0 0.0
    %1470 = vmatpush1.msra.mxu0 %v1438
    %1471 = vmatprep.subr.mxu0 0.0
    %1472 = vmatpush1.msra.mxu0 %v1437
    %1473 = vmatprep.subr.mxu0 0.0
    %1474 = vmatpush1.msra.mxu0 %v1436
    %1475 = vmatprep.subr.mxu0 0.0
    %1476 = vmatpush2.msra.mxu0 0.0
    %1477 = vmatprep.subr.mxu0 0.0
    %1478 = vmatpush2.msra.mxu0 0.0
    %1479 = vmatprep.subr.mxu0 0.0
    %1480 = vmatpush2.msra.mxu0 0.0
    %1481 = vmatprep.subr.mxu0 0.0
    %1482 = vmatpush2.msra.mxu0 0.0
    %1483 = vmatprep.subr.mxu0 0.0
    %1484 = vmatpush2.msra.mxu0 0.0
    %1485 = vmatprep.subr.mxu0 0.0
    %1486 = vmatpush2.msra.mxu0 0.0
    %1487 = vmatprep.subr.mxu0 0.0
    %1488 = vmatpush2.msra.mxu0 0.0
    %1489 = vmatprep.subr.mxu0 0.0
    %1490 = vmatpush2.msra.mxu0 0.0
    %1491 = vmatprep.subr.mxu0 0.0
    %1492 = vmatpush2.msra.mxu0 0.0
    %1493 = vmatprep.subr.mxu0 0.0
    %1494 = vmatpush2.msra.mxu0 0.0
    %1495 = vmatprep.subr.mxu0 0.0
    %1496 = vmatpush2.msra.mxu0 0.0
    %1497 = vmatprep.subr.mxu0 0.0
    %1498 = vmatpush2.msra.mxu0 0.0
    %1499 = vmatprep.subr.mxu0 0.0
    %1500 = vmatpush2.msra.mxu0 0.0
    %1501 = vmatprep.subr.mxu0 0.0
    %1502 = vmatpush2.msra.mxu0 0.0
    %1503 = vmatprep.subr.mxu0 0.0
    %1504 = vmatpush2.msra.mxu0 0.0
    %1505 = vmatprep.subr.mxu0 0.0
    %1506 = vmatpush2.msra.mxu0 0.0
    %1507 = vmatprep.mubr.f32.mxu0 0.0
    %1508 = vmatmul.mubr.f32.gmra.mxu0 %v1441
    %v1509 = vpop.f32.mrf.mxu0
    %v1510 = vadd.f32 0.0, %v1509
    %v1511 = vpop.f32.mrf.mxu0
    %1512 = vdwg.mxu0
    %v1513 = vadd.f32 %v1434, %v1510
    %s1514 = scalar_lea.vmem %s4, 416
    %v1515 = vld [vmem:[%s1514] sm:$0xff]
    %v1516 = vld [vmem:[%s1514 + $0x8] sm:$0xff]
    %v1517 = vld [vmem:[%s1514 + $0x10] sm:$0xff]
    %v1518 = vld [vmem:[%s1514 + $0x18] sm:$0xff]
    %v1519 = vrot.slane %v480, 2
    %v1520 = vsel %vm307, %v1519, 0
    %1522 = vmatprep.subr.mxu0 0.0
    %1523 = vmatpush1.msra.mxu0 0.0
    %1524 = vmatprep.subr.mxu0 0.0
    %1525 = vmatpush1.msra.mxu0 0.0
    %1526 = vmatprep.subr.mxu0 0.0
    %1527 = vmatpush1.msra.mxu0 0.0
    %1528 = vmatprep.subr.mxu0 0.0
    %1529 = vmatpush1.msra.mxu0 0.0
    %1530 = vmatprep.subr.mxu0 0.0
    %1531 = vmatpush1.msra.mxu0 0.0
    %1532 = vmatprep.subr.mxu0 0.0
    %1533 = vmatpush1.msra.mxu0 0.0
    %1534 = vmatprep.subr.mxu0 0.0
    %1535 = vmatpush1.msra.mxu0 0.0
    %1536 = vmatprep.subr.mxu0 0.0
    %1537 = vmatpush1.msra.mxu0 0.0
    %1538 = vmatprep.subr.mxu0 0.0
    %1539 = vmatpush1.msra.mxu0 0.0
    %1540 = vmatprep.subr.mxu0 0.0
    %1541 = vmatpush1.msra.mxu0 0.0
    %1542 = vmatprep.subr.mxu0 0.0
    %1543 = vmatpush1.msra.mxu0 0.0
    %1544 = vmatprep.subr.mxu0 0.0
    %1545 = vmatpush1.msra.mxu0 0.0
    %1546 = vmatprep.subr.mxu0 0.0
    %1547 = vmatpush1.msra.mxu0 %v1518
    %1548 = vmatprep.subr.mxu0 0.0
    %1549 = vmatpush1.msra.mxu0 %v1517
    %1550 = vmatprep.subr.mxu0 0.0
    %1551 = vmatpush1.msra.mxu0 %v1516
    %1552 = vmatprep.subr.mxu0 0.0
    %1553 = vmatpush1.msra.mxu0 %v1515
    %1554 = vmatprep.subr.mxu0 0.0
    %1555 = vmatpush2.msra.mxu0 0.0
    %1556 = vmatprep.subr.mxu0 0.0
    %1557 = vmatpush2.msra.mxu0 0.0
    %1558 = vmatprep.subr.mxu0 0.0
    %1559 = vmatpush2.msra.mxu0 0.0
    %1560 = vmatprep.subr.mxu0 0.0
    %1561 = vmatpush2.msra.mxu0 0.0
    %1562 = vmatprep.subr.mxu0 0.0
    %1563 = vmatpush2.msra.mxu0 0.0
    %1564 = vmatprep.subr.mxu0 0.0
    %1565 = vmatpush2.msra.mxu0 0.0
    %1566 = vmatprep.subr.mxu0 0.0
    %1567 = vmatpush2.msra.mxu0 0.0
    %1568 = vmatprep.subr.mxu0 0.0
    %1569 = vmatpush2.msra.mxu0 0.0
    %1570 = vmatprep.subr.mxu0 0.0
    %1571 = vmatpush2.msra.mxu0 0.0
    %1572 = vmatprep.subr.mxu0 0.0
    %1573 = vmatpush2.msra.mxu0 0.0
    %1574 = vmatprep.subr.mxu0 0.0
    %1575 = vmatpush2.msra.mxu0 0.0
    %1576 = vmatprep.subr.mxu0 0.0
    %1577 = vmatpush2.msra.mxu0 0.0
    %1578 = vmatprep.subr.mxu0 0.0
    %1579 = vmatpush2.msra.mxu0 0.0
    %1580 = vmatprep.subr.mxu0 0.0
    %1581 = vmatpush2.msra.mxu0 0.0
    %1582 = vmatprep.subr.mxu0 0.0
    %1583 = vmatpush2.msra.mxu0 0.0
    %1584 = vmatprep.subr.mxu0 0.0
    %1585 = vmatpush2.msra.mxu0 0.0
    %1586 = vmatprep.mubr.f32.mxu0 0.0
    %1587 = vmatmul.mubr.f32.gmra.mxu0 %v1520
    %v1588 = vpop.f32.mrf.mxu0
    %v1589 = vadd.f32 0.0, %v1588
    %v1590 = vpop.f32.mrf.mxu0
    %1591 = vdwg.mxu0
    %v1592 = vadd.f32 %v1513, %v1589
    %s1593 = scalar_lea.vmem %s4, 448
    %v1594 = vld [vmem:[%s1593] sm:$0xff]
    %v1595 = vld [vmem:[%s1593 + $0x8] sm:$0xff]
    %v1596 = vld [vmem:[%s1593 + $0x10] sm:$0xff]
    %v1597 = vld [vmem:[%s1593 + $0x18] sm:$0xff]
    %v1598 = vrot.slane %v480, 4
    %v1599 = vsel %vm307, %v1598, 0
    %1601 = vmatprep.subr.mxu0 0.0
    %1602 = vmatpush1.msra.mxu0 0.0
    %1603 = vmatprep.subr.mxu0 0.0
    %1604 = vmatpush1.msra.mxu0 0.0
    %1605 = vmatprep.subr.mxu0 0.0
    %1606 = vmatpush1.msra.mxu0 0.0
    %1607 = vmatprep.subr.mxu0 0.0
    %1608 = vmatpush1.msra.mxu0 0.0
    %1609 = vmatprep.subr.mxu0 0.0
    %1610 = vmatpush1.msra.mxu0 0.0
    %1611 = vmatprep.subr.mxu0 0.0
    %1612 = vmatpush1.msra.mxu0 0.0
    %1613 = vmatprep.subr.mxu0 0.0
    %1614 = vmatpush1.msra.mxu0 0.0
    %1615 = vmatprep.subr.mxu0 0.0
    %1616 = vmatpush1.msra.mxu0 0.0
    %1617 = vmatprep.subr.mxu0 0.0
    %1618 = vmatpush1.msra.mxu0 0.0
    %1619 = vmatprep.subr.mxu0 0.0
    %1620 = vmatpush1.msra.mxu0 0.0
    %1621 = vmatprep.subr.mxu0 0.0
    %1622 = vmatpush1.msra.mxu0 0.0
    %1623 = vmatprep.subr.mxu0 0.0
    %1624 = vmatpush1.msra.mxu0 0.0
    %1625 = vmatprep.subr.mxu0 0.0
    %1626 = vmatpush1.msra.mxu0 %v1597
    %1627 = vmatprep.subr.mxu0 0.0
    %1628 = vmatpush1.msra.mxu0 %v1596
    %1629 = vmatprep.subr.mxu0 0.0
    %1630 = vmatpush1.msra.mxu0 %v1595
    %1631 = vmatprep.subr.mxu0 0.0
    %1632 = vmatpush1.msra.mxu0 %v1594
    %1633 = vmatprep.subr.mxu0 0.0
    %1634 = vmatpush2.msra.mxu0 0.0
    %1635 = vmatprep.subr.mxu0 0.0
    %1636 = vmatpush2.msra.mxu0 0.0
    %1637 = vmatprep.subr.mxu0 0.0
    %1638 = vmatpush2.msra.mxu0 0.0
    %1639 = vmatprep.subr.mxu0 0.0
    %1640 = vmatpush2.msra.mxu0 0.0
    %1641 = vmatprep.subr.mxu0 0.0
    %1642 = vmatpush2.msra.mxu0 0.0
    %1643 = vmatprep.subr.mxu0 0.0
    %1644 = vmatpush2.msra.mxu0 0.0
    %1645 = vmatprep.subr.mxu0 0.0
    %1646 = vmatpush2.msra.mxu0 0.0
    %1647 = vmatprep.subr.mxu0 0.0
    %1648 = vmatpush2.msra.mxu0 0.0
    %1649 = vmatprep.subr.mxu0 0.0
    %1650 = vmatpush2.msra.mxu0 0.0
    %1651 = vmatprep.subr.mxu0 0.0
    %1652 = vmatpush2.msra.mxu0 0.0
    %1653 = vmatprep.subr.mxu0 0.0
    %1654 = vmatpush2.msra.mxu0 0.0
    %1655 = vmatprep.subr.mxu0 0.0
    %1656 = vmatpush2.msra.mxu0 0.0
    %1657 = vmatprep.subr.mxu0 0.0
    %1658 = vmatpush2.msra.mxu0 0.0
    %1659 = vmatprep.subr.mxu0 0.0
    %1660 = vmatpush2.msra.mxu0 0.0
    %1661 = vmatprep.subr.mxu0 0.0
    %1662 = vmatpush2.msra.mxu0 0.0
    %1663 = vmatprep.subr.mxu0 0.0
    %1664 = vmatpush2.msra.mxu0 0.0
    %1665 = vmatprep.mubr.f32.mxu0 0.0
    %1666 = vmatmul.mubr.f32.gmra.mxu0 %v1599
    %v1667 = vpop.f32.mrf.mxu0
    %v1668 = vadd.f32 0.0, %v1667
    %v1669 = vpop.f32.mrf.mxu0
    %1670 = vdwg.mxu0
    %v1671 = vadd.f32 %v1592, %v1668
    %s1672 = scalar_lea.vmem %s4, 480
    %v1673 = vld [vmem:[%s1672] sm:$0xff]
    %v1674 = vld [vmem:[%s1672 + $0x8] sm:$0xff]
    %v1675 = vld [vmem:[%s1672 + $0x10] sm:$0xff]
    %v1676 = vld [vmem:[%s1672 + $0x18] sm:$0xff]
    %v1677 = vrot.slane %v480, 6
    %v1678 = vsel %vm307, %v1677, 0
    %1680 = vmatprep.subr.mxu0 0.0
    %1681 = vmatpush1.msra.mxu0 0.0
    %1682 = vmatprep.subr.mxu0 0.0
    %1683 = vmatpush1.msra.mxu0 0.0
    %1684 = vmatprep.subr.mxu0 0.0
    %1685 = vmatpush1.msra.mxu0 0.0
    %1686 = vmatprep.subr.mxu0 0.0
    %1687 = vmatpush1.msra.mxu0 0.0
    %1688 = vmatprep.subr.mxu0 0.0
    %1689 = vmatpush1.msra.mxu0 0.0
    %1690 = vmatprep.subr.mxu0 0.0
    %1691 = vmatpush1.msra.mxu0 0.0
    %1692 = vmatprep.subr.mxu0 0.0
    %1693 = vmatpush1.msra.mxu0 0.0
    %1694 = vmatprep.subr.mxu0 0.0
    %1695 = vmatpush1.msra.mxu0 0.0
    %1696 = vmatprep.subr.mxu0 0.0
    %1697 = vmatpush1.msra.mxu0 0.0
    %1698 = vmatprep.subr.mxu0 0.0
    %1699 = vmatpush1.msra.mxu0 0.0
    %1700 = vmatprep.subr.mxu0 0.0
    %1701 = vmatpush1.msra.mxu0 0.0
    %1702 = vmatprep.subr.mxu0 0.0
    %1703 = vmatpush1.msra.mxu0 0.0
    %1704 = vmatprep.subr.mxu0 0.0
    %1705 = vmatpush1.msra.mxu0 %v1676
    %1706 = vmatprep.subr.mxu0 0.0
    %1707 = vmatpush1.msra.mxu0 %v1675
    %1708 = vmatprep.subr.mxu0 0.0
    %1709 = vmatpush1.msra.mxu0 %v1674
    %1710 = vmatprep.subr.mxu0 0.0
    %1711 = vmatpush1.msra.mxu0 %v1673
    %1712 = vmatprep.subr.mxu0 0.0
    %1713 = vmatpush2.msra.mxu0 0.0
    %1714 = vmatprep.subr.mxu0 0.0
    %1715 = vmatpush2.msra.mxu0 0.0
    %1716 = vmatprep.subr.mxu0 0.0
    %1717 = vmatpush2.msra.mxu0 0.0
    %1718 = vmatprep.subr.mxu0 0.0
    %1719 = vmatpush2.msra.mxu0 0.0
    %1720 = vmatprep.subr.mxu0 0.0
    %1721 = vmatpush2.msra.mxu0 0.0
    %1722 = vmatprep.subr.mxu0 0.0
    %1723 = vmatpush2.msra.mxu0 0.0
    %1724 = vmatprep.subr.mxu0 0.0
    %1725 = vmatpush2.msra.mxu0 0.0
    %1726 = vmatprep.subr.mxu0 0.0
    %1727 = vmatpush2.msra.mxu0 0.0
    %1728 = vmatprep.subr.mxu0 0.0
    %1729 = vmatpush2.msra.mxu0 0.0
    %1730 = vmatprep.subr.mxu0 0.0
    %1731 = vmatpush2.msra.mxu0 0.0
    %1732 = vmatprep.subr.mxu0 0.0
    %1733 = vmatpush2.msra.mxu0 0.0
    %1734 = vmatprep.subr.mxu0 0.0
    %1735 = vmatpush2.msra.mxu0 0.0
    %1736 = vmatprep.subr.mxu0 0.0
    %1737 = vmatpush2.msra.mxu0 0.0
    %1738 = vmatprep.subr.mxu0 0.0
    %1739 = vmatpush2.msra.mxu0 0.0
    %1740 = vmatprep.subr.mxu0 0.0
    %1741 = vmatpush2.msra.mxu0 0.0
    %1742 = vmatprep.subr.mxu0 0.0
    %1743 = vmatpush2.msra.mxu0 0.0
    %1744 = vmatprep.mubr.f32.mxu0 0.0
    %1745 = vmatmul.mubr.f32.gmra.mxu0 %v1678
    %v1746 = vpop.f32.mrf.mxu0
    %v1747 = vadd.f32 0.0, %v1746
    %v1748 = vpop.f32.mrf.mxu0
    %1749 = vdwg.mxu0
    %v1750 = vadd.f32 %v1671, %v1747
    %1751 = vst [vmem:[#allocation2] sm:$0x3] %v1750
    // Predicated region
    $region26: #{probenet_s.5} parent=1 // pred_check
      _
    $region27: #{probenet_s.5} parent=1 // pred_check_branch
      %1753 = sbr.rel (0) target = $region29
    $region28: #{probenet_s.5} parent=1 // pred_region
      %s1755 = ssub.s32 32, 32
      %1756 = vsyncadd [#allocation3], %s1755
      %s1758 = sshll.u32 [#allocation2], 4
      %s1759 = int_to_ptr.vmem [resolvable:$true] %s1758
      %1761 = dma.vmem_to_hbm [thread:$0]  %s1759, 32, %s6, [#allocation3]
    $region29: #{probenet_s.5} parent=1 // pred_fallthru
      _
    // Predicated region
    $region30: #{probenet_s.5} parent=1 // pred_check
      _
    $region31: #{probenet_s.5} parent=1 // pred_check_branch
      %1763 = sbr.rel (0) target = $region33
    $region32: #{probenet_s.5} parent=1 // pred_region
      %1764 = dma.done [#allocation3], 32
    $region33: #{probenet_s.5} parent=1 // pred_fallthru
      _
    %1765 = vsyncpa [#allocation3], 1

</llo_original>
